<compile_context>
chip_gen: v5e
topology: v5e:2x2
jax: 0.10.0
libtpu: 0.0.40
codegen_flags: <defaults>
</compile_context>

<pallas_src>
import functools
import math

import jax
import jax.numpy as jnp
import numpy as np
from jax.experimental import pallas as pl
from jax.experimental.pallas import tpu as pltpu


# ------------------------------ shared helpers ------------------------------

def _layernorm_f32(x, g, b, eps=1e-5):
    """LayerNorm over last axis, f32 math. x:(M,D), g/b:(1,D)."""
    mean = jnp.mean(x, axis=-1, keepdims=True)
    c = x - mean
    var = jnp.mean(c * c, axis=-1, keepdims=True)
    return c * jax.lax.rsqrt(var + eps) * g + b


def _vec(a):
    return a.reshape(1, -1)


def _stream_spec(block_shape, index_map, bufs=3):
    """BlockSpec with deeper multi-buffering when supported (clean fallback)."""
    if hasattr(pl, "Buffered"):
        try:
            return pl.BlockSpec(block_shape, index_map,
                                pipeline_mode=pl.Buffered(bufs))
        except Exception:
            pass
    return pl.BlockSpec(block_shape, index_map)


# --------------------- kernel 1: patch embed + pre-LN (padded rows) ----------

def _embed_kernel(patch_ref, wp_ref, cls_ref, pos_ref, g_ref, b_ref, o_ref,
                  hid_scr, *, B, S, S_pad, num_patches):
    # patch embedding: (B*np, C*P*P) bf16 @ (C*P*P, D) bf16 -> f32
    emb = jnp.dot(patch_ref[...].astype(jnp.bfloat16), wp_ref[...],
                  preferred_element_type=jnp.float32)
    pos = pos_ref[...]                                  # (S, D) f32
    cls_row = cls_ref[...] + pos[0:1, :]                # (1, D)
    hid_scr[...] = jnp.zeros_like(hid_scr)              # padded rows stay 0 (finite)
    for b in range(B):                                  # static, tiny
        r = b * S_pad
        hid_scr[r:r + 1, :] = cls_row
        hid_scr[r + 1:r + S, :] = (
            emb[b * num_patches:(b + 1) * num_patches, :] + pos[1:S, :])
    # pre_layrnorm
    o_ref[...] = _layernorm_f32(hid_scr[...], g_ref[...], b_ref[...])


def embed_and_preln(patches, w_patch, class_emb, pos_emb, ln_g, ln_b, *, B, S,
                    S_pad, num_patches):
    Kp, D = w_patch.shape
    M = B * S_pad
    kern = functools.partial(_embed_kernel, B=B, S=S, S_pad=S_pad,
                             num_patches=num_patches)
    full = lambda shp: pl.BlockSpec(shp, lambda i: (0, 0))
    return pl.pallas_call(
        kern,
        out_shape=jax.ShapeDtypeStruct((M, D), jnp.float32),
        grid=(1,),
        in_specs=[full((B * num_patches, Kp)), full((Kp, D)), full((1, D)),
                  full((S, D)), full((1, D)), full((1, D))],
        out_specs=full((M, D)),
        scratch_shapes=[pltpu.VMEM((M, D), jnp.float32)],
        compiler_params=pltpu.CompilerParams(dimension_semantics=("arbitrary",)),
    )(patches, w_patch, _vec(class_emb), pos_emb, _vec(ln_g), _vec(ln_b))


# --------------- kernel 2: one fused, weight-streaming encoder layer ---------
#
# Grid step k streams one (1024, 512) bf16 chunk of the stacked weight tensor:
#   k in [0, n_qkv)           : grouped QKV projection (q/k/v interleaved per head group)
#   k == 3*(g+1)              : softmax attention for head group g (hidden under DMA)
#   k in [n_qkv, n_qkv+n_wo)  : out-projection column chunks
#   k == n_qkv+n_wo           : residual + bo, LN2, zero MLP accumulator
#   k in [n_qkv+n_wo, end)    : FC1 chunk -> quickGELU -> FC2 row-block accumulation
#   k == last                 : residual + b2 -> output

def _layer_kernel(h_ref, ln1g_ref, ln1b_ref, ln2g_ref, ln2b_ref,
                  bq_ref, bk_ref, bv_ref, bo_ref, b1_ref, b2_ref,
                  wa_ref, w2_ref, o_ref,
                  y1_scr, qkv_scr, attn_scr, op_scr, h2_scr, y2_scr, acc_scr,
                  *, B, S, S_pad, heads, d_head, TC, n_qkv, n_wo, n_mlp):
    k = pl.program_id(0)
    M = B * S_pad
    a_end = n_qkv
    b_end = n_qkv + n_wo
    n_groups = n_qkv // 3
    hpg = heads // n_groups                      # heads per 512-wide group
    scale = 1.0 / math.sqrt(d_head)

    # ---- phase A: grouped QKV projection, one TC-wide chunk per step -------
    @pl.when(k == 0)
    def _():
        y1_scr[...] = _layernorm_f32(h_ref[...], ln1g_ref[...],
                                     ln1b_ref[...]).astype(jnp.bfloat16)

    @pl.when(k < a_end)
    def _():
        qkv_scr[k] = jnp.dot(y1_scr[...], wa_ref[...],
                             preferred_element_type=jnp.float32)

    # ---- softmax attention per head group, as soon as its q,k,v landed -----
    kmask = jax.lax.broadcasted_iota(jnp.int32, (1, 1, S_pad), 2) < S
    for g in range(n_groups):
        @pl.when(k == 3 * (g + 1))
        def _(g=g):
            gsl = slice(g * TC, (g + 1) * TC)
            q_slab = qkv_scr[3 * g + 0] + bq_ref[:, gsl]      # (M, TC) f32
            k_slab = qkv_scr[3 * g + 1] + bk_ref[:, gsl]
            v_slab = qkv_scr[3 * g + 2] + bv_ref[:, gsl]
            for hl in range(hpg):                             # static, tiny
                c = hl * d_head
                q_h = q_slab[:, c:c + d_head].reshape(B, S_pad, d_head)
                k_h = k_slab[:, c:c + d_head].reshape(B, S_pad, d_head)
                v_h = v_slab[:, c:c + d_head].reshape(B, S_pad, d_head)
                s = jnp.einsum('bqd,bkd->bqk', q_h, k_h,
                               preferred_element_type=jnp.float32) * scale
                s = jnp.where(kmask, s, -1e30)                # mask padded keys
                p = jnp.exp(s - jnp.max(s, axis=-1, keepdims=True))
                p = p / jnp.sum(p, axis=-1, keepdims=True)
                o_h = jnp.einsum('bqk,bkd->bqd', p, v_h,
                                 preferred_element_type=jnp.float32)
                oc = g * TC + c
                attn_scr[:, oc:oc + d_head] = (
                    o_h.reshape(M, d_head).astype(jnp.bfloat16))

    # ---- phase B: out-projection column chunks ------------------------------
    @pl.when(jnp.logical_and(k >= a_end, k < b_end))
    def _():
        op_scr[k - a_end] = jnp.dot(attn_scr[...], wa_ref[...],
                                    preferred_element_type=jnp.float32)

    # ---- boundary: residual + bo, LN2, zero accumulator ---------------------
    @pl.when(k == b_end)
    def _():
        op = jnp.concatenate([op_scr[j] for j in range(n_wo)], axis=-1)  # (M, D)
        h2 = h_ref[...] + op + bo_ref[...]
        h2_scr[...] = h2
        y2_scr[...] = _layernorm_f32(h2, ln2g_ref[...],
                                     ln2b_ref[...]).astype(jnp.bfloat16)
        acc_scr[...] = jnp.zeros_like(acc_scr)

    # ---- phase C: MLP hidden chunks, f32 accumulation ------------------------
    @pl.when(k >= b_end)
    def _():
        h1 = (jnp.dot(y2_scr[...], wa_ref[...],
                      preferred_element_type=jnp.float32) + b1_ref[...])
        act = h1 * jax.nn.sigmoid(1.702 * h1)                 # quick_gelu, f32
        acc_scr[...] += jnp.dot(act.astype(jnp.bfloat16), w2_ref[...],
                                preferred_element_type=jnp.float32)

    @pl.when(k == b_end + n_mlp - 1)
    def _():
        o_ref[...] = h2_scr[...] + acc_scr[...] + b2_ref[...]


def encoder_layer(h, lyr, *, B, S, S_pad, heads, d_head, TC=512):
    M, D = h.shape
    Dm = lyr["w2"].shape[0]
    assert D % TC == 0 and Dm % TC == 0
    n_qkv = 3 * D // TC
    n_wo = D // TC
    n_mlp = Dm // TC
    n_steps = n_qkv + n_wo + n_mlp
    b_end = n_qkv + n_wo
    n_groups = D // TC
    assert heads % n_groups == 0 and (heads // n_groups) * d_head == TC
    assert lyr["w_stack"].shape == (n_steps, D, TC)

    kern = functools.partial(_layer_kernel, B=B, S=S, S_pad=S_pad, heads=heads,
                             d_head=d_head, TC=TC, n_qkv=n_qkv, n_wo=n_wo,
                             n_mlp=n_mlp)
    res = lambda shp: pl.BlockSpec(shp, lambda k: (0,) * len(shp))  # resident block
    return pl.pallas_call(
        kern,
        out_shape=jax.ShapeDtypeStruct((M, D), jnp.float32),
        grid=(n_steps,),
        in_specs=[
            res((M, D)),                                    # residual h
            res((1, D)), res((1, D)),                       # ln1 g / b
            res((1, D)), res((1, D)),                       # ln2 g / b
            res((1, D)), res((1, D)), res((1, D)),          # bq / bk / bv
            res((1, D)),                                    # bo
            pl.BlockSpec((1, TC),                           # b1, streamed lane chunks
                         lambda k: (0, jnp.maximum(k - b_end, 0))),
            res((1, D)),                                    # b2
            _stream_spec((None, D, TC), lambda k: (k, 0, 0)),            # stacked W
            _stream_spec((TC, D), lambda k: (jnp.maximum(k - b_end, 0), 0)),  # FC2 rows
        ],
        out_specs=res((M, D)),
        scratch_shapes=[
            pltpu.VMEM((M, D), jnp.bfloat16),               # y1 = LN1(h)
            pltpu.VMEM((n_qkv, M, TC), jnp.float32),        # qkv chunks (grouped)
            pltpu.VMEM((M, D), jnp.bfloat16),               # attention output
            pltpu.VMEM((n_wo, M, TC), jnp.float32),         # out-proj partials
            pltpu.VMEM((M, D), jnp.float32),                # h2 = h + attn + bo
            pltpu.VMEM((M, D), jnp.bfloat16),               # y2 = LN2(h2)
            pltpu.VMEM((M, D), jnp.float32),                # MLP f32 accumulator
        ],
        compiler_params=pltpu.CompilerParams(
            dimension_semantics=("arbitrary",),
            vmem_limit_bytes=32 * 1024 * 1024),
    )(h, _vec(lyr["ln1_g"]), _vec(lyr["ln1_b"]),
      _vec(lyr["ln2_g"]), _vec(lyr["ln2_b"]),
      _vec(lyr["bq"]), _vec(lyr["bk"]), _vec(lyr["bv"]),
      _vec(lyr["bo"]), _vec(lyr["b1"]), _vec(lyr["b2"]),
      lyr["w_stack"], lyr["w2"])


# -------------------------- kernel 3: classifier (lane-dense) -----------------

def _cls_kernel(x_ref, w_ref, b_ref, o_ref):
    o_ref[...] = (jnp.dot(x_ref[...].astype(jnp.bfloat16), w_ref[...],
                          preferred_element_type=jnp.float32) + b_ref[...])


def classifier(x, w, b):
    M, K = x.shape
    N = w.shape[1]
    full = lambda shp: pl.BlockSpec(shp, lambda i: (0, 0))
    return pl.pallas_call(
        _cls_kernel,
        out_shape=jax.ShapeDtypeStruct((M, N), jnp.float32),
        grid=(1,),
        in_specs=[full((M, K)), full((K, N)), full((1, N))],
        out_specs=full((M, N)),
    )(x, w, _vec(b))


# ------------------------------ model forward --------------------------------

def forward(x_nchw, params):
    """ViT.forward: vision_tower(x)['last_hidden_state'][:, 0, :] -> classifier."""
    B, C, H, W = x_nchw.shape
    P = params["patch_size"]
    D = params["hidden"]
    heads = params["num_heads"]
    d_head = D // heads
    nH, nW = H // P, W // P
    num_patches = nH * nW
    S = num_patches + 1
    S_pad = ((S + 7) // 8) * 8                     # pad tokens to sublane granularity

    # unfold NCHW pixels into patch rows (layout plumbing, XLA glue)
    patches = x_nchw.reshape(B, C, nH, P, nW, P).transpose(0, 2, 4, 1, 3, 5)
    patches = patches.reshape(B * num_patches, C * P * P)

    # fused: patch-embed matmul + CLS token + position embeddings + pre_layrnorm
    h = embed_and_preln(patches, params["patch_w"], params["class_emb"],
                        params["pos_emb"], params["pre_ln_g"], params["pre_ln_b"],
                        B=B, S=S, S_pad=S_pad, num_patches=num_patches)   # (B*S_pad, D)

    # pre-LN CLIP encoder layers: ONE weight-streaming pallas_call per layer
    for lyr in params["layers"]:
        h = encoder_layer(h, lyr, B=B, S=S, S_pad=S_pad, heads=heads, d_head=d_head)

    # last_hidden_state[:, 0, :] -> classifier (128-lane padded, sliced outside)
    logits_full = classifier(h, params["cls_w_pad"], params["cls_b_pad"])
    nl = params["num_labels"]
    return logits_full.reshape(B, S_pad, -1)[:, 0, :nl]


# -------------------------- pure-JAX reference forward -----------------------

def _ref_ln(x, g, b, eps=1e-5):
    mean = jnp.mean(x, axis=-1, keepdims=True)
    var = jnp.mean((x - mean) ** 2, axis=-1, keepdims=True)
    return (x - mean) * jax.lax.rsqrt(var + eps) * g + b


def ref_forward(x_nchw, params):
    B, C, H, W = x_nchw.shape
    P = params["patch_size"]
    D = params["hidden"]
    heads = params["num_heads"]
    d_head = D // heads
    nH, nW = H // P, W // P
    num_patches = nH * nW
    S = num_patches + 1
    f32 = lambda a: a.astype(jnp.float32)

    patches = x_nchw.reshape(B, C, nH, P, nW, P).transpose(0, 2, 4, 1, 3, 5)
    patches = patches.reshape(B * num_patches, C * P * P)
    emb = (patches @ f32(params["patch_w"])).reshape(B, num_patches, D)
    cls_tok = jnp.broadcast_to(params["class_emb"].reshape(1, 1, D), (B, 1, D))
    h = jnp.concatenate([cls_tok, emb], axis=1) + params["pos_emb"][None]
    h = _ref_ln(h, params["pre_ln_g"], params["pre_ln_b"])

    for lyr in params["layers"]:
        y = _ref_ln(h, lyr["ln1_g"], lyr["ln1_b"])
        q = y @ f32(lyr["wq"]) + lyr["bq"]
        k = y @ f32(lyr["wk"]) + lyr["bk"]
        v = y @ f32(lyr["wv"]) + lyr["bv"]
        split = lambda t: t.reshape(B, S, heads, d_head).transpose(0, 2, 1, 3)
        s = jnp.einsum("bhqd,bhkd->bhqk", split(q), split(k)) / math.sqrt(d_head)
        p = jax.nn.softmax(s, axis=-1)
        a = jnp.einsum("bhqk,bhkd->bhqd", p, split(v))
        a = a.transpose(0, 2, 1, 3).reshape(B, S, D)
        h = h + a @ f32(lyr["wo"]) + lyr["bo"]

        y = _ref_ln(h, lyr["ln2_g"], lyr["ln2_b"])
        y1 = y @ f32(lyr["w1"]) + lyr["b1"]
        y1 = y1 * jax.nn.sigmoid(1.702 * y1)
        h = h + y1 @ f32(lyr["w2"]) + lyr["b2"]

    cls_state = h[:, 0, :]
    return cls_state @ f32(params["cls_w"]) + params["cls_b"]


# ------------------------------ parameter init --------------------------------

def init_params(key, *, C=3, P=16, D=1024, heads=16, num_layers=2, mlp=4096,
                num_labels=2, num_patches=4, TC=512):
    keys = jax.random.split(key, 8 + 16 * num_layers)
    ki = iter(keys)
    std = 0.02

    def nrm(shape, dtype=jnp.float32):
        return (jax.random.normal(next(ki), shape, jnp.float32) * std).astype(dtype)

    conv_w = nrm((D, C, P, P))                 # Conv2d(C, D, P, stride=P, bias=False)
    cls_w = nrm((D, num_labels), jnp.bfloat16)     # nn.Linear(1024, num_labels) weight^T
    cls_b = jnp.zeros((num_labels,), jnp.float32)
    n_lane = 128                                   # lane-dense classifier output
    cls_w_pad = jnp.zeros((D, n_lane), jnp.bfloat16).at[:, :num_labels].set(cls_w)
    cls_b_pad = jnp.zeros((n_lane,), jnp.float32).at[:num_labels].set(cls_b)

    params = dict(
        patch_size=P, hidden=D, num_heads=heads, num_labels=num_labels,
        # pre-transposed once + bf16 so the patch-embed matmul needs no runtime transpose
        patch_w=conv_w.reshape(D, C * P * P).T.astype(jnp.bfloat16),
        class_emb=nrm((D,)),
        pos_emb=nrm((num_patches + 1, D)),
        pre_ln_g=jnp.ones((D,), jnp.float32),
        pre_ln_b=jnp.zeros((D,), jnp.float32),
        cls_w=cls_w, cls_b=cls_b, cls_w_pad=cls_w_pad, cls_b_pad=cls_b_pad,
        layers=[],
    )
    for _ in range(num_layers):
        lyr = dict(
            ln1_g=jnp.ones((D,), jnp.float32), ln1_b=jnp.zeros((D,), jnp.float32),
            wq=nrm((D, D), jnp.bfloat16), bq=nrm((D,)),
            wk=nrm((D, D), jnp.bfloat16), bk=nrm((D,)),
            wv=nrm((D, D), jnp.bfloat16), bv=nrm((D,)),
            wo=nrm((D, D), jnp.bfloat16), bo=nrm((D,)),
            ln2_g=jnp.ones((D,), jnp.float32), ln2_b=jnp.zeros((D,), jnp.float32),
            w1=nrm((D, mlp), jnp.bfloat16), b1=nrm((mlp,)),
            w2=nrm((mlp, D), jnp.bfloat16), b2=nrm((D,)),
        )
        # Stack [grouped-QKV | out-proj | FC1] columns into uniform (D, TC) bf16 chunks,
        # with q/k/v interleaved per TC-wide head group so attention can start early.
        cols = []
        for g in range(D // TC):
            sl = slice(g * TC, (g + 1) * TC)
            cols += [lyr["wq"][:, sl], lyr["wk"][:, sl], lyr["wv"][:, sl]]
        stacked = jnp.concatenate(cols + [lyr["wo"], lyr["w1"]], axis=1)
        n_chunks = stacked.shape[1] // TC
        lyr["w_stack"] = (stacked.reshape(D, n_chunks, TC)
                          .transpose(1, 0, 2).astype(jnp.bfloat16))
        params["layers"].append(lyr)
    return params


# ----------------------------------- main --------------------------------------

if __name__ == "__main__":
    key = jax.random.PRNGKey(0)
    kx, kp = jax.random.split(key)

    # NCHW pixels, patch=16 -> 4 patches + CLS = 5 tokens (padded to 8 in-kernel);
    # hidden kept at 1024 so the classifier is exactly nn.Linear(1024, 2).
    B, C, H, W, P = 2, 3, 32, 32, 16
    x = jax.random.normal(kx, (B, C, H, W), jnp.float32)

    params = init_params(kp, C=C, P=P, D=1024, heads=16, num_layers=2, mlp=4096,
                         num_labels=2, num_patches=(H // P) * (W // P))

    logits = jax.block_until_ready(forward(x, params))
    ref_logits = jax.block_until_ready(ref_forward(x, params))

    assert logits.shape == (B, 2)
    assert np.all(np.isfinite(np.asarray(logits)))
    assert np.allclose(np.asarray(logits), np.asarray(ref_logits),
                       rtol=2e-2, atol=2e-2)

    print("KERNEL_OK")
</pallas_src>

<mosaic_0001>
module attributes {stable_mosaic.version = 11 : i64} {
  func.func @_embed_kernel(%arg0: i32, %arg1: memref<8x768xf32, #tpu.memory_space<vmem>>, %arg2: memref<768x1024xbf16, #tpu.memory_space<vmem>>, %arg3: memref<1x1024xf32, #tpu.memory_space<vmem>>, %arg4: memref<5x1024xf32, #tpu.memory_space<vmem>>, %arg5: memref<1x1024xf32, #tpu.memory_space<vmem>>, %arg6: memref<1x1024xf32, #tpu.memory_space<vmem>>, %arg7: memref<16x1024xf32, #tpu.memory_space<vmem>>, %arg8: memref<16x1024xf32, #tpu.memory_space<vmem>>) attributes {dimension_semantics = [#tpu.dimension_semantics<arbitrary>], iteration_bounds = array<i64: 1>, scalar_prefetch = 0 : i64, scratch_operands = 1 : i64, tpu.core_type = #tpu.core_type<tc>, window_params = [{pipeline_mode = #tpu.pipeline_mode<synchronous>, transform_indices = @transform_0, window_bounds = array<i64: 8, 768>}, {pipeline_mode = #tpu.pipeline_mode<synchronous>, transform_indices = @transform_1, window_bounds = array<i64: 768, 1024>}, {pipeline_mode = #tpu.pipeline_mode<synchronous>, transform_indices = @transform_2, window_bounds = array<i64: 1, 1024>}, {pipeline_mode = #tpu.pipeline_mode<synchronous>, transform_indices = @transform_3, window_bounds = array<i64: 5, 1024>}, {pipeline_mode = #tpu.pipeline_mode<synchronous>, transform_indices = @transform_4, window_bounds = array<i64: 1, 1024>}, {pipeline_mode = #tpu.pipeline_mode<synchronous>, transform_indices = @transform_5, window_bounds = array<i64: 1, 1024>}, {pipeline_mode = #tpu.pipeline_mode<synchronous>, transform_indices = @transform_6, window_bounds = array<i64: 16, 1024>}]} {
    %c0 = arith.constant 0 : index
    %c0_0 = arith.constant 0 : index
    %0 = vector.load %arg1[%c0, %c0_0] : memref<8x768xf32, #tpu.memory_space<vmem>>, vector<8x768xf32>
    %1 = arith.truncf %0 : vector<8x768xf32> to vector<8x768xbf16>
    %c0_1 = arith.constant 0 : index
    %c0_2 = arith.constant 0 : index
    %2 = vector.load %arg2[%c0_1, %c0_2] : memref<768x1024xbf16, #tpu.memory_space<vmem>>, vector<768x1024xbf16>
    %cst = arith.constant dense<0.000000e+00> : vector<8x1024xf32>
    %3 = tpu.matmul %1, %2, %cst {dimension_numbers = #tpu.dot_dimension_numbers<[1], [0], [0], [1], [0, 0, 1, 1], [], []>} : vector<8x768xbf16>, vector<768x1024xbf16>, vector<8x1024xf32> -> vector<8x1024xf32>
    %c0_3 = arith.constant 0 : index
    %c0_4 = arith.constant 0 : index
    %4 = vector.load %arg4[%c0_3, %c0_4] : memref<5x1024xf32, #tpu.memory_space<vmem>>, vector<5x1024xf32>
    %c0_5 = arith.constant 0 : index
    %c0_6 = arith.constant 0 : index
    %5 = vector.load %arg3[%c0_5, %c0_6] : memref<1x1024xf32, #tpu.memory_space<vmem>>, vector<1x1024xf32>
    %6 = vector.extract_strided_slice %4 {offsets = [0, 0], sizes = [1, 1024], strides = [1, 1]} : vector<5x1024xf32> to vector<1x1024xf32>
    %7 = arith.addf %5, %6 : vector<1x1024xf32>
    %cst_7 = arith.constant 0.000000e+00 : f32
    %8 = vector.broadcast %cst_7 : f32 to vector<16x1024xf32>
    %c0_8 = arith.constant 0 : index
    %c0_9 = arith.constant 0 : index
    %9 = vector.load %arg8[%c0_8, %c0_9] : memref<16x1024xf32, #tpu.memory_space<vmem>>, vector<16x1024xf32>
    tpu.vector_store %arg8[%c0_8, %c0_9], %8 {strides = array<i32>} : memref<16x1024xf32, #tpu.memory_space<vmem>>, vector<16x1024xf32>,
    %c0_10 = arith.constant 0 : index
    %c0_11 = arith.constant 0 : index
    %10 = vector.load %arg8[%c0_10, %c0_11] : memref<16x1024xf32, #tpu.memory_space<vmem>>, vector<1x1024xf32>
    tpu.vector_store %arg8[%c0_10, %c0_11], %7 {strides = array<i32>} : memref<16x1024xf32, #tpu.memory_space<vmem>>, vector<1x1024xf32>,
    %11 = vector.extract_strided_slice %3 {offsets = [0, 0], sizes = [4, 1024], strides = [1, 1]} : vector<8x1024xf32> to vector<4x1024xf32>
    %12 = vector.extract_strided_slice %4 {offsets = [1, 0], sizes = [4, 1024], strides = [1, 1]} : vector<5x1024xf32> to vector<4x1024xf32>
    %13 = arith.addf %11, %12 : vector<4x1024xf32>
    %c1 = arith.constant 1 : index
    %c0_12 = arith.constant 0 : index
    %14 = vector.load %arg8[%c1, %c0_12] : memref<16x1024xf32, #tpu.memory_space<vmem>>, vector<4x1024xf32>
    tpu.vector_store %arg8[%c1, %c0_12], %13 {strides = array<i32>} : memref<16x1024xf32, #tpu.memory_space<vmem>>, vector<4x1024xf32>,
    %c8 = arith.constant 8 : index
    %c0_13 = arith.constant 0 : index
    %15 = vector.load %arg8[%c8, %c0_13] : memref<16x1024xf32, #tpu.memory_space<vmem>>, vector<1x1024xf32>
    tpu.vector_store %arg8[%c8, %c0_13], %7 {strides = array<i32>} : memref<16x1024xf32, #tpu.memory_space<vmem>>, vector<1x1024xf32>,
    %16 = vector.extract_strided_slice %3 {offsets = [4, 0], sizes = [4, 1024], strides = [1, 1]} : vector<8x1024xf32> to vector<4x1024xf32>
    %17 = vector.extract_strided_slice %4 {offsets = [1, 0], sizes = [4, 1024], strides = [1, 1]} : vector<5x1024xf32> to vector<4x1024xf32>
    %18 = arith.addf %16, %17 : vector<4x1024xf32>
    %c9 = arith.constant 9 : index
    %c0_14 = arith.constant 0 : index
    %19 = vector.load %arg8[%c9, %c0_14] : memref<16x1024xf32, #tpu.memory_space<vmem>>, vector<4x1024xf32>
    tpu.vector_store %arg8[%c9, %c0_14], %18 {strides = array<i32>} : memref<16x1024xf32, #tpu.memory_space<vmem>>, vector<4x1024xf32>,
    %c0_15 = arith.constant 0 : index
    %c0_16 = arith.constant 0 : index
    %20 = vector.load %arg8[%c0_15, %c0_16] : memref<16x1024xf32, #tpu.memory_space<vmem>>, vector<16x1024xf32>
    %c0_17 = arith.constant 0 : index
    %c0_18 = arith.constant 0 : index
    %21 = vector.load %arg5[%c0_17, %c0_18] : memref<1x1024xf32, #tpu.memory_space<vmem>>, vector<1x1024xf32>
    %c0_19 = arith.constant 0 : index
    %c0_20 = arith.constant 0 : index
    %22 = vector.load %arg6[%c0_19, %c0_20] : memref<1x1024xf32, #tpu.memory_space<vmem>>, vector<1x1024xf32>
    %cst_21 = arith.constant dense<0.000000e+00> : vector<16xf32>
    %23 = vector.multi_reduction <add>, %20, %cst_21 [1] : vector<16x1024xf32> to vector<16xf32>
    %24 = vector.shape_cast %23 : vector<16xf32> to vector<16x1xf32>
    %cst_22 = arith.constant 1.024000e+03 : f32
    %25 = vector.broadcast %cst_22 : f32 to vector<16x1xf32>
    %26 = arith.divf %24, %25 : vector<16x1xf32>
    %27 = vector.broadcast %26 : vector<16x1xf32> to vector<16x1024xf32>
    %28 = arith.subf %20, %27 : vector<16x1024xf32>
    %29 = arith.mulf %28, %28 : vector<16x1024xf32>
    %cst_23 = arith.constant dense<0.000000e+00> : vector<16xf32>
    %30 = vector.multi_reduction <add>, %29, %cst_23 [1] : vector<16x1024xf32> to vector<16xf32>
    %31 = vector.shape_cast %30 : vector<16xf32> to vector<16x1xf32>
    %cst_24 = arith.constant 1.024000e+03 : f32
    %32 = vector.broadcast %cst_24 : f32 to vector<16x1xf32>
    %33 = arith.divf %31, %32 : vector<16x1xf32>
    %cst_25 = arith.constant 9.99999974E-6 : f32
    %34 = vector.broadcast %cst_25 : f32 to vector<16x1xf32>
    %35 = arith.addf %33, %34 : vector<16x1xf32>
    %36 = math.rsqrt %35 : vector<16x1xf32>
    %37 = vector.broadcast %36 : vector<16x1xf32> to vector<16x1024xf32>
    %38 = arith.mulf %28, %37 : vector<16x1024xf32>
    %39 = vector.broadcast %21 : vector<1x1024xf32> to vector<16x1024xf32>
    %40 = arith.mulf %38, %39 : vector<16x1024xf32>
    %41 = vector.broadcast %22 : vector<1x1024xf32> to vector<16x1024xf32>
    %42 = arith.addf %40, %41 : vector<16x1024xf32>
    %c0_26 = arith.constant 0 : index
    %c0_27 = arith.constant 0 : index
    %43 = vector.load %arg7[%c0_26, %c0_27] : memref<16x1024xf32, #tpu.memory_space<vmem>>, vector<16x1024xf32>
    tpu.vector_store %arg7[%c0_26, %c0_27], %42 {strides = array<i32>} : memref<16x1024xf32, #tpu.memory_space<vmem>>, vector<16x1024xf32>,
    return
  }
  func.func @transform_0(%arg0: i32) -> (i32, i32) {
    %c0_i32 = arith.constant 0 : i32
    %c0_i32_0 = arith.constant 0 : i32
    %c0_i32_1 = arith.constant 0 : i32
    return %c0_i32, %c0_i32_0 : i32, i32
  }
  func.func @transform_1(%arg0: i32) -> (i32, i32) {
    %c0_i32 = arith.constant 0 : i32
    %c0_i32_0 = arith.constant 0 : i32
    %c0_i32_1 = arith.constant 0 : i32
    return %c0_i32, %c0_i32_0 : i32, i32
  }
  func.func @transform_2(%arg0: i32) -> (i32, i32) {
    %c0_i32 = arith.constant 0 : i32
    %c0_i32_0 = arith.constant 0 : i32
    %c0_i32_1 = arith.constant 0 : i32
    return %c0_i32, %c0_i32_0 : i32, i32
  }
  func.func @transform_3(%arg0: i32) -> (i32, i32) {
    %c0_i32 = arith.constant 0 : i32
    %c0_i32_0 = arith.constant 0 : i32
    %c0_i32_1 = arith.constant 0 : i32
    return %c0_i32, %c0_i32_0 : i32, i32
  }
  func.func @transform_4(%arg0: i32) -> (i32, i32) {
    %c0_i32 = arith.constant 0 : i32
    %c0_i32_0 = arith.constant 0 : i32
    %c0_i32_1 = arith.constant 0 : i32
    return %c0_i32, %c0_i32_0 : i32, i32
  }
  func.func @transform_5(%arg0: i32) -> (i32, i32) {
    %c0_i32 = arith.constant 0 : i32
    %c0_i32_0 = arith.constant 0 : i32
    %c0_i32_1 = arith.constant 0 : i32
    return %c0_i32, %c0_i32_0 : i32, i32
  }
  func.func @transform_6(%arg0: i32) -> (i32, i32) {
    %c0_i32 = arith.constant 0 : i32
    %c0_i32_0 = arith.constant 0 : i32
    %c0_i32_1 = arith.constant 0 : i32
    return %c0_i32, %c0_i32_0 : i32, i32
  }
}

</mosaic_0001>

<llo_original>
// kernel: tpu_custom_call.1
$region0: #{tpu_custom_call.1}
  #allocation0 [shape = 'u32[]', space=smem, size = 0x4, offset = 0x4, fixed_abs, tag = 'smem constant byte address 0x4 - core index']
  #allocation1 [shape = 'u32[72,128]{1,0:T(1,128)}', space=vmem, size = 0x9000, scoped, tag = 'internal scratch']
  #allocation2 [shape = 'f32[16,1024]{1,0:T(8,128)}', space=vmem, size = 0x10000, scoped, tag = 'scratch operand']
  %s0 = inlined_call_operand.hbm [shape: f32[8,768], index: 0, kind: input, shape index: {}]
  %s1 = inlined_call_operand.hbm [shape: bf16[768,1024], index: 1, kind: input, shape index: {}]
  %s2 = inlined_call_operand.hbm [shape: f32[1,1024], index: 2, kind: input, shape index: {}]
  %s3 = inlined_call_operand.hbm [shape: f32[5,1024], index: 3, kind: input, shape index: {}]
  %s4 = inlined_call_operand.hbm [shape: f32[1,1024], index: 4, kind: input, shape index: {}]
  %s5 = inlined_call_operand.hbm [shape: f32[1,1024], index: 5, kind: input, shape index: {}]
  %s6 = inlined_call_operand.hbm [shape: f32[16,1024], index: 6, kind: output, shape index: {}]
  %s7 = sld [smem:[#allocation0]]
  $region58: #{tpu_custom_call.1} parent=0
    _
  %s9 = ssub.s32 1, %s7
  %s10 = scalar_select 0, %s9, %s7
  $region1: #{tpu_custom_call.1} parent=0
    #allocation3 [shape = 'u8[24576]{0}', space=vmem, size = 0x6000, scoped, tag = 'input window, operand 0, single buffered']
    #allocation4 [shape = 's32[1]{0}', space=sflag, size = 0x4, scoped, tag = 'scoped memory for tpu_custom_call.1']
    #allocation5 [shape = 's32[1]{0}', space=sflag, size = 0x4, scoped, tag = 'scoped memory for tpu_custom_call.1']
    #allocation6 [shape = 'u8[1572864]{0}', space=vmem, size = 0x180000, scoped, tag = 'input window, operand 1, single buffered']
    #allocation7 [shape = 's32[1]{0}', space=sflag, size = 0x4, scoped, tag = 'scoped memory for tpu_custom_call.1']
    #allocation8 [shape = 'u8[4096]{0}', space=vmem, size = 0x1000, scoped, tag = 'input window, operand 2, single buffered']
    #allocation9 [shape = 'u8[32768]{0}', space=vmem, size = 0x8000, scoped, tag = 'input window, operand 3, single buffered']
    #allocation10 [shape = 's32[1]{0}', space=sflag, size = 0x4, scoped, tag = 'scoped memory for tpu_custom_call.1']
    #allocation11 [shape = 'u8[4096]{0}', space=vmem, size = 0x1000, scoped, tag = 'input window, operand 4, single buffered']
    #allocation12 [shape = 'u8[4096]{0}', space=vmem, size = 0x1000, scoped, tag = 'input window, operand 5, single buffered']
    #allocation13 [shape = 's32[1]{0}', space=sflag, size = 0x4, scoped, tag = 'scoped memory for tpu_custom_call.1']
    #allocation14 [shape = 'u8[65536]{0}', space=vmem, size = 0x10000, scoped, tag = 'output window, operand 0, single buffered']
    %11 = vsyncpa [#allocation4], 0
    %12 = vsyncpa [#allocation7], 0
    %13 = vsyncpa [#allocation10], 0
    %14 = vsyncpa [#allocation13], 0
    %15 = vsyncpa [#allocation5], 0
    // Predicated region
    $region2: #{tpu_custom_call.1} parent=1 // pred_check
      _
    $region3: #{tpu_custom_call.1} parent=1 // pred_check_branch
      %17 = sbr.rel (0) target = $region5
    $region4: #{tpu_custom_call.1} parent=1 // pred_region
      %19 = vsyncadd [#allocation4], 0
      %s21 = sshll.u32 %s0, 4
      %s22 = int_to_ptr.hbm [resolvable:$true] %s21
      %s23 = sshll.u32 [#allocation3], 4
      %s24 = int_to_ptr.vmem [resolvable:$true] %s23
      %26 = dma.hbm_to_vmem [thread:$0]  %s22, 768, %s24, [#allocation4]
    $region5: #{tpu_custom_call.1} parent=1 // pred_fallthru
      _
    // Predicated region
    $region6: #{tpu_custom_call.1} parent=1 // pred_check
      _
    $region7: #{tpu_custom_call.1} parent=1 // pred_check_branch
      %28 = sbr.rel (0) target = $region9
    $region8: #{tpu_custom_call.1} parent=1 // pred_region
      %30 = vsyncadd [#allocation7], 0
      %s31 = sshll.u32 %s1, 4
      %s32 = int_to_ptr.hbm [resolvable:$true] %s31
      %s33 = sshll.u32 [#allocation6], 4
      %s34 = int_to_ptr.vmem [resolvable:$true] %s33
      %39 = dma.hbm_to_vmem [thread:$0]  %s32, 49152, %s34, [#allocation7], 512, 512, 32
    $region9: #{tpu_custom_call.1} parent=1 // pred_fallthru
      _
    // Predicated region
    $region10: #{tpu_custom_call.1} parent=1 // pred_check
      _
    $region11: #{tpu_custom_call.1} parent=1 // pred_check_branch
      %41 = sbr.rel (0) target = $region13
    $region12: #{tpu_custom_call.1} parent=1 // pred_region
      %43 = vsyncadd [#allocation7], 0
      %s45 = sshll.u32 %s2, 4
      %s46 = int_to_ptr.hbm [resolvable:$true] %s45
      %s47 = sshll.u32 [#allocation8], 4
      %s48 = int_to_ptr.vmem [resolvable:$true] %s47
      %50 = dma.hbm_to_vmem [thread:$0]  %s46, 128, %s48, [#allocation7]
    $region13: #{tpu_custom_call.1} parent=1 // pred_fallthru
      _
    // Predicated region
    $region14: #{tpu_custom_call.1} parent=1 // pred_check
      _
    $region15: #{tpu_custom_call.1} parent=1 // pred_check_branch
      %52 = sbr.rel (0) target = $region17
    $region16: #{tpu_custom_call.1} parent=1 // pred_region
      %54 = vsyncadd [#allocation10], 0
      %s56 = sshll.u32 %s3, 4
      %s57 = int_to_ptr.hbm [resolvable:$true] %s56
      %s58 = sshll.u32 [#allocation9], 4
      %s59 = int_to_ptr.vmem [resolvable:$true] %s58
      %61 = dma.hbm_to_vmem [thread:$0]  %s57, 1024, %s59, [#allocation10]
    $region17: #{tpu_custom_call.1} parent=1 // pred_fallthru
      _
    // Predicated region
    $region18: #{tpu_custom_call.1} parent=1 // pred_check
      _
    $region19: #{tpu_custom_call.1} parent=1 // pred_check_branch
      %63 = sbr.rel (0) target = $region21
    $region20: #{tpu_custom_call.1} parent=1 // pred_region
      %65 = vsyncadd [#allocation10], 0
      %s67 = sshll.u32 %s4, 4
      %s68 = int_to_ptr.hbm [resolvable:$true] %s67
      %s69 = sshll.u32 [#allocation11], 4
      %s70 = int_to_ptr.vmem [resolvable:$true] %s69
      %72 = dma.hbm_to_vmem [thread:$0]  %s68, 128, %s70, [#allocation10]
    $region21: #{tpu_custom_call.1} parent=1 // pred_fallthru
      _
    // Predicated region
    $region22: #{tpu_custom_call.1} parent=1 // pred_check
      _
    $region23: #{tpu_custom_call.1} parent=1 // pred_check_branch
      %74 = sbr.rel (0) target = $region25
    $region24: #{tpu_custom_call.1} parent=1 // pred_region
      %76 = vsyncadd [#allocation13], 0
      %s78 = sshll.u32 %s5, 4
      %s79 = int_to_ptr.hbm [resolvable:$true] %s78
      %s80 = sshll.u32 [#allocation12], 4
      %s81 = int_to_ptr.vmem [resolvable:$true] %s80
      %83 = dma.hbm_to_vmem [thread:$0]  %s79, 128, %s81, [#allocation13]
    $region25: #{tpu_custom_call.1} parent=1 // pred_fallthru
      _
    // Predicated region
    $region26: #{tpu_custom_call.1} parent=1 // pred_check
      _
    $region27: #{tpu_custom_call.1} parent=1 // pred_check_branch
      %85 = sbr.rel (0) target = $region29
    $region28: #{tpu_custom_call.1} parent=1 // pred_region
      %87 = dma.done [#allocation4], 768
    $region29: #{tpu_custom_call.1} parent=1 // pred_fallthru
      _
    // Predicated region
    $region30: #{tpu_custom_call.1} parent=1 // pred_check
      _
    $region31: #{tpu_custom_call.1} parent=1 // pred_check_branch
      %89 = sbr.rel (0) target = $region33
    $region32: #{tpu_custom_call.1} parent=1 // pred_region
      %91 = dma.done [#allocation7], 49152
    $region33: #{tpu_custom_call.1} parent=1 // pred_fallthru
      _
    // Predicated region
    $region34: #{tpu_custom_call.1} parent=1 // pred_check
      _
    $region35: #{tpu_custom_call.1} parent=1 // pred_check_branch
      %93 = sbr.rel (0) target = $region37
    $region36: #{tpu_custom_call.1} parent=1 // pred_region
      %95 = dma.done [#allocation7], 128
    $region37: #{tpu_custom_call.1} parent=1 // pred_fallthru
      _
    // Predicated region
    $region38: #{tpu_custom_call.1} parent=1 // pred_check
      _
    $region39: #{tpu_custom_call.1} parent=1 // pred_check_branch
      %97 = sbr.rel (0) target = $region41
    $region40: #{tpu_custom_call.1} parent=1 // pred_region
      %99 = dma.done [#allocation10], 1024
    $region41: #{tpu_custom_call.1} parent=1 // pred_fallthru
      _
    // Predicated region
    $region42: #{tpu_custom_call.1} parent=1 // pred_check
      _
    $region43: #{tpu_custom_call.1} parent=1 // pred_check_branch
      %101 = sbr.rel (0) target = $region45
    $region44: #{tpu_custom_call.1} parent=1 // pred_region
      %103 = dma.done [#allocation10], 128
    $region45: #{tpu_custom_call.1} parent=1 // pred_fallthru
      _
    // Predicated region
    $region46: #{tpu_custom_call.1} parent=1 // pred_check
      _
    $region47: #{tpu_custom_call.1} parent=1 // pred_check_branch
      %105 = sbr.rel (0) target = $region49
    $region48: #{tpu_custom_call.1} parent=1 // pred_region
      %107 = dma.done [#allocation13], 128
    $region49: #{tpu_custom_call.1} parent=1 // pred_fallthru
      _
    %v108 = vld [vmem:[#allocation3] sm:$0xff]
    %v109 = vld [vmem:[#allocation3 + $0x8] sm:$0xff]
    %v110 = vld [vmem:[#allocation3 + $0x10] sm:$0xff]
    %v111 = vld [vmem:[#allocation3 + $0x18] sm:$0xff]
    %v112 = vld [vmem:[#allocation3 + $0x20] sm:$0xff]
    %v113 = vld [vmem:[#allocation3 + $0x28] sm:$0xff]
    %v114 = vpack.c.bf16 %v108, %v108
    %v115 = vpack.c.bf16 %v109, %v109
    %v116 = vpack.c.bf16 %v110, %v110
    %v117 = vpack.c.bf16 %v111, %v111
    %v118 = vpack.c.bf16 %v112, %v112
    %v119 = vpack.c.bf16 %v113, %v113
    %v120 = vld [vmem:[#allocation6] sm:$0xff]
    %v121 = vld [vmem:[#allocation6 + $0x8] sm:$0xff]
    %v122 = vld [vmem:[#allocation6 + $0x10] sm:$0xff]
    %v123 = vld [vmem:[#allocation6 + $0x18] sm:$0xff]
    %v124 = vld [vmem:[#allocation6 + $0x20] sm:$0xff]
    %v125 = vld [vmem:[#allocation6 + $0x28] sm:$0xff]
    %v126 = vld [vmem:[#allocation6 + $0x30] sm:$0xff]
    %v127 = vld [vmem:[#allocation6 + $0x38] sm:$0xff]
    %v128 = vld [vmem:[#allocation6 + $0x40] sm:$0xff]
    %v129 = vld [vmem:[#allocation6 + $0x48] sm:$0xff]
    %v130 = vld [vmem:[#allocation6 + $0x50] sm:$0xff]
    %v131 = vld [vmem:[#allocation6 + $0x58] sm:$0xff]
    %v132 = vld [vmem:[#allocation6 + $0x60] sm:$0xff]
    %v133 = vld [vmem:[#allocation6 + $0x68] sm:$0xff]
    %v134 = vld [vmem:[#allocation6 + $0x70] sm:$0xff]
    %v135 = vld [vmem:[#allocation6 + $0x78] sm:$0xff]
    %v136 = vld [vmem:[#allocation6 + $0x80] sm:$0xff]
    %v137 = vld [vmem:[#allocation6 + $0x88] sm:$0xff]
    %v138 = vld [vmem:[#allocation6 + $0x90] sm:$0xff]
    %v139 = vld [vmem:[#allocation6 + $0x98] sm:$0xff]
    %v140 = vld [vmem:[#allocation6 + $0xa0] sm:$0xff]
    %v141 = vld [vmem:[#allocation6 + $0xa8] sm:$0xff]
    %v142 = vld [vmem:[#allocation6 + $0xb0] sm:$0xff]
    %v143 = vld [vmem:[#allocation6 + $0xb8] sm:$0xff]
    %v144 = vld [vmem:[#allocation6 + $0xc0] sm:$0xff]
    %v145 = vld [vmem:[#allocation6 + $0xc8] sm:$0xff]
    %v146 = vld [vmem:[#allocation6 + $0xd0] sm:$0xff]
    %v147 = vld [vmem:[#allocation6 + $0xd8] sm:$0xff]
    %v148 = vld [vmem:[#allocation6 + $0xe0] sm:$0xff]
    %v149 = vld [vmem:[#allocation6 + $0xe8] sm:$0xff]
    %v150 = vld [vmem:[#allocation6 + $0xf0] sm:$0xff]
    %v151 = vld [vmem:[#allocation6 + $0xf8] sm:$0xff]
    %v152 = vld [vmem:[#allocation6 + $0x100] sm:$0xff]
    %v153 = vld [vmem:[#allocation6 + $0x108] sm:$0xff]
    %v154 = vld [vmem:[#allocation6 + $0x110] sm:$0xff]
    %v155 = vld [vmem:[#allocation6 + $0x118] sm:$0xff]
    %v156 = vld [vmem:[#allocation6 + $0x120] sm:$0xff]
    %v157 = vld [vmem:[#allocation6 + $0x128] sm:$0xff]
    %v158 = vld [vmem:[#allocation6 + $0x130] sm:$0xff]
    %v159 = vld [vmem:[#allocation6 + $0x138] sm:$0xff]
    %v160 = vld [vmem:[#allocation6 + $0x140] sm:$0xff]
    %v161 = vld [vmem:[#allocation6 + $0x148] sm:$0xff]
    %v162 = vld [vmem:[#allocation6 + $0x150] sm:$0xff]
    %v163 = vld [vmem:[#allocation6 + $0x158] sm:$0xff]
    %v164 = vld [vmem:[#allocation6 + $0x160] sm:$0xff]
    %v165 = vld [vmem:[#allocation6 + $0x168] sm:$0xff]
    %v166 = vld [vmem:[#allocation6 + $0x170] sm:$0xff]
    %v167 = vld [vmem:[#allocation6 + $0x178] sm:$0xff]
    %v168 = vld [vmem:[#allocation6 + $0x180] sm:$0xff]
    %v169 = vld [vmem:[#allocation6 + $0x188] sm:$0xff]
    %v170 = vld [vmem:[#allocation6 + $0x190] sm:$0xff]
    %v171 = vld [vmem:[#allocation6 + $0x198] sm:$0xff]
    %v172 = vld [vmem:[#allocation6 + $0x1a0] sm:$0xff]
    %v173 = vld [vmem:[#allocation6 + $0x1a8] sm:$0xff]
    %v174 = vld [vmem:[#allocation6 + $0x1b0] sm:$0xff]
    %v175 = vld [vmem:[#allocation6 + $0x1b8] sm:$0xff]
    %v176 = vld [vmem:[#allocation6 + $0x1c0] sm:$0xff]
    %v177 = vld [vmem:[#allocation6 + $0x1c8] sm:$0xff]
    %v178 = vld [vmem:[#allocation6 + $0x1d0] sm:$0xff]
    %v179 = vld [vmem:[#allocation6 + $0x1d8] sm:$0xff]
    %v180 = vld [vmem:[#allocation6 + $0x1e0] sm:$0xff]
    %v181 = vld [vmem:[#allocation6 + $0x1e8] sm:$0xff]
    %v182 = vld [vmem:[#allocation6 + $0x1f0] sm:$0xff]
    %v183 = vld [vmem:[#allocation6 + $0x1f8] sm:$0xff]
    %v184 = vld [vmem:[#allocation6 + $0x200] sm:$0xff]
    %v185 = vld [vmem:[#allocation6 + $0x208] sm:$0xff]
    %v186 = vld [vmem:[#allocation6 + $0x210] sm:$0xff]
    %v187 = vld [vmem:[#allocation6 + $0x218] sm:$0xff]
    %v188 = vld [vmem:[#allocation6 + $0x220] sm:$0xff]
    %v189 = vld [vmem:[#allocation6 + $0x228] sm:$0xff]
    %v190 = vld [vmem:[#allocation6 + $0x230] sm:$0xff]
    %v191 = vld [vmem:[#allocation6 + $0x238] sm:$0xff]
    %v192 = vld [vmem:[#allocation6 + $0x240] sm:$0xff]
    %v193 = vld [vmem:[#allocation6 + $0x248] sm:$0xff]
    %v194 = vld [vmem:[#allocation6 + $0x250] sm:$0xff]
    %v195 = vld [vmem:[#allocation6 + $0x258] sm:$0xff]
    %v196 = vld [vmem:[#allocation6 + $0x260] sm:$0xff]
    %v197 = vld [vmem:[#allocation6 + $0x268] sm:$0xff]
    %v198 = vld [vmem:[#allocation6 + $0x270] sm:$0xff]
    %v199 = vld [vmem:[#allocation6 + $0x278] sm:$0xff]
    %v200 = vld [vmem:[#allocation6 + $0x280] sm:$0xff]
    %v201 = vld [vmem:[#allocation6 + $0x288] sm:$0xff]
    %v202 = vld [vmem:[#allocation6 + $0x290] sm:$0xff]
    %v203 = vld [vmem:[#allocation6 + $0x298] sm:$0xff]
    %v204 = vld [vmem:[#allocation6 + $0x2a0] sm:$0xff]
    %v205 = vld [vmem:[#allocation6 + $0x2a8] sm:$0xff]
    %v206 = vld [vmem:[#allocation6 + $0x2b0] sm:$0xff]
    %v207 = vld [vmem:[#allocation6 + $0x2b8] sm:$0xff]
    %v208 = vld [vmem:[#allocation6 + $0x2c0] sm:$0xff]
    %v209 = vld [vmem:[#allocation6 + $0x2c8] sm:$0xff]
    %v210 = vld [vmem:[#allocation6 + $0x2d0] sm:$0xff]
    %v211 = vld [vmem:[#allocation6 + $0x2d8] sm:$0xff]
    %v212 = vld [vmem:[#allocation6 + $0x2e0] sm:$0xff]
    %v213 = vld [vmem:[#allocation6 + $0x2e8] sm:$0xff]
    %v214 = vld [vmem:[#allocation6 + $0x2f0] sm:$0xff]
    %v215 = vld [vmem:[#allocation6 + $0x2f8] sm:$0xff]
    %v216 = vld [vmem:[#allocation6 + $0x300] sm:$0xff]
    %v217 = vld [vmem:[#allocation6 + $0x308] sm:$0xff]
    %v218 = vld [vmem:[#allocation6 + $0x310] sm:$0xff]
    %v219 = vld [vmem:[#allocation6 + $0x318] sm:$0xff]
    %v220 = vld [vmem:[#allocation6 + $0x320] sm:$0xff]
    %v221 = vld [vmem:[#allocation6 + $0x328] sm:$0xff]
    %v222 = vld [vmem:[#allocation6 + $0x330] sm:$0xff]
    %v223 = vld [vmem:[#allocation6 + $0x338] sm:$0xff]
    %v224 = vld [vmem:[#allocation6 + $0x340] sm:$0xff]
    %v225 = vld [vmem:[#allocation6 + $0x348] sm:$0xff]
    %v226 = vld [vmem:[#allocation6 + $0x350] sm:$0xff]
    %v227 = vld [vmem:[#allocation6 + $0x358] sm:$0xff]
    %v228 = vld [vmem:[#allocation6 + $0x360] sm:$0xff]
    %v229 = vld [vmem:[#allocation6 + $0x368] sm:$0xff]
    %v230 = vld [vmem:[#allocation6 + $0x370] sm:$0xff]
    %v231 = vld [vmem:[#allocation6 + $0x378] sm:$0xff]
    %v232 = vld [vmem:[#allocation6 + $0x380] sm:$0xff]
    %v233 = vld [vmem:[#allocation6 + $0x388] sm:$0xff]
    %v234 = vld [vmem:[#allocation6 + $0x390] sm:$0xff]
    %v235 = vld [vmem:[#allocation6 + $0x398] sm:$0xff]
    %v236 = vld [vmem:[#allocation6 + $0x3a0] sm:$0xff]
    %v237 = vld [vmem:[#allocation6 + $0x3a8] sm:$0xff]
    %v238 = vld [vmem:[#allocation6 + $0x3b0] sm:$0xff]
    %v239 = vld [vmem:[#allocation6 + $0x3b8] sm:$0xff]
    %v240 = vld [vmem:[#allocation6 + $0x3c0] sm:$0xff]
    %v241 = vld [vmem:[#allocation6 + $0x3c8] sm:$0xff]
    %v242 = vld [vmem:[#allocation6 + $0x3d0] sm:$0xff]
    %v243 = vld [vmem:[#allocation6 + $0x3d8] sm:$0xff]
    %v244 = vld [vmem:[#allocation6 + $0x3e0] sm:$0xff]
    %v245 = vld [vmem:[#allocation6 + $0x3e8] sm:$0xff]
    %v246 = vld [vmem:[#allocation6 + $0x3f0] sm:$0xff]
    %v247 = vld [vmem:[#allocation6 + $0x3f8] sm:$0xff]
    %v248 = vld [vmem:[#allocation6 + $0x400] sm:$0xff]
    %v249 = vld [vmem:[#allocation6 + $0x408] sm:$0xff]
    %v250 = vld [vmem:[#allocation6 + $0x410] sm:$0xff]
    %v251 = vld [vmem:[#allocation6 + $0x418] sm:$0xff]
    %v252 = vld [vmem:[#allocation6 + $0x420] sm:$0xff]
    %v253 = vld [vmem:[#allocation6 + $0x428] sm:$0xff]
    %v254 = vld [vmem:[#allocation6 + $0x430] sm:$0xff]
    %v255 = vld [vmem:[#allocation6 + $0x438] sm:$0xff]
    %v256 = vld [vmem:[#allocation6 + $0x440] sm:$0xff]
    %v257 = vld [vmem:[#allocation6 + $0x448] sm:$0xff]
    %v258 = vld [vmem:[#allocation6 + $0x450] sm:$0xff]
    %v259 = vld [vmem:[#allocation6 + $0x458] sm:$0xff]
    %v260 = vld [vmem:[#allocation6 + $0x460] sm:$0xff]
    %v261 = vld [vmem:[#allocation6 + $0x468] sm:$0xff]
    %v262 = vld [vmem:[#allocation6 + $0x470] sm:$0xff]
    %v263 = vld [vmem:[#allocation6 + $0x478] sm:$0xff]
    %v264 = vld [vmem:[#allocation6 + $0x480] sm:$0xff]
    %v265 = vld [vmem:[#allocation6 + $0x488] sm:$0xff]
    %v266 = vld [vmem:[#allocation6 + $0x490] sm:$0xff]
    %v267 = vld [vmem:[#allocation6 + $0x498] sm:$0xff]
    %v268 = vld [vmem:[#allocation6 + $0x4a0] sm:$0xff]
    %v269 = vld [vmem:[#allocation6 + $0x4a8] sm:$0xff]
    %v270 = vld [vmem:[#allocation6 + $0x4b0] sm:$0xff]
    %v271 = vld [vmem:[#allocation6 + $0x4b8] sm:$0xff]
    %v272 = vld [vmem:[#allocation6 + $0x4c0] sm:$0xff]
    %v273 = vld [vmem:[#allocation6 + $0x4c8] sm:$0xff]
    %v274 = vld [vmem:[#allocation6 + $0x4d0] sm:$0xff]
    %v275 = vld [vmem:[#allocation6 + $0x4d8] sm:$0xff]
    %v276 = vld [vmem:[#allocation6 + $0x4e0] sm:$0xff]
    %v277 = vld [vmem:[#allocation6 + $0x4e8] sm:$0xff]
    %v278 = vld [vmem:[#allocation6 + $0x4f0] sm:$0xff]
    %v279 = vld [vmem:[#allocation6 + $0x4f8] sm:$0xff]
    %v280 = vld [vmem:[#allocation6 + $0x500] sm:$0xff]
    %v281 = vld [vmem:[#allocation6 + $0x508] sm:$0xff]
    %v282 = vld [vmem:[#allocation6 + $0x510] sm:$0xff]
    %v283 = vld [vmem:[#allocation6 + $0x518] sm:$0xff]
    %v284 = vld [vmem:[#allocation6 + $0x520] sm:$0xff]
    %v285 = vld [vmem:[#allocation6 + $0x528] sm:$0xff]
    %v286 = vld [vmem:[#allocation6 + $0x530] sm:$0xff]
    %v287 = vld [vmem:[#allocation6 + $0x538] sm:$0xff]
    %v288 = vld [vmem:[#allocation6 + $0x540] sm:$0xff]
    %v289 = vld [vmem:[#allocation6 + $0x548] sm:$0xff]
    %v290 = vld [vmem:[#allocation6 + $0x550] sm:$0xff]
    %v291 = vld [vmem:[#allocation6 + $0x558] sm:$0xff]
    %v292 = vld [vmem:[#allocation6 + $0x560] sm:$0xff]
    %v293 = vld [vmem:[#allocation6 + $0x568] sm:$0xff]
    %v294 = vld [vmem:[#allocation6 + $0x570] sm:$0xff]
    %v295 = vld [vmem:[#allocation6 + $0x578] sm:$0xff]
    %v296 = vld [vmem:[#allocation6 + $0x580] sm:$0xff]
    %v297 = vld [vmem:[#allocation6 + $0x588] sm:$0xff]
    %v298 = vld [vmem:[#allocation6 + $0x590] sm:$0xff]
    %v299 = vld [vmem:[#allocation6 + $0x598] sm:$0xff]
    %v300 = vld [vmem:[#allocation6 + $0x5a0] sm:$0xff]
    %v301 = vld [vmem:[#allocation6 + $0x5a8] sm:$0xff]
    %v302 = vld [vmem:[#allocation6 + $0x5b0] sm:$0xff]
    %v303 = vld [vmem:[#allocation6 + $0x5b8] sm:$0xff]
    %v304 = vld [vmem:[#allocation6 + $0x5c0] sm:$0xff]
    %v305 = vld [vmem:[#allocation6 + $0x5c8] sm:$0xff]
    %v306 = vld [vmem:[#allocation6 + $0x5d0] sm:$0xff]
    %v307 = vld [vmem:[#allocation6 + $0x5d8] sm:$0xff]
    %v308 = vld [vmem:[#allocation6 + $0x5e0] sm:$0xff]
    %v309 = vld [vmem:[#allocation6 + $0x5e8] sm:$0xff]
    %v310 = vld [vmem:[#allocation6 + $0x5f0] sm:$0xff]
    %v311 = vld [vmem:[#allocation6 + $0x5f8] sm:$0xff]
    %v312 = vld [vmem:[#allocation6 + $0x600] sm:$0xff]
    %v313 = vld [vmem:[#allocation6 + $0x608] sm:$0xff]
    %v314 = vld [vmem:[#allocation6 + $0x610] sm:$0xff]
    %v315 = vld [vmem:[#allocation6 + $0x618] sm:$0xff]
    %v316 = vld [vmem:[#allocation6 + $0x620] sm:$0xff]
    %v317 = vld [vmem:[#allocation6 + $0x628] sm:$0xff]
    %v318 = vld [vmem:[#allocation6 + $0x630] sm:$0xff]
    %v319 = vld [vmem:[#allocation6 + $0x638] sm:$0xff]
    %v320 = vld [vmem:[#allocation6 + $0x640] sm:$0xff]
    %v321 = vld [vmem:[#allocation6 + $0x648] sm:$0xff]
    %v322 = vld [vmem:[#allocation6 + $0x650] sm:$0xff]
    %v323 = vld [vmem:[#allocation6 + $0x658] sm:$0xff]
    %v324 = vld [vmem:[#allocation6 + $0x660] sm:$0xff]
    %v325 = vld [vmem:[#allocation6 + $0x668] sm:$0xff]
    %v326 = vld [vmem:[#allocation6 + $0x670] sm:$0xff]
    %v327 = vld [vmem:[#allocation6 + $0x678] sm:$0xff]
    %v328 = vld [vmem:[#allocation6 + $0x680] sm:$0xff]
    %v329 = vld [vmem:[#allocation6 + $0x688] sm:$0xff]
    %v330 = vld [vmem:[#allocation6 + $0x690] sm:$0xff]
    %v331 = vld [vmem:[#allocation6 + $0x698] sm:$0xff]
    %v332 = vld [vmem:[#allocation6 + $0x6a0] sm:$0xff]
    %v333 = vld [vmem:[#allocation6 + $0x6a8] sm:$0xff]
    %v334 = vld [vmem:[#allocation6 + $0x6b0] sm:$0xff]
    %v335 = vld [vmem:[#allocation6 + $0x6b8] sm:$0xff]
    %v336 = vld [vmem:[#allocation6 + $0x6c0] sm:$0xff]
    %v337 = vld [vmem:[#allocation6 + $0x6c8] sm:$0xff]
    %v338 = vld [vmem:[#allocation6 + $0x6d0] sm:$0xff]
    %v339 = vld [vmem:[#allocation6 + $0x6d8] sm:$0xff]
    %v340 = vld [vmem:[#allocation6 + $0x6e0] sm:$0xff]
    %v341 = vld [vmem:[#allocation6 + $0x6e8] sm:$0xff]
    %v342 = vld [vmem:[#allocation6 + $0x6f0] sm:$0xff]
    %v343 = vld [vmem:[#allocation6 + $0x6f8] sm:$0xff]
    %v344 = vld [vmem:[#allocation6 + $0x700] sm:$0xff]
    %v345 = vld [vmem:[#allocation6 + $0x708] sm:$0xff]
    %v346 = vld [vmem:[#allocation6 + $0x710] sm:$0xff]
    %v347 = vld [vmem:[#allocation6 + $0x718] sm:$0xff]
    %v348 = vld [vmem:[#allocation6 + $0x720] sm:$0xff]
    %v349 = vld [vmem:[#allocation6 + $0x728] sm:$0xff]
    %v350 = vld [vmem:[#allocation6 + $0x730] sm:$0xff]
    %v351 = vld [vmem:[#allocation6 + $0x738] sm:$0xff]
    %v352 = vld [vmem:[#allocation6 + $0x740] sm:$0xff]
    %v353 = vld [vmem:[#allocation6 + $0x748] sm:$0xff]
    %v354 = vld [vmem:[#allocation6 + $0x750] sm:$0xff]
    %v355 = vld [vmem:[#allocation6 + $0x758] sm:$0xff]
    %v356 = vld [vmem:[#allocation6 + $0x760] sm:$0xff]
    %v357 = vld [vmem:[#allocation6 + $0x768] sm:$0xff]
    %v358 = vld [vmem:[#allocation6 + $0x770] sm:$0xff]
    %v359 = vld [vmem:[#allocation6 + $0x778] sm:$0xff]
    %v360 = vld [vmem:[#allocation6 + $0x780] sm:$0xff]
    %v361 = vld [vmem:[#allocation6 + $0x788] sm:$0xff]
    %v362 = vld [vmem:[#allocation6 + $0x790] sm:$0xff]
    %v363 = vld [vmem:[#allocation6 + $0x798] sm:$0xff]
    %v364 = vld [vmem:[#allocation6 + $0x7a0] sm:$0xff]
    %v365 = vld [vmem:[#allocation6 + $0x7a8] sm:$0xff]
    %v366 = vld [vmem:[#allocation6 + $0x7b0] sm:$0xff]
    %v367 = vld [vmem:[#allocation6 + $0x7b8] sm:$0xff]
    %v368 = vld [vmem:[#allocation6 + $0x7c0] sm:$0xff]
    %v369 = vld [vmem:[#allocation6 + $0x7c8] sm:$0xff]
    %v370 = vld [vmem:[#allocation6 + $0x7d0] sm:$0xff]
    %v371 = vld [vmem:[#allocation6 + $0x7d8] sm:$0xff]
    %v372 = vld [vmem:[#allocation6 + $0x7e0] sm:$0xff]
    %v373 = vld [vmem:[#allocation6 + $0x7e8] sm:$0xff]
    %v374 = vld [vmem:[#allocation6 + $0x7f0] sm:$0xff]
    %v375 = vld [vmem:[#allocation6 + $0x7f8] sm:$0xff]
    %v376 = vld [vmem:[#allocation6 + $0x800] sm:$0xff]
    %v377 = vld [vmem:[#allocation6 + $0x808] sm:$0xff]
    %v378 = vld [vmem:[#allocation6 + $0x810] sm:$0xff]
    %v379 = vld [vmem:[#allocation6 + $0x818] sm:$0xff]
    %v380 = vld [vmem:[#allocation6 + $0x820] sm:$0xff]
    %v381 = vld [vmem:[#allocation6 + $0x828] sm:$0xff]
    %v382 = vld [vmem:[#allocation6 + $0x830] sm:$0xff]
    %v383 = vld [vmem:[#allocation6 + $0x838] sm:$0xff]
    %v384 = vld [vmem:[#allocation6 + $0x840] sm:$0xff]
    %v385 = vld [vmem:[#allocation6 + $0x848] sm:$0xff]
    %v386 = vld [vmem:[#allocation6 + $0x850] sm:$0xff]
    %v387 = vld [vmem:[#allocation6 + $0x858] sm:$0xff]
    %v388 = vld [vmem:[#allocation6 + $0x860] sm:$0xff]
    %v389 = vld [vmem:[#allocation6 + $0x868] sm:$0xff]
    %v390 = vld [vmem:[#allocation6 + $0x870] sm:$0xff]
    %v391 = vld [vmem:[#allocation6 + $0x878] sm:$0xff]
    %v392 = vld [vmem:[#allocation6 + $0x880] sm:$0xff]
    %v393 = vld [vmem:[#allocation6 + $0x888] sm:$0xff]
    %v394 = vld [vmem:[#allocation6 + $0x890] sm:$0xff]
    %v395 = vld [vmem:[#allocation6 + $0x898] sm:$0xff]
    %v396 = vld [vmem:[#allocation6 + $0x8a0] sm:$0xff]
    %v397 = vld [vmem:[#allocation6 + $0x8a8] sm:$0xff]
    %v398 = vld [vmem:[#allocation6 + $0x8b0] sm:$0xff]
    %v399 = vld [vmem:[#allocation6 + $0x8b8] sm:$0xff]
    %v400 = vld [vmem:[#allocation6 + $0x8c0] sm:$0xff]
    %v401 = vld [vmem:[#allocation6 + $0x8c8] sm:$0xff]
    %v402 = vld [vmem:[#allocation6 + $0x8d0] sm:$0xff]
    %v403 = vld [vmem:[#allocation6 + $0x8d8] sm:$0xff]
    %v404 = vld [vmem:[#allocation6 + $0x8e0] sm:$0xff]
    %v405 = vld [vmem:[#allocation6 + $0x8e8] sm:$0xff]
    %v406 = vld [vmem:[#allocation6 + $0x8f0] sm:$0xff]
    %v407 = vld [vmem:[#allocation6 + $0x8f8] sm:$0xff]
    %v408 = vld [vmem:[#allocation6 + $0x900] sm:$0xff]
    %v409 = vld [vmem:[#allocation6 + $0x908] sm:$0xff]
    %v410 = vld [vmem:[#allocation6 + $0x910] sm:$0xff]
    %v411 = vld [vmem:[#allocation6 + $0x918] sm:$0xff]
    %v412 = vld [vmem:[#allocation6 + $0x920] sm:$0xff]
    %v413 = vld [vmem:[#allocation6 + $0x928] sm:$0xff]
    %v414 = vld [vmem:[#allocation6 + $0x930] sm:$0xff]
    %v415 = vld [vmem:[#allocation6 + $0x938] sm:$0xff]
    %v416 = vld [vmem:[#allocation6 + $0x940] sm:$0xff]
    %v417 = vld [vmem:[#allocation6 + $0x948] sm:$0xff]
    %v418 = vld [vmem:[#allocation6 + $0x950] sm:$0xff]
    %v419 = vld [vmem:[#allocation6 + $0x958] sm:$0xff]
    %v420 = vld [vmem:[#allocation6 + $0x960] sm:$0xff]
    %v421 = vld [vmem:[#allocation6 + $0x968] sm:$0xff]
    %v422 = vld [vmem:[#allocation6 + $0x970] sm:$0xff]
    %v423 = vld [vmem:[#allocation6 + $0x978] sm:$0xff]
    %v424 = vld [vmem:[#allocation6 + $0x980] sm:$0xff]
    %v425 = vld [vmem:[#allocation6 + $0x988] sm:$0xff]
    %v426 = vld [vmem:[#allocation6 + $0x990] sm:$0xff]
    %v427 = vld [vmem:[#allocation6 + $0x998] sm:$0xff]
    %v428 = vld [vmem:[#allocation6 + $0x9a0] sm:$0xff]
    %v429 = vld [vmem:[#allocation6 + $0x9a8] sm:$0xff]
    %v430 = vld [vmem:[#allocation6 + $0x9b0] sm:$0xff]
    %v431 = vld [vmem:[#allocation6 + $0x9b8] sm:$0xff]
    %v432 = vld [vmem:[#allocation6 + $0x9c0] sm:$0xff]
    %v433 = vld [vmem:[#allocation6 + $0x9c8] sm:$0xff]
    %v434 = vld [vmem:[#allocation6 + $0x9d0] sm:$0xff]
    %v435 = vld [vmem:[#allocation6 + $0x9d8] sm:$0xff]
    %v436 = vld [vmem:[#allocation6 + $0x9e0] sm:$0xff]
    %v437 = vld [vmem:[#allocation6 + $0x9e8] sm:$0xff]
    %v438 = vld [vmem:[#allocation6 + $0x9f0] sm:$0xff]
    %v439 = vld [vmem:[#allocation6 + $0x9f8] sm:$0xff]
    %v440 = vld [vmem:[#allocation6 + $0xa00] sm:$0xff]
    %v441 = vld [vmem:[#allocation6 + $0xa08] sm:$0xff]
    %v442 = vld [vmem:[#allocation6 + $0xa10] sm:$0xff]
    %v443 = vld [vmem:[#allocation6 + $0xa18] sm:$0xff]
    %v444 = vld [vmem:[#allocation6 + $0xa20] sm:$0xff]
    %v445 = vld [vmem:[#allocation6 + $0xa28] sm:$0xff]
    %v446 = vld [vmem:[#allocation6 + $0xa30] sm:$0xff]
    %v447 = vld [vmem:[#allocation6 + $0xa38] sm:$0xff]
    %v448 = vld [vmem:[#allocation6 + $0xa40] sm:$0xff]
    %v449 = vld [vmem:[#allocation6 + $0xa48] sm:$0xff]
    %v450 = vld [vmem:[#allocation6 + $0xa50] sm:$0xff]
    %v451 = vld [vmem:[#allocation6 + $0xa58] sm:$0xff]
    %v452 = vld [vmem:[#allocation6 + $0xa60] sm:$0xff]
    %v453 = vld [vmem:[#allocation6 + $0xa68] sm:$0xff]
    %v454 = vld [vmem:[#allocation6 + $0xa70] sm:$0xff]
    %v455 = vld [vmem:[#allocation6 + $0xa78] sm:$0xff]
    %v456 = vld [vmem:[#allocation6 + $0xa80] sm:$0xff]
    %v457 = vld [vmem:[#allocation6 + $0xa88] sm:$0xff]
    %v458 = vld [vmem:[#allocation6 + $0xa90] sm:$0xff]
    %v459 = vld [vmem:[#allocation6 + $0xa98] sm:$0xff]
    %v460 = vld [vmem:[#allocation6 + $0xaa0] sm:$0xff]
    %v461 = vld [vmem:[#allocation6 + $0xaa8] sm:$0xff]
    %v462 = vld [vmem:[#allocation6 + $0xab0] sm:$0xff]
    %v463 = vld [vmem:[#allocation6 + $0xab8] sm:$0xff]
    %v464 = vld [vmem:[#allocation6 + $0xac0] sm:$0xff]
    %v465 = vld [vmem:[#allocation6 + $0xac8] sm:$0xff]
    %v466 = vld [vmem:[#allocation6 + $0xad0] sm:$0xff]
    %v467 = vld [vmem:[#allocation6 + $0xad8] sm:$0xff]
    %v468 = vld [vmem:[#allocation6 + $0xae0] sm:$0xff]
    %v469 = vld [vmem:[#allocation6 + $0xae8] sm:$0xff]
    %v470 = vld [vmem:[#allocation6 + $0xaf0] sm:$0xff]
    %v471 = vld [vmem:[#allocation6 + $0xaf8] sm:$0xff]
    %v472 = vld [vmem:[#allocation6 + $0xb00] sm:$0xff]
    %v473 = vld [vmem:[#allocation6 + $0xb08] sm:$0xff]
    %v474 = vld [vmem:[#allocation6 + $0xb10] sm:$0xff]
    %v475 = vld [vmem:[#allocation6 + $0xb18] sm:$0xff]
    %v476 = vld [vmem:[#allocation6 + $0xb20] sm:$0xff]
    %v477 = vld [vmem:[#allocation6 + $0xb28] sm:$0xff]
    %v478 = vld [vmem:[#allocation6 + $0xb30] sm:$0xff]
    %v479 = vld [vmem:[#allocation6 + $0xb38] sm:$0xff]
    %v480 = vld [vmem:[#allocation6 + $0xb40] sm:$0xff]
    %v481 = vld [vmem:[#allocation6 + $0xb48] sm:$0xff]
    %v482 = vld [vmem:[#allocation6 + $0xb50] sm:$0xff]
    %v483 = vld [vmem:[#allocation6 + $0xb58] sm:$0xff]
    %v484 = vld [vmem:[#allocation6 + $0xb60] sm:$0xff]
    %v485 = vld [vmem:[#allocation6 + $0xb68] sm:$0xff]
    %v486 = vld [vmem:[#allocation6 + $0xb70] sm:$0xff]
    %v487 = vld [vmem:[#allocation6 + $0xb78] sm:$0xff]
    %v488 = vld [vmem:[#allocation6 + $0xb80] sm:$0xff]
    %v489 = vld [vmem:[#allocation6 + $0xb88] sm:$0xff]
    %v490 = vld [vmem:[#allocation6 + $0xb90] sm:$0xff]
    %v491 = vld [vmem:[#allocation6 + $0xb98] sm:$0xff]
    %v492 = vld [vmem:[#allocation6 + $0xba0] sm:$0xff]
    %v493 = vld [vmem:[#allocation6 + $0xba8] sm:$0xff]
    %v494 = vld [vmem:[#allocation6 + $0xbb0] sm:$0xff]
    %v495 = vld [vmem:[#allocation6 + $0xbb8] sm:$0xff]
    %v496 = vld [vmem:[#allocation6 + $0xbc0] sm:$0xff]
    %v497 = vld [vmem:[#allocation6 + $0xbc8] sm:$0xff]
    %v498 = vld [vmem:[#allocation6 + $0xbd0] sm:$0xff]
    %v499 = vld [vmem:[#allocation6 + $0xbd8] sm:$0xff]
    %v500 = vld [vmem:[#allocation6 + $0xbe0] sm:$0xff]
    %v501 = vld [vmem:[#allocation6 + $0xbe8] sm:$0xff]
    %v502 = vld [vmem:[#allocation6 + $0xbf0] sm:$0xff]
    %v503 = vld [vmem:[#allocation6 + $0xbf8] sm:$0xff]
    %v888 = vunpack.c.l.b16 %v120
    %v889 = vunpack.c.h.b16 %v120
    %v890 = vunpack.c.l.b16 %v121
    %v891 = vunpack.c.h.b16 %v121
    %v892 = vunpack.c.l.b16 %v122
    %v893 = vunpack.c.h.b16 %v122
    %v894 = vunpack.c.l.b16 %v123
    %v895 = vunpack.c.h.b16 %v123
    %v896 = vunpack.c.l.b16 %v124
    %v897 = vunpack.c.h.b16 %v124
    %v898 = vunpack.c.l.b16 %v125
    %v899 = vunpack.c.h.b16 %v125
    %v900 = vunpack.c.l.b16 %v126
    %v901 = vunpack.c.h.b16 %v126
    %v902 = vunpack.c.l.b16 %v127
    %v903 = vunpack.c.h.b16 %v127
    %v904 = vunpack.c.l.b16 %v128
    %v905 = vunpack.c.h.b16 %v128
    %v906 = vunpack.c.l.b16 %v129
    %v907 = vunpack.c.h.b16 %v129
    %v908 = vunpack.c.l.b16 %v130
    %v909 = vunpack.c.h.b16 %v130
    %v910 = vunpack.c.l.b16 %v131
    %v911 = vunpack.c.h.b16 %v131
    %v912 = vunpack.c.l.b16 %v132
    %v913 = vunpack.c.h.b16 %v132
    %v914 = vunpack.c.l.b16 %v133
    %v915 = vunpack.c.h.b16 %v133
    %v916 = vunpack.c.l.b16 %v134
    %v917 = vunpack.c.h.b16 %v134
    %v918 = vunpack.c.l.b16 %v135
    %v919 = vunpack.c.h.b16 %v135
    %v920 = vunpack.c.l.b16 %v136
    %v921 = vunpack.c.h.b16 %v136
    %v922 = vunpack.c.l.b16 %v137
    %v923 = vunpack.c.h.b16 %v137
    %v924 = vunpack.c.l.b16 %v138
    %v925 = vunpack.c.h.b16 %v138
    %v926 = vunpack.c.l.b16 %v139
    %v927 = vunpack.c.h.b16 %v139
    %v928 = vunpack.c.l.b16 %v140
    %v929 = vunpack.c.h.b16 %v140
    %v930 = vunpack.c.l.b16 %v141
    %v931 = vunpack.c.h.b16 %v141
    %v932 = vunpack.c.l.b16 %v142
    %v933 = vunpack.c.h.b16 %v142
    %v934 = vunpack.c.l.b16 %v143
    %v935 = vunpack.c.h.b16 %v143
    %v936 = vunpack.c.l.b16 %v144
    %v937 = vunpack.c.h.b16 %v144
    %v938 = vunpack.c.l.b16 %v145
    %v939 = vunpack.c.h.b16 %v145
    %v940 = vunpack.c.l.b16 %v146
    %v941 = vunpack.c.h.b16 %v146
    %v942 = vunpack.c.l.b16 %v147
    %v943 = vunpack.c.h.b16 %v147
    %v944 = vunpack.c.l.b16 %v148
    %v945 = vunpack.c.h.b16 %v148
    %v946 = vunpack.c.l.b16 %v149
    %v947 = vunpack.c.h.b16 %v149
    %v948 = vunpack.c.l.b16 %v150
    %v949 = vunpack.c.h.b16 %v150
    %v950 = vunpack.c.l.b16 %v151
    %v951 = vunpack.c.h.b16 %v151
    %v952 = vunpack.c.l.b16 %v152
    %v953 = vunpack.c.h.b16 %v152
    %v954 = vunpack.c.l.b16 %v153
    %v955 = vunpack.c.h.b16 %v153
    %v956 = vunpack.c.l.b16 %v154
    %v957 = vunpack.c.h.b16 %v154
    %v958 = vunpack.c.l.b16 %v155
    %v959 = vunpack.c.h.b16 %v155
    %v960 = vunpack.c.l.b16 %v156
    %v961 = vunpack.c.h.b16 %v156
    %v962 = vunpack.c.l.b16 %v157
    %v963 = vunpack.c.h.b16 %v157
    %v964 = vunpack.c.l.b16 %v158
    %v965 = vunpack.c.h.b16 %v158
    %v966 = vunpack.c.l.b16 %v159
    %v967 = vunpack.c.h.b16 %v159
    %v968 = vunpack.c.l.b16 %v160
    %v969 = vunpack.c.h.b16 %v160
    %v970 = vunpack.c.l.b16 %v161
    %v971 = vunpack.c.h.b16 %v161
    %v972 = vunpack.c.l.b16 %v162
    %v973 = vunpack.c.h.b16 %v162
    %v974 = vunpack.c.l.b16 %v163
    %v975 = vunpack.c.h.b16 %v163
    %v976 = vunpack.c.l.b16 %v164
    %v977 = vunpack.c.h.b16 %v164
    %v978 = vunpack.c.l.b16 %v165
    %v979 = vunpack.c.h.b16 %v165
    %v980 = vunpack.c.l.b16 %v166
    %v981 = vunpack.c.h.b16 %v166
    %v982 = vunpack.c.l.b16 %v167
    %v983 = vunpack.c.h.b16 %v167
    %v984 = vunpack.c.l.b16 %v168
    %v985 = vunpack.c.h.b16 %v168
    %v986 = vunpack.c.l.b16 %v169
    %v987 = vunpack.c.h.b16 %v169
    %v988 = vunpack.c.l.b16 %v170
    %v989 = vunpack.c.h.b16 %v170
    %v990 = vunpack.c.l.b16 %v171
    %v991 = vunpack.c.h.b16 %v171
    %v992 = vunpack.c.l.b16 %v172
    %v993 = vunpack.c.h.b16 %v172
    %v994 = vunpack.c.l.b16 %v173
    %v995 = vunpack.c.h.b16 %v173
    %v996 = vunpack.c.l.b16 %v174
    %v997 = vunpack.c.h.b16 %v174
    %v998 = vunpack.c.l.b16 %v175
    %v999 = vunpack.c.h.b16 %v175
    %v1000 = vunpack.c.l.b16 %v176
    %v1001 = vunpack.c.h.b16 %v176
    %v1002 = vunpack.c.l.b16 %v177
    %v1003 = vunpack.c.h.b16 %v177
    %v1004 = vunpack.c.l.b16 %v178
    %v1005 = vunpack.c.h.b16 %v178
    %v1006 = vunpack.c.l.b16 %v179
    %v1007 = vunpack.c.h.b16 %v179
    %v1008 = vunpack.c.l.b16 %v180
    %v1009 = vunpack.c.h.b16 %v180
    %v1010 = vunpack.c.l.b16 %v181
    %v1011 = vunpack.c.h.b16 %v181
    %v1012 = vunpack.c.l.b16 %v182
    %v1013 = vunpack.c.h.b16 %v182
    %v1014 = vunpack.c.l.b16 %v183
    %v1015 = vunpack.c.h.b16 %v183
    %v1016 = vunpack.c.l.b16 %v184
    %v1017 = vunpack.c.h.b16 %v184
    %v1018 = vunpack.c.l.b16 %v185
    %v1019 = vunpack.c.h.b16 %v185
    %v1020 = vunpack.c.l.b16 %v186
    %v1021 = vunpack.c.h.b16 %v186
    %v1022 = vunpack.c.l.b16 %v187
    %v1023 = vunpack.c.h.b16 %v187
    %v1024 = vunpack.c.l.b16 %v188
    %v1025 = vunpack.c.h.b16 %v188
    %v1026 = vunpack.c.l.b16 %v189
    %v1027 = vunpack.c.h.b16 %v189
    %v1028 = vunpack.c.l.b16 %v190
    %v1029 = vunpack.c.h.b16 %v190
    %v1030 = vunpack.c.l.b16 %v191
    %v1031 = vunpack.c.h.b16 %v191
    %v1032 = vunpack.c.l.b16 %v192
    %v1033 = vunpack.c.h.b16 %v192
    %v1034 = vunpack.c.l.b16 %v193
    %v1035 = vunpack.c.h.b16 %v193
    %v1036 = vunpack.c.l.b16 %v194
    %v1037 = vunpack.c.h.b16 %v194
    %v1038 = vunpack.c.l.b16 %v195
    %v1039 = vunpack.c.h.b16 %v195
    %v1040 = vunpack.c.l.b16 %v196
    %v1041 = vunpack.c.h.b16 %v196
    %v1042 = vunpack.c.l.b16 %v197
    %v1043 = vunpack.c.h.b16 %v197
    %v1044 = vunpack.c.l.b16 %v198
    %v1045 = vunpack.c.h.b16 %v198
    %v1046 = vunpack.c.l.b16 %v199
    %v1047 = vunpack.c.h.b16 %v199
    %v1048 = vunpack.c.l.b16 %v200
    %v1049 = vunpack.c.h.b16 %v200
    %v1050 = vunpack.c.l.b16 %v201
    %v1051 = vunpack.c.h.b16 %v201
    %v1052 = vunpack.c.l.b16 %v202
    %v1053 = vunpack.c.h.b16 %v202
    %v1054 = vunpack.c.l.b16 %v203
    %v1055 = vunpack.c.h.b16 %v203
    %v1056 = vunpack.c.l.b16 %v204
    %v1057 = vunpack.c.h.b16 %v204
    %v1058 = vunpack.c.l.b16 %v205
    %v1059 = vunpack.c.h.b16 %v205
    %v1060 = vunpack.c.l.b16 %v206
    %v1061 = vunpack.c.h.b16 %v206
    %v1062 = vunpack.c.l.b16 %v207
    %v1063 = vunpack.c.h.b16 %v207
    %v1064 = vunpack.c.l.b16 %v208
    %v1065 = vunpack.c.h.b16 %v208
    %v1066 = vunpack.c.l.b16 %v209
    %v1067 = vunpack.c.h.b16 %v209
    %v1068 = vunpack.c.l.b16 %v210
    %v1069 = vunpack.c.h.b16 %v210
    %v1070 = vunpack.c.l.b16 %v211
    %v1071 = vunpack.c.h.b16 %v211
    %v1072 = vunpack.c.l.b16 %v212
    %v1073 = vunpack.c.h.b16 %v212
    %v1074 = vunpack.c.l.b16 %v213
    %v1075 = vunpack.c.h.b16 %v213
    %v1076 = vunpack.c.l.b16 %v214
    %v1077 = vunpack.c.h.b16 %v214
    %v1078 = vunpack.c.l.b16 %v215
    %v1079 = vunpack.c.h.b16 %v215
    %v1080 = vunpack.c.l.b16 %v216
    %v1081 = vunpack.c.h.b16 %v216
    %v1082 = vunpack.c.l.b16 %v217
    %v1083 = vunpack.c.h.b16 %v217
    %v1084 = vunpack.c.l.b16 %v218
    %v1085 = vunpack.c.h.b16 %v218
    %v1086 = vunpack.c.l.b16 %v219
    %v1087 = vunpack.c.h.b16 %v219
    %v1088 = vunpack.c.l.b16 %v220
    %v1089 = vunpack.c.h.b16 %v220
    %v1090 = vunpack.c.l.b16 %v221
    %v1091 = vunpack.c.h.b16 %v221
    %v1092 = vunpack.c.l.b16 %v222
    %v1093 = vunpack.c.h.b16 %v222
    %v1094 = vunpack.c.l.b16 %v223
    %v1095 = vunpack.c.h.b16 %v223
    %v1096 = vunpack.c.l.b16 %v224
    %v1097 = vunpack.c.h.b16 %v224
    %v1098 = vunpack.c.l.b16 %v225
    %v1099 = vunpack.c.h.b16 %v225
    %v1100 = vunpack.c.l.b16 %v226
    %v1101 = vunpack.c.h.b16 %v226
    %v1102 = vunpack.c.l.b16 %v227
    %v1103 = vunpack.c.h.b16 %v227
    %v1104 = vunpack.c.l.b16 %v228
    %v1105 = vunpack.c.h.b16 %v228
    %v1106 = vunpack.c.l.b16 %v229
    %v1107 = vunpack.c.h.b16 %v229
    %v1108 = vunpack.c.l.b16 %v230
    %v1109 = vunpack.c.h.b16 %v230
    %v1110 = vunpack.c.l.b16 %v231
    %v1111 = vunpack.c.h.b16 %v231
    %v1112 = vunpack.c.l.b16 %v232
    %v1113 = vunpack.c.h.b16 %v232
    %v1114 = vunpack.c.l.b16 %v233
    %v1115 = vunpack.c.h.b16 %v233
    %v1116 = vunpack.c.l.b16 %v234
    %v1117 = vunpack.c.h.b16 %v234
    %v1118 = vunpack.c.l.b16 %v235
    %v1119 = vunpack.c.h.b16 %v235
    %v1120 = vunpack.c.l.b16 %v236
    %v1121 = vunpack.c.h.b16 %v236
    %v1122 = vunpack.c.l.b16 %v237
    %v1123 = vunpack.c.h.b16 %v237
    %v1124 = vunpack.c.l.b16 %v238
    %v1125 = vunpack.c.h.b16 %v238
    %v1126 = vunpack.c.l.b16 %v239
    %v1127 = vunpack.c.h.b16 %v239
    %v1128 = vunpack.c.l.b16 %v240
    %v1129 = vunpack.c.h.b16 %v240
    %v1130 = vunpack.c.l.b16 %v241
    %v1131 = vunpack.c.h.b16 %v241
    %v1132 = vunpack.c.l.b16 %v242
    %v1133 = vunpack.c.h.b16 %v242
    %v1134 = vunpack.c.l.b16 %v243
    %v1135 = vunpack.c.h.b16 %v243
    %v1136 = vunpack.c.l.b16 %v244
    %v1137 = vunpack.c.h.b16 %v244
    %v1138 = vunpack.c.l.b16 %v245
    %v1139 = vunpack.c.h.b16 %v245
    %v1140 = vunpack.c.l.b16 %v246
    %v1141 = vunpack.c.h.b16 %v246
    %v1142 = vunpack.c.l.b16 %v247
    %v1143 = vunpack.c.h.b16 %v247
    %v1144 = vunpack.c.l.b16 %v248
    %v1145 = vunpack.c.h.b16 %v248
    %v1146 = vunpack.c.l.b16 %v249
    %v1147 = vunpack.c.h.b16 %v249
    %v1148 = vunpack.c.l.b16 %v250
    %v1149 = vunpack.c.h.b16 %v250
    %v1150 = vunpack.c.l.b16 %v251
    %v1151 = vunpack.c.h.b16 %v251
    %v1152 = vunpack.c.l.b16 %v252
    %v1153 = vunpack.c.h.b16 %v252
    %v1154 = vunpack.c.l.b16 %v253
    %v1155 = vunpack.c.h.b16 %v253
    %v1156 = vunpack.c.l.b16 %v254
    %v1157 = vunpack.c.h.b16 %v254
    %v1158 = vunpack.c.l.b16 %v255
    %v1159 = vunpack.c.h.b16 %v255
    %v1160 = vunpack.c.l.b16 %v256
    %v1161 = vunpack.c.h.b16 %v256
    %v1162 = vunpack.c.l.b16 %v257
    %v1163 = vunpack.c.h.b16 %v257
    %v1164 = vunpack.c.l.b16 %v258
    %v1165 = vunpack.c.h.b16 %v258
    %v1166 = vunpack.c.l.b16 %v259
    %v1167 = vunpack.c.h.b16 %v259
    %v1168 = vunpack.c.l.b16 %v260
    %v1169 = vunpack.c.h.b16 %v260
    %v1170 = vunpack.c.l.b16 %v261
    %v1171 = vunpack.c.h.b16 %v261
    %v1172 = vunpack.c.l.b16 %v262
    %v1173 = vunpack.c.h.b16 %v262
    %v1174 = vunpack.c.l.b16 %v263
    %v1175 = vunpack.c.h.b16 %v263
    %v1176 = vunpack.c.l.b16 %v264
    %v1177 = vunpack.c.h.b16 %v264
    %v1178 = vunpack.c.l.b16 %v265
    %v1179 = vunpack.c.h.b16 %v265
    %v1180 = vunpack.c.l.b16 %v266
    %v1181 = vunpack.c.h.b16 %v266
    %v1182 = vunpack.c.l.b16 %v267
    %v1183 = vunpack.c.h.b16 %v267
    %v1184 = vunpack.c.l.b16 %v268
    %v1185 = vunpack.c.h.b16 %v268
    %v1186 = vunpack.c.l.b16 %v269
    %v1187 = vunpack.c.h.b16 %v269
    %v1188 = vunpack.c.l.b16 %v270
    %v1189 = vunpack.c.h.b16 %v270
    %v1190 = vunpack.c.l.b16 %v271
    %v1191 = vunpack.c.h.b16 %v271
    %v1192 = vunpack.c.l.b16 %v272
    %v1193 = vunpack.c.h.b16 %v272
    %v1194 = vunpack.c.l.b16 %v273
    %v1195 = vunpack.c.h.b16 %v273
    %v1196 = vunpack.c.l.b16 %v274
    %v1197 = vunpack.c.h.b16 %v274
    %v1198 = vunpack.c.l.b16 %v275
    %v1199 = vunpack.c.h.b16 %v275
    %v1200 = vunpack.c.l.b16 %v276
    %v1201 = vunpack.c.h.b16 %v276
    %v1202 = vunpack.c.l.b16 %v277
    %v1203 = vunpack.c.h.b16 %v277
    %v1204 = vunpack.c.l.b16 %v278
    %v1205 = vunpack.c.h.b16 %v278
    %v1206 = vunpack.c.l.b16 %v279
    %v1207 = vunpack.c.h.b16 %v279
    %v1208 = vunpack.c.l.b16 %v280
    %v1209 = vunpack.c.h.b16 %v280
    %v1210 = vunpack.c.l.b16 %v281
    %v1211 = vunpack.c.h.b16 %v281
    %v1212 = vunpack.c.l.b16 %v282
    %v1213 = vunpack.c.h.b16 %v282
    %v1214 = vunpack.c.l.b16 %v283
    %v1215 = vunpack.c.h.b16 %v283
    %v1216 = vunpack.c.l.b16 %v284
    %v1217 = vunpack.c.h.b16 %v284
    %v1218 = vunpack.c.l.b16 %v285
    %v1219 = vunpack.c.h.b16 %v285
    %v1220 = vunpack.c.l.b16 %v286
    %v1221 = vunpack.c.h.b16 %v286
    %v1222 = vunpack.c.l.b16 %v287
    %v1223 = vunpack.c.h.b16 %v287
    %v1224 = vunpack.c.l.b16 %v288
    %v1225 = vunpack.c.h.b16 %v288
    %v1226 = vunpack.c.l.b16 %v289
    %v1227 = vunpack.c.h.b16 %v289
    %v1228 = vunpack.c.l.b16 %v290
    %v1229 = vunpack.c.h.b16 %v290
    %v1230 = vunpack.c.l.b16 %v291
    %v1231 = vunpack.c.h.b16 %v291
    %v1232 = vunpack.c.l.b16 %v292
    %v1233 = vunpack.c.h.b16 %v292
    %v1234 = vunpack.c.l.b16 %v293
    %v1235 = vunpack.c.h.b16 %v293
    %v1236 = vunpack.c.l.b16 %v294
    %v1237 = vunpack.c.h.b16 %v294
    %v1238 = vunpack.c.l.b16 %v295
    %v1239 = vunpack.c.h.b16 %v295
    %v1240 = vunpack.c.l.b16 %v296
    %v1241 = vunpack.c.h.b16 %v296
    %v1242 = vunpack.c.l.b16 %v297
    %v1243 = vunpack.c.h.b16 %v297
    %v1244 = vunpack.c.l.b16 %v298
    %v1245 = vunpack.c.h.b16 %v298
    %v1246 = vunpack.c.l.b16 %v299
    %v1247 = vunpack.c.h.b16 %v299
    %v1248 = vunpack.c.l.b16 %v300
    %v1249 = vunpack.c.h.b16 %v300
    %v1250 = vunpack.c.l.b16 %v301
    %v1251 = vunpack.c.h.b16 %v301
    %v1252 = vunpack.c.l.b16 %v302
    %v1253 = vunpack.c.h.b16 %v302
    %v1254 = vunpack.c.l.b16 %v303
    %v1255 = vunpack.c.h.b16 %v303
    %v1256 = vunpack.c.l.b16 %v304
    %v1257 = vunpack.c.h.b16 %v304
    %v1258 = vunpack.c.l.b16 %v305
    %v1259 = vunpack.c.h.b16 %v305
    %v1260 = vunpack.c.l.b16 %v306
    %v1261 = vunpack.c.h.b16 %v306
    %v1262 = vunpack.c.l.b16 %v307
    %v1263 = vunpack.c.h.b16 %v307
    %v1264 = vunpack.c.l.b16 %v308
    %v1265 = vunpack.c.h.b16 %v308
    %v1266 = vunpack.c.l.b16 %v309
    %v1267 = vunpack.c.h.b16 %v309
    %v1268 = vunpack.c.l.b16 %v310
    %v1269 = vunpack.c.h.b16 %v310
    %v1270 = vunpack.c.l.b16 %v311
    %v1271 = vunpack.c.h.b16 %v311
    %v1272 = vunpack.c.l.b16 %v312
    %v1273 = vunpack.c.h.b16 %v312
    %v1274 = vunpack.c.l.b16 %v313
    %v1275 = vunpack.c.h.b16 %v313
    %v1276 = vunpack.c.l.b16 %v314
    %v1277 = vunpack.c.h.b16 %v314
    %v1278 = vunpack.c.l.b16 %v315
    %v1279 = vunpack.c.h.b16 %v315
    %v1280 = vunpack.c.l.b16 %v316
    %v1281 = vunpack.c.h.b16 %v316
    %v1282 = vunpack.c.l.b16 %v317
    %v1283 = vunpack.c.h.b16 %v317
    %v1284 = vunpack.c.l.b16 %v318
    %v1285 = vunpack.c.h.b16 %v318
    %v1286 = vunpack.c.l.b16 %v319
    %v1287 = vunpack.c.h.b16 %v319
    %v1288 = vunpack.c.l.b16 %v320
    %v1289 = vunpack.c.h.b16 %v320
    %v1290 = vunpack.c.l.b16 %v321
    %v1291 = vunpack.c.h.b16 %v321
    %v1292 = vunpack.c.l.b16 %v322
    %v1293 = vunpack.c.h.b16 %v322
    %v1294 = vunpack.c.l.b16 %v323
    %v1295 = vunpack.c.h.b16 %v323
    %v1296 = vunpack.c.l.b16 %v324
    %v1297 = vunpack.c.h.b16 %v324
    %v1298 = vunpack.c.l.b16 %v325
    %v1299 = vunpack.c.h.b16 %v325
    %v1300 = vunpack.c.l.b16 %v326
    %v1301 = vunpack.c.h.b16 %v326
    %v1302 = vunpack.c.l.b16 %v327
    %v1303 = vunpack.c.h.b16 %v327
    %v1304 = vunpack.c.l.b16 %v328
    %v1305 = vunpack.c.h.b16 %v328
    %v1306 = vunpack.c.l.b16 %v329
    %v1307 = vunpack.c.h.b16 %v329
    %v1308 = vunpack.c.l.b16 %v330
    %v1309 = vunpack.c.h.b16 %v330
    %v1310 = vunpack.c.l.b16 %v331
    %v1311 = vunpack.c.h.b16 %v331
    %v1312 = vunpack.c.l.b16 %v332
    %v1313 = vunpack.c.h.b16 %v332
    %v1314 = vunpack.c.l.b16 %v333
    %v1315 = vunpack.c.h.b16 %v333
    %v1316 = vunpack.c.l.b16 %v334
    %v1317 = vunpack.c.h.b16 %v334
    %v1318 = vunpack.c.l.b16 %v335
    %v1319 = vunpack.c.h.b16 %v335
    %v1320 = vunpack.c.l.b16 %v336
    %v1321 = vunpack.c.h.b16 %v336
    %v1322 = vunpack.c.l.b16 %v337
    %v1323 = vunpack.c.h.b16 %v337
    %v1324 = vunpack.c.l.b16 %v338
    %v1325 = vunpack.c.h.b16 %v338
    %v1326 = vunpack.c.l.b16 %v339
    %v1327 = vunpack.c.h.b16 %v339
    %v1328 = vunpack.c.l.b16 %v340
    %v1329 = vunpack.c.h.b16 %v340
    %v1330 = vunpack.c.l.b16 %v341
    %v1331 = vunpack.c.h.b16 %v341
    %v1332 = vunpack.c.l.b16 %v342
    %v1333 = vunpack.c.h.b16 %v342
    %v1334 = vunpack.c.l.b16 %v343
    %v1335 = vunpack.c.h.b16 %v343
    %v1336 = vunpack.c.l.b16 %v344
    %v1337 = vunpack.c.h.b16 %v344
    %v1338 = vunpack.c.l.b16 %v345
    %v1339 = vunpack.c.h.b16 %v345
    %v1340 = vunpack.c.l.b16 %v346
    %v1341 = vunpack.c.h.b16 %v346
    %v1342 = vunpack.c.l.b16 %v347
    %v1343 = vunpack.c.h.b16 %v347
    %v1344 = vunpack.c.l.b16 %v348
    %v1345 = vunpack.c.h.b16 %v348
    %v1346 = vunpack.c.l.b16 %v349
    %v1347 = vunpack.c.h.b16 %v349
    %v1348 = vunpack.c.l.b16 %v350
    %v1349 = vunpack.c.h.b16 %v350
    %v1350 = vunpack.c.l.b16 %v351
    %v1351 = vunpack.c.h.b16 %v351
    %v1352 = vunpack.c.l.b16 %v352
    %v1353 = vunpack.c.h.b16 %v352
    %v1354 = vunpack.c.l.b16 %v353
    %v1355 = vunpack.c.h.b16 %v353
    %v1356 = vunpack.c.l.b16 %v354
    %v1357 = vunpack.c.h.b16 %v354
    %v1358 = vunpack.c.l.b16 %v355
    %v1359 = vunpack.c.h.b16 %v355
    %v1360 = vunpack.c.l.b16 %v356
    %v1361 = vunpack.c.h.b16 %v356
    %v1362 = vunpack.c.l.b16 %v357
    %v1363 = vunpack.c.h.b16 %v357
    %v1364 = vunpack.c.l.b16 %v358
    %v1365 = vunpack.c.h.b16 %v358
    %v1366 = vunpack.c.l.b16 %v359
    %v1367 = vunpack.c.h.b16 %v359
    %v1368 = vunpack.c.l.b16 %v360
    %v1369 = vunpack.c.h.b16 %v360
    %v1370 = vunpack.c.l.b16 %v361
    %v1371 = vunpack.c.h.b16 %v361
    %v1372 = vunpack.c.l.b16 %v362
    %v1373 = vunpack.c.h.b16 %v362
    %v1374 = vunpack.c.l.b16 %v363
    %v1375 = vunpack.c.h.b16 %v363
    %v1376 = vunpack.c.l.b16 %v364
    %v1377 = vunpack.c.h.b16 %v364
    %v1378 = vunpack.c.l.b16 %v365
    %v1379 = vunpack.c.h.b16 %v365
    %v1380 = vunpack.c.l.b16 %v366
    %v1381 = vunpack.c.h.b16 %v366
    %v1382 = vunpack.c.l.b16 %v367
    %v1383 = vunpack.c.h.b16 %v367
    %v1384 = vunpack.c.l.b16 %v368
    %v1385 = vunpack.c.h.b16 %v368
    %v1386 = vunpack.c.l.b16 %v369
    %v1387 = vunpack.c.h.b16 %v369
    %v1388 = vunpack.c.l.b16 %v370
    %v1389 = vunpack.c.h.b16 %v370
    %v1390 = vunpack.c.l.b16 %v371
    %v1391 = vunpack.c.h.b16 %v371
    %v1392 = vunpack.c.l.b16 %v372
    %v1393 = vunpack.c.h.b16 %v372
    %v1394 = vunpack.c.l.b16 %v373
    %v1395 = vunpack.c.h.b16 %v373
    %v1396 = vunpack.c.l.b16 %v374
    %v1397 = vunpack.c.h.b16 %v374
    %v1398 = vunpack.c.l.b16 %v375
    %v1399 = vunpack.c.h.b16 %v375
    %v1400 = vunpack.c.l.b16 %v376
    %v1401 = vunpack.c.h.b16 %v376
    %v1402 = vunpack.c.l.b16 %v377
    %v1403 = vunpack.c.h.b16 %v377
    %v1404 = vunpack.c.l.b16 %v378
    %v1405 = vunpack.c.h.b16 %v378
    %v1406 = vunpack.c.l.b16 %v379
    %v1407 = vunpack.c.h.b16 %v379
    %v1408 = vunpack.c.l.b16 %v380
    %v1409 = vunpack.c.h.b16 %v380
    %v1410 = vunpack.c.l.b16 %v381
    %v1411 = vunpack.c.h.b16 %v381
    %v1412 = vunpack.c.l.b16 %v382
    %v1413 = vunpack.c.h.b16 %v382
    %v1414 = vunpack.c.l.b16 %v383
    %v1415 = vunpack.c.h.b16 %v383
    %v1416 = vunpack.c.l.b16 %v384
    %v1417 = vunpack.c.h.b16 %v384
    %v1418 = vunpack.c.l.b16 %v385
    %v1419 = vunpack.c.h.b16 %v385
    %v1420 = vunpack.c.l.b16 %v386
    %v1421 = vunpack.c.h.b16 %v386
    %v1422 = vunpack.c.l.b16 %v387
    %v1423 = vunpack.c.h.b16 %v387
    %v1424 = vunpack.c.l.b16 %v388
    %v1425 = vunpack.c.h.b16 %v388
    %v1426 = vunpack.c.l.b16 %v389
    %v1427 = vunpack.c.h.b16 %v389
    %v1428 = vunpack.c.l.b16 %v390
    %v1429 = vunpack.c.h.b16 %v390
    %v1430 = vunpack.c.l.b16 %v391
    %v1431 = vunpack.c.h.b16 %v391
    %v1432 = vunpack.c.l.b16 %v392
    %v1433 = vunpack.c.h.b16 %v392
    %v1434 = vunpack.c.l.b16 %v393
    %v1435 = vunpack.c.h.b16 %v393
    %v1436 = vunpack.c.l.b16 %v394
    %v1437 = vunpack.c.h.b16 %v394
    %v1438 = vunpack.c.l.b16 %v395
    %v1439 = vunpack.c.h.b16 %v395
    %v1440 = vunpack.c.l.b16 %v396
    %v1441 = vunpack.c.h.b16 %v396
    %v1442 = vunpack.c.l.b16 %v397
    %v1443 = vunpack.c.h.b16 %v397
    %v1444 = vunpack.c.l.b16 %v398
    %v1445 = vunpack.c.h.b16 %v398
    %v1446 = vunpack.c.l.b16 %v399
    %v1447 = vunpack.c.h.b16 %v399
    %v1448 = vunpack.c.l.b16 %v400
    %v1449 = vunpack.c.h.b16 %v400
    %v1450 = vunpack.c.l.b16 %v401
    %v1451 = vunpack.c.h.b16 %v401
    %v1452 = vunpack.c.l.b16 %v402
    %v1453 = vunpack.c.h.b16 %v402
    %v1454 = vunpack.c.l.b16 %v403
    %v1455 = vunpack.c.h.b16 %v403
    %v1456 = vunpack.c.l.b16 %v404
    %v1457 = vunpack.c.h.b16 %v404
    %v1458 = vunpack.c.l.b16 %v405
    %v1459 = vunpack.c.h.b16 %v405
    %v1460 = vunpack.c.l.b16 %v406
    %v1461 = vunpack.c.h.b16 %v406
    %v1462 = vunpack.c.l.b16 %v407
    %v1463 = vunpack.c.h.b16 %v407
    %v1464 = vunpack.c.l.b16 %v408
    %v1465 = vunpack.c.h.b16 %v408
    %v1466 = vunpack.c.l.b16 %v409
    %v1467 = vunpack.c.h.b16 %v409
    %v1468 = vunpack.c.l.b16 %v410
    %v1469 = vunpack.c.h.b16 %v410
    %v1470 = vunpack.c.l.b16 %v411
    %v1471 = vunpack.c.h.b16 %v411
    %v1472 = vunpack.c.l.b16 %v412
    %v1473 = vunpack.c.h.b16 %v412
    %v1474 = vunpack.c.l.b16 %v413
    %v1475 = vunpack.c.h.b16 %v413
    %v1476 = vunpack.c.l.b16 %v414
    %v1477 = vunpack.c.h.b16 %v414
    %v1478 = vunpack.c.l.b16 %v415
    %v1479 = vunpack.c.h.b16 %v415
    %v1480 = vunpack.c.l.b16 %v416
    %v1481 = vunpack.c.h.b16 %v416
    %v1482 = vunpack.c.l.b16 %v417
    %v1483 = vunpack.c.h.b16 %v417
    %v1484 = vunpack.c.l.b16 %v418
    %v1485 = vunpack.c.h.b16 %v418
    %v1486 = vunpack.c.l.b16 %v419
    %v1487 = vunpack.c.h.b16 %v419
    %v1488 = vunpack.c.l.b16 %v420
    %v1489 = vunpack.c.h.b16 %v420
    %v1490 = vunpack.c.l.b16 %v421
    %v1491 = vunpack.c.h.b16 %v421
    %v1492 = vunpack.c.l.b16 %v422
    %v1493 = vunpack.c.h.b16 %v422
    %v1494 = vunpack.c.l.b16 %v423
    %v1495 = vunpack.c.h.b16 %v423
    %v1496 = vunpack.c.l.b16 %v424
    %v1497 = vunpack.c.h.b16 %v424
    %v1498 = vunpack.c.l.b16 %v425
    %v1499 = vunpack.c.h.b16 %v425
    %v1500 = vunpack.c.l.b16 %v426
    %v1501 = vunpack.c.h.b16 %v426
    %v1502 = vunpack.c.l.b16 %v427
    %v1503 = vunpack.c.h.b16 %v427
    %v1504 = vunpack.c.l.b16 %v428
    %v1505 = vunpack.c.h.b16 %v428
    %v1506 = vunpack.c.l.b16 %v429
    %v1507 = vunpack.c.h.b16 %v429
    %v1508 = vunpack.c.l.b16 %v430
    %v1509 = vunpack.c.h.b16 %v430
    %v1510 = vunpack.c.l.b16 %v431
    %v1511 = vunpack.c.h.b16 %v431
    %v1512 = vunpack.c.l.b16 %v432
    %v1513 = vunpack.c.h.b16 %v432
    %v1514 = vunpack.c.l.b16 %v433
    %v1515 = vunpack.c.h.b16 %v433
    %v1516 = vunpack.c.l.b16 %v434
    %v1517 = vunpack.c.h.b16 %v434
    %v1518 = vunpack.c.l.b16 %v435
    %v1519 = vunpack.c.h.b16 %v435
    %v1520 = vunpack.c.l.b16 %v436
    %v1521 = vunpack.c.h.b16 %v436
    %v1522 = vunpack.c.l.b16 %v437
    %v1523 = vunpack.c.h.b16 %v437
    %v1524 = vunpack.c.l.b16 %v438
    %v1525 = vunpack.c.h.b16 %v438
    %v1526 = vunpack.c.l.b16 %v439
    %v1527 = vunpack.c.h.b16 %v439
    %v1528 = vunpack.c.l.b16 %v440
    %v1529 = vunpack.c.h.b16 %v440
    %v1530 = vunpack.c.l.b16 %v441
    %v1531 = vunpack.c.h.b16 %v441
    %v1532 = vunpack.c.l.b16 %v442
    %v1533 = vunpack.c.h.b16 %v442
    %v1534 = vunpack.c.l.b16 %v443
    %v1535 = vunpack.c.h.b16 %v443
    %v1536 = vunpack.c.l.b16 %v444
    %v1537 = vunpack.c.h.b16 %v444
    %v1538 = vunpack.c.l.b16 %v445
    %v1539 = vunpack.c.h.b16 %v445
    %v1540 = vunpack.c.l.b16 %v446
    %v1541 = vunpack.c.h.b16 %v446
    %v1542 = vunpack.c.l.b16 %v447
    %v1543 = vunpack.c.h.b16 %v447
    %v1544 = vunpack.c.l.b16 %v448
    %v1545 = vunpack.c.h.b16 %v448
    %v1546 = vunpack.c.l.b16 %v449
    %v1547 = vunpack.c.h.b16 %v449
    %v1548 = vunpack.c.l.b16 %v450
    %v1549 = vunpack.c.h.b16 %v450
    %v1550 = vunpack.c.l.b16 %v451
    %v1551 = vunpack.c.h.b16 %v451
    %v1552 = vunpack.c.l.b16 %v452
    %v1553 = vunpack.c.h.b16 %v452
    %v1554 = vunpack.c.l.b16 %v453
    %v1555 = vunpack.c.h.b16 %v453
    %v1556 = vunpack.c.l.b16 %v454
    %v1557 = vunpack.c.h.b16 %v454
    %v1558 = vunpack.c.l.b16 %v455
    %v1559 = vunpack.c.h.b16 %v455
    %v1560 = vunpack.c.l.b16 %v456
    %v1561 = vunpack.c.h.b16 %v456
    %v1562 = vunpack.c.l.b16 %v457
    %v1563 = vunpack.c.h.b16 %v457
    %v1564 = vunpack.c.l.b16 %v458
    %v1565 = vunpack.c.h.b16 %v458
    %v1566 = vunpack.c.l.b16 %v459
    %v1567 = vunpack.c.h.b16 %v459
    %v1568 = vunpack.c.l.b16 %v460
    %v1569 = vunpack.c.h.b16 %v460
    %v1570 = vunpack.c.l.b16 %v461
    %v1571 = vunpack.c.h.b16 %v461
    %v1572 = vunpack.c.l.b16 %v462
    %v1573 = vunpack.c.h.b16 %v462
    %v1574 = vunpack.c.l.b16 %v463
    %v1575 = vunpack.c.h.b16 %v463
    %v1576 = vunpack.c.l.b16 %v464
    %v1577 = vunpack.c.h.b16 %v464
    %v1578 = vunpack.c.l.b16 %v465
    %v1579 = vunpack.c.h.b16 %v465
    %v1580 = vunpack.c.l.b16 %v466
    %v1581 = vunpack.c.h.b16 %v466
    %v1582 = vunpack.c.l.b16 %v467
    %v1583 = vunpack.c.h.b16 %v467
    %v1584 = vunpack.c.l.b16 %v468
    %v1585 = vunpack.c.h.b16 %v468
    %v1586 = vunpack.c.l.b16 %v469
    %v1587 = vunpack.c.h.b16 %v469
    %v1588 = vunpack.c.l.b16 %v470
    %v1589 = vunpack.c.h.b16 %v470
    %v1590 = vunpack.c.l.b16 %v471
    %v1591 = vunpack.c.h.b16 %v471
    %v1592 = vunpack.c.l.b16 %v472
    %v1593 = vunpack.c.h.b16 %v472
    %v1594 = vunpack.c.l.b16 %v473
    %v1595 = vunpack.c.h.b16 %v473
    %v1596 = vunpack.c.l.b16 %v474
    %v1597 = vunpack.c.h.b16 %v474
    %v1598 = vunpack.c.l.b16 %v475
    %v1599 = vunpack.c.h.b16 %v475
    %v1600 = vunpack.c.l.b16 %v476
    %v1601 = vunpack.c.h.b16 %v476
    %v1602 = vunpack.c.l.b16 %v477
    %v1603 = vunpack.c.h.b16 %v477
    %v1604 = vunpack.c.l.b16 %v478
    %v1605 = vunpack.c.h.b16 %v478
    %v1606 = vunpack.c.l.b16 %v479
    %v1607 = vunpack.c.h.b16 %v479
    %v1608 = vunpack.c.l.b16 %v480
    %v1609 = vunpack.c.h.b16 %v480
    %v1610 = vunpack.c.l.b16 %v481
    %v1611 = vunpack.c.h.b16 %v481
    %v1612 = vunpack.c.l.b16 %v482
    %v1613 = vunpack.c.h.b16 %v482
    %v1614 = vunpack.c.l.b16 %v483
    %v1615 = vunpack.c.h.b16 %v483
    %v1616 = vunpack.c.l.b16 %v484
    %v1617 = vunpack.c.h.b16 %v484
    %v1618 = vunpack.c.l.b16 %v485
    %v1619 = vunpack.c.h.b16 %v485
    %v1620 = vunpack.c.l.b16 %v486
    %v1621 = vunpack.c.h.b16 %v486
    %v1622 = vunpack.c.l.b16 %v487
    %v1623 = vunpack.c.h.b16 %v487
    %v1624 = vunpack.c.l.b16 %v488
    %v1625 = vunpack.c.h.b16 %v488
    %v1626 = vunpack.c.l.b16 %v489
    %v1627 = vunpack.c.h.b16 %v489
    %v1628 = vunpack.c.l.b16 %v490
    %v1629 = vunpack.c.h.b16 %v490
    %v1630 = vunpack.c.l.b16 %v491
    %v1631 = vunpack.c.h.b16 %v491
    %v1632 = vunpack.c.l.b16 %v492
    %v1633 = vunpack.c.h.b16 %v492
    %v1634 = vunpack.c.l.b16 %v493
    %v1635 = vunpack.c.h.b16 %v493
    %v1636 = vunpack.c.l.b16 %v494
    %v1637 = vunpack.c.h.b16 %v494
    %v1638 = vunpack.c.l.b16 %v495
    %v1639 = vunpack.c.h.b16 %v495
    %v1640 = vunpack.c.l.b16 %v496
    %v1641 = vunpack.c.h.b16 %v496
    %v1642 = vunpack.c.l.b16 %v497
    %v1643 = vunpack.c.h.b16 %v497
    %v1644 = vunpack.c.l.b16 %v498
    %v1645 = vunpack.c.h.b16 %v498
    %v1646 = vunpack.c.l.b16 %v499
    %v1647 = vunpack.c.h.b16 %v499
    %v1648 = vunpack.c.l.b16 %v500
    %v1649 = vunpack.c.h.b16 %v500
    %v1650 = vunpack.c.l.b16 %v501
    %v1651 = vunpack.c.h.b16 %v501
    %v1652 = vunpack.c.l.b16 %v502
    %v1653 = vunpack.c.h.b16 %v502
    %v1654 = vunpack.c.l.b16 %v503
    %v1655 = vunpack.c.h.b16 %v503
    %v1656 = vpack.c.b16 %v896, %v888
    %v1657 = vpack.c.b16 %v897, %v889
    %v1658 = vpack.c.b16 %v898, %v890
    %v1659 = vpack.c.b16 %v899, %v891
    %v1660 = vpack.c.b16 %v900, %v892
    %v1661 = vpack.c.b16 %v901, %v893
    %v1662 = vpack.c.b16 %v902, %v894
    %v1663 = vpack.c.b16 %v903, %v895
    %v1664 = vpack.c.b16 %v912, %v904
    %v1665 = vpack.c.b16 %v913, %v905
    %v1666 = vpack.c.b16 %v914, %v906
    %v1667 = vpack.c.b16 %v915, %v907
    %v1668 = vpack.c.b16 %v916, %v908
    %v1669 = vpack.c.b16 %v917, %v909
    %v1670 = vpack.c.b16 %v918, %v910
    %v1671 = vpack.c.b16 %v919, %v911
    %v1672 = vpack.c.b16 %v928, %v920
    %v1673 = vpack.c.b16 %v929, %v921
    %v1674 = vpack.c.b16 %v930, %v922
    %v1675 = vpack.c.b16 %v931, %v923
    %v1676 = vpack.c.b16 %v932, %v924
    %v1677 = vpack.c.b16 %v933, %v925
    %v1678 = vpack.c.b16 %v934, %v926
    %v1679 = vpack.c.b16 %v935, %v927
    %v1680 = vpack.c.b16 %v944, %v936
    %v1681 = vpack.c.b16 %v945, %v937
    %v1682 = vpack.c.b16 %v946, %v938
    %v1683 = vpack.c.b16 %v947, %v939
    %v1684 = vpack.c.b16 %v948, %v940
    %v1685 = vpack.c.b16 %v949, %v941
    %v1686 = vpack.c.b16 %v950, %v942
    %v1687 = vpack.c.b16 %v951, %v943
    %v1688 = vpack.c.b16 %v960, %v952
    %v1689 = vpack.c.b16 %v961, %v953
    %v1690 = vpack.c.b16 %v962, %v954
    %v1691 = vpack.c.b16 %v963, %v955
    %v1692 = vpack.c.b16 %v964, %v956
    %v1693 = vpack.c.b16 %v965, %v957
    %v1694 = vpack.c.b16 %v966, %v958
    %v1695 = vpack.c.b16 %v967, %v959
    %v1696 = vpack.c.b16 %v976, %v968
    %v1697 = vpack.c.b16 %v977, %v969
    %v1698 = vpack.c.b16 %v978, %v970
    %v1699 = vpack.c.b16 %v979, %v971
    %v1700 = vpack.c.b16 %v980, %v972
    %v1701 = vpack.c.b16 %v981, %v973
    %v1702 = vpack.c.b16 %v982, %v974
    %v1703 = vpack.c.b16 %v983, %v975
    %v1704 = vpack.c.b16 %v992, %v984
    %v1705 = vpack.c.b16 %v993, %v985
    %v1706 = vpack.c.b16 %v994, %v986
    %v1707 = vpack.c.b16 %v995, %v987
    %v1708 = vpack.c.b16 %v996, %v988
    %v1709 = vpack.c.b16 %v997, %v989
    %v1710 = vpack.c.b16 %v998, %v990
    %v1711 = vpack.c.b16 %v999, %v991
    %v1712 = vpack.c.b16 %v1008, %v1000
    %v1713 = vpack.c.b16 %v1009, %v1001
    %v1714 = vpack.c.b16 %v1010, %v1002
    %v1715 = vpack.c.b16 %v1011, %v1003
    %v1716 = vpack.c.b16 %v1012, %v1004
    %v1717 = vpack.c.b16 %v1013, %v1005
    %v1718 = vpack.c.b16 %v1014, %v1006
    %v1719 = vpack.c.b16 %v1015, %v1007
    %v1720 = vpack.c.b16 %v1024, %v1016
    %v1721 = vpack.c.b16 %v1025, %v1017
    %v1722 = vpack.c.b16 %v1026, %v1018
    %v1723 = vpack.c.b16 %v1027, %v1019
    %v1724 = vpack.c.b16 %v1028, %v1020
    %v1725 = vpack.c.b16 %v1029, %v1021
    %v1726 = vpack.c.b16 %v1030, %v1022
    %v1727 = vpack.c.b16 %v1031, %v1023
    %v1728 = vpack.c.b16 %v1040, %v1032
    %v1729 = vpack.c.b16 %v1041, %v1033
    %v1730 = vpack.c.b16 %v1042, %v1034
    %v1731 = vpack.c.b16 %v1043, %v1035
    %v1732 = vpack.c.b16 %v1044, %v1036
    %v1733 = vpack.c.b16 %v1045, %v1037
    %v1734 = vpack.c.b16 %v1046, %v1038
    %v1735 = vpack.c.b16 %v1047, %v1039
    %v1736 = vpack.c.b16 %v1056, %v1048
    %v1737 = vpack.c.b16 %v1057, %v1049
    %v1738 = vpack.c.b16 %v1058, %v1050
    %v1739 = vpack.c.b16 %v1059, %v1051
    %v1740 = vpack.c.b16 %v1060, %v1052
    %v1741 = vpack.c.b16 %v1061, %v1053
    %v1742 = vpack.c.b16 %v1062, %v1054
    %v1743 = vpack.c.b16 %v1063, %v1055
    %v1744 = vpack.c.b16 %v1072, %v1064
    %v1745 = vpack.c.b16 %v1073, %v1065
    %v1746 = vpack.c.b16 %v1074, %v1066
    %v1747 = vpack.c.b16 %v1075, %v1067
    %v1748 = vpack.c.b16 %v1076, %v1068
    %v1749 = vpack.c.b16 %v1077, %v1069
    %v1750 = vpack.c.b16 %v1078, %v1070
    %v1751 = vpack.c.b16 %v1079, %v1071
    %v1752 = vpack.c.b16 %v1088, %v1080
    %v1753 = vpack.c.b16 %v1089, %v1081
    %v1754 = vpack.c.b16 %v1090, %v1082
    %v1755 = vpack.c.b16 %v1091, %v1083
    %v1756 = vpack.c.b16 %v1092, %v1084
    %v1757 = vpack.c.b16 %v1093, %v1085
    %v1758 = vpack.c.b16 %v1094, %v1086
    %v1759 = vpack.c.b16 %v1095, %v1087
    %v1760 = vpack.c.b16 %v1104, %v1096
    %v1761 = vpack.c.b16 %v1105, %v1097
    %v1762 = vpack.c.b16 %v1106, %v1098
    %v1763 = vpack.c.b16 %v1107, %v1099
    %v1764 = vpack.c.b16 %v1108, %v1100
    %v1765 = vpack.c.b16 %v1109, %v1101
    %v1766 = vpack.c.b16 %v1110, %v1102
    %v1767 = vpack.c.b16 %v1111, %v1103
    %v1768 = vpack.c.b16 %v1120, %v1112
    %v1769 = vpack.c.b16 %v1121, %v1113
    %v1770 = vpack.c.b16 %v1122, %v1114
    %v1771 = vpack.c.b16 %v1123, %v1115
    %v1772 = vpack.c.b16 %v1124, %v1116
    %v1773 = vpack.c.b16 %v1125, %v1117
    %v1774 = vpack.c.b16 %v1126, %v1118
    %v1775 = vpack.c.b16 %v1127, %v1119
    %v1776 = vpack.c.b16 %v1136, %v1128
    %v1777 = vpack.c.b16 %v1137, %v1129
    %v1778 = vpack.c.b16 %v1138, %v1130
    %v1779 = vpack.c.b16 %v1139, %v1131
    %v1780 = vpack.c.b16 %v1140, %v1132
    %v1781 = vpack.c.b16 %v1141, %v1133
    %v1782 = vpack.c.b16 %v1142, %v1134
    %v1783 = vpack.c.b16 %v1143, %v1135
    %v1784 = vpack.c.b16 %v1152, %v1144
    %v1785 = vpack.c.b16 %v1153, %v1145
    %v1786 = vpack.c.b16 %v1154, %v1146
    %v1787 = vpack.c.b16 %v1155, %v1147
    %v1788 = vpack.c.b16 %v1156, %v1148
    %v1789 = vpack.c.b16 %v1157, %v1149
    %v1790 = vpack.c.b16 %v1158, %v1150
    %v1791 = vpack.c.b16 %v1159, %v1151
    %v1792 = vpack.c.b16 %v1168, %v1160
    %v1793 = vpack.c.b16 %v1169, %v1161
    %v1794 = vpack.c.b16 %v1170, %v1162
    %v1795 = vpack.c.b16 %v1171, %v1163
    %v1796 = vpack.c.b16 %v1172, %v1164
    %v1797 = vpack.c.b16 %v1173, %v1165
    %v1798 = vpack.c.b16 %v1174, %v1166
    %v1799 = vpack.c.b16 %v1175, %v1167
    %v1800 = vpack.c.b16 %v1184, %v1176
    %v1801 = vpack.c.b16 %v1185, %v1177
    %v1802 = vpack.c.b16 %v1186, %v1178
    %v1803 = vpack.c.b16 %v1187, %v1179
    %v1804 = vpack.c.b16 %v1188, %v1180
    %v1805 = vpack.c.b16 %v1189, %v1181
    %v1806 = vpack.c.b16 %v1190, %v1182
    %v1807 = vpack.c.b16 %v1191, %v1183
    %v1808 = vpack.c.b16 %v1200, %v1192
    %v1809 = vpack.c.b16 %v1201, %v1193
    %v1810 = vpack.c.b16 %v1202, %v1194
    %v1811 = vpack.c.b16 %v1203, %v1195
    %v1812 = vpack.c.b16 %v1204, %v1196
    %v1813 = vpack.c.b16 %v1205, %v1197
    %v1814 = vpack.c.b16 %v1206, %v1198
    %v1815 = vpack.c.b16 %v1207, %v1199
    %v1816 = vpack.c.b16 %v1216, %v1208
    %v1817 = vpack.c.b16 %v1217, %v1209
    %v1818 = vpack.c.b16 %v1218, %v1210
    %v1819 = vpack.c.b16 %v1219, %v1211
    %v1820 = vpack.c.b16 %v1220, %v1212
    %v1821 = vpack.c.b16 %v1221, %v1213
    %v1822 = vpack.c.b16 %v1222, %v1214
    %v1823 = vpack.c.b16 %v1223, %v1215
    %v1824 = vpack.c.b16 %v1232, %v1224
    %v1825 = vpack.c.b16 %v1233, %v1225
    %v1826 = vpack.c.b16 %v1234, %v1226
    %v1827 = vpack.c.b16 %v1235, %v1227
    %v1828 = vpack.c.b16 %v1236, %v1228
    %v1829 = vpack.c.b16 %v1237, %v1229
    %v1830 = vpack.c.b16 %v1238, %v1230
    %v1831 = vpack.c.b16 %v1239, %v1231
    %v1832 = vpack.c.b16 %v1248, %v1240
    %v1833 = vpack.c.b16 %v1249, %v1241
    %v1834 = vpack.c.b16 %v1250, %v1242
    %v1835 = vpack.c.b16 %v1251, %v1243
    %v1836 = vpack.c.b16 %v1252, %v1244
    %v1837 = vpack.c.b16 %v1253, %v1245
    %v1838 = vpack.c.b16 %v1254, %v1246
    %v1839 = vpack.c.b16 %v1255, %v1247
    %v1840 = vpack.c.b16 %v1264, %v1256
    %v1841 = vpack.c.b16 %v1265, %v1257
    %v1842 = vpack.c.b16 %v1266, %v1258
    %v1843 = vpack.c.b16 %v1267, %v1259
    %v1844 = vpack.c.b16 %v1268, %v1260
    %v1845 = vpack.c.b16 %v1269, %v1261
    %v1846 = vpack.c.b16 %v1270, %v1262
    %v1847 = vpack.c.b16 %v1271, %v1263
    %v1848 = vpack.c.b16 %v1280, %v1272
    %v1849 = vpack.c.b16 %v1281, %v1273
    %v1850 = vpack.c.b16 %v1282, %v1274
    %v1851 = vpack.c.b16 %v1283, %v1275
    %v1852 = vpack.c.b16 %v1284, %v1276
    %v1853 = vpack.c.b16 %v1285, %v1277
    %v1854 = vpack.c.b16 %v1286, %v1278
    %v1855 = vpack.c.b16 %v1287, %v1279
    %v1856 = vpack.c.b16 %v1296, %v1288
    %v1857 = vpack.c.b16 %v1297, %v1289
    %v1858 = vpack.c.b16 %v1298, %v1290
    %v1859 = vpack.c.b16 %v1299, %v1291
    %v1860 = vpack.c.b16 %v1300, %v1292
    %v1861 = vpack.c.b16 %v1301, %v1293
    %v1862 = vpack.c.b16 %v1302, %v1294
    %v1863 = vpack.c.b16 %v1303, %v1295
    %v1864 = vpack.c.b16 %v1312, %v1304
    %v1865 = vpack.c.b16 %v1313, %v1305
    %v1866 = vpack.c.b16 %v1314, %v1306
    %v1867 = vpack.c.b16 %v1315, %v1307
    %v1868 = vpack.c.b16 %v1316, %v1308
    %v1869 = vpack.c.b16 %v1317, %v1309
    %v1870 = vpack.c.b16 %v1318, %v1310
    %v1871 = vpack.c.b16 %v1319, %v1311
    %v1872 = vpack.c.b16 %v1328, %v1320
    %v1873 = vpack.c.b16 %v1329, %v1321
    %v1874 = vpack.c.b16 %v1330, %v1322
    %v1875 = vpack.c.b16 %v1331, %v1323
    %v1876 = vpack.c.b16 %v1332, %v1324
    %v1877 = vpack.c.b16 %v1333, %v1325
    %v1878 = vpack.c.b16 %v1334, %v1326
    %v1879 = vpack.c.b16 %v1335, %v1327
    %v1880 = vpack.c.b16 %v1344, %v1336
    %v1881 = vpack.c.b16 %v1345, %v1337
    %v1882 = vpack.c.b16 %v1346, %v1338
    %v1883 = vpack.c.b16 %v1347, %v1339
    %v1884 = vpack.c.b16 %v1348, %v1340
    %v1885 = vpack.c.b16 %v1349, %v1341
    %v1886 = vpack.c.b16 %v1350, %v1342
    %v1887 = vpack.c.b16 %v1351, %v1343
    %v1888 = vpack.c.b16 %v1360, %v1352
    %v1889 = vpack.c.b16 %v1361, %v1353
    %v1890 = vpack.c.b16 %v1362, %v1354
    %v1891 = vpack.c.b16 %v1363, %v1355
    %v1892 = vpack.c.b16 %v1364, %v1356
    %v1893 = vpack.c.b16 %v1365, %v1357
    %v1894 = vpack.c.b16 %v1366, %v1358
    %v1895 = vpack.c.b16 %v1367, %v1359
    %v1896 = vpack.c.b16 %v1376, %v1368
    %v1897 = vpack.c.b16 %v1377, %v1369
    %v1898 = vpack.c.b16 %v1378, %v1370
    %v1899 = vpack.c.b16 %v1379, %v1371
    %v1900 = vpack.c.b16 %v1380, %v1372
    %v1901 = vpack.c.b16 %v1381, %v1373
    %v1902 = vpack.c.b16 %v1382, %v1374
    %v1903 = vpack.c.b16 %v1383, %v1375
    %v1904 = vpack.c.b16 %v1392, %v1384
    %v1905 = vpack.c.b16 %v1393, %v1385
    %v1906 = vpack.c.b16 %v1394, %v1386
    %v1907 = vpack.c.b16 %v1395, %v1387
    %v1908 = vpack.c.b16 %v1396, %v1388
    %v1909 = vpack.c.b16 %v1397, %v1389
    %v1910 = vpack.c.b16 %v1398, %v1390
    %v1911 = vpack.c.b16 %v1399, %v1391
    %v1912 = vpack.c.b16 %v1408, %v1400
    %v1913 = vpack.c.b16 %v1409, %v1401
    %v1914 = vpack.c.b16 %v1410, %v1402
    %v1915 = vpack.c.b16 %v1411, %v1403
    %v1916 = vpack.c.b16 %v1412, %v1404
    %v1917 = vpack.c.b16 %v1413, %v1405
    %v1918 = vpack.c.b16 %v1414, %v1406
    %v1919 = vpack.c.b16 %v1415, %v1407
    %v1920 = vpack.c.b16 %v1424, %v1416
    %v1921 = vpack.c.b16 %v1425, %v1417
    %v1922 = vpack.c.b16 %v1426, %v1418
    %v1923 = vpack.c.b16 %v1427, %v1419
    %v1924 = vpack.c.b16 %v1428, %v1420
    %v1925 = vpack.c.b16 %v1429, %v1421
    %v1926 = vpack.c.b16 %v1430, %v1422
    %v1927 = vpack.c.b16 %v1431, %v1423
    %v1928 = vpack.c.b16 %v1440, %v1432
    %v1929 = vpack.c.b16 %v1441, %v1433
    %v1930 = vpack.c.b16 %v1442, %v1434
    %v1931 = vpack.c.b16 %v1443, %v1435
    %v1932 = vpack.c.b16 %v1444, %v1436
    %v1933 = vpack.c.b16 %v1445, %v1437
    %v1934 = vpack.c.b16 %v1446, %v1438
    %v1935 = vpack.c.b16 %v1447, %v1439
    %v1936 = vpack.c.b16 %v1456, %v1448
    %v1937 = vpack.c.b16 %v1457, %v1449
    %v1938 = vpack.c.b16 %v1458, %v1450
    %v1939 = vpack.c.b16 %v1459, %v1451
    %v1940 = vpack.c.b16 %v1460, %v1452
    %v1941 = vpack.c.b16 %v1461, %v1453
    %v1942 = vpack.c.b16 %v1462, %v1454
    %v1943 = vpack.c.b16 %v1463, %v1455
    %v1944 = vpack.c.b16 %v1472, %v1464
    %v1945 = vpack.c.b16 %v1473, %v1465
    %v1946 = vpack.c.b16 %v1474, %v1466
    %v1947 = vpack.c.b16 %v1475, %v1467
    %v1948 = vpack.c.b16 %v1476, %v1468
    %v1949 = vpack.c.b16 %v1477, %v1469
    %v1950 = vpack.c.b16 %v1478, %v1470
    %v1951 = vpack.c.b16 %v1479, %v1471
    %v1952 = vpack.c.b16 %v1488, %v1480
    %v1953 = vpack.c.b16 %v1489, %v1481
    %v1954 = vpack.c.b16 %v1490, %v1482
    %v1955 = vpack.c.b16 %v1491, %v1483
    %v1956 = vpack.c.b16 %v1492, %v1484
    %v1957 = vpack.c.b16 %v1493, %v1485
    %v1958 = vpack.c.b16 %v1494, %v1486
    %v1959 = vpack.c.b16 %v1495, %v1487
    %v1960 = vpack.c.b16 %v1504, %v1496
    %v1961 = vpack.c.b16 %v1505, %v1497
    %v1962 = vpack.c.b16 %v1506, %v1498
    %v1963 = vpack.c.b16 %v1507, %v1499
    %v1964 = vpack.c.b16 %v1508, %v1500
    %v1965 = vpack.c.b16 %v1509, %v1501
    %v1966 = vpack.c.b16 %v1510, %v1502
    %v1967 = vpack.c.b16 %v1511, %v1503
    %v1968 = vpack.c.b16 %v1520, %v1512
    %v1969 = vpack.c.b16 %v1521, %v1513
    %v1970 = vpack.c.b16 %v1522, %v1514
    %v1971 = vpack.c.b16 %v1523, %v1515
    %v1972 = vpack.c.b16 %v1524, %v1516
    %v1973 = vpack.c.b16 %v1525, %v1517
    %v1974 = vpack.c.b16 %v1526, %v1518
    %v1975 = vpack.c.b16 %v1527, %v1519
    %v1976 = vpack.c.b16 %v1536, %v1528
    %v1977 = vpack.c.b16 %v1537, %v1529
    %v1978 = vpack.c.b16 %v1538, %v1530
    %v1979 = vpack.c.b16 %v1539, %v1531
    %v1980 = vpack.c.b16 %v1540, %v1532
    %v1981 = vpack.c.b16 %v1541, %v1533
    %v1982 = vpack.c.b16 %v1542, %v1534
    %v1983 = vpack.c.b16 %v1543, %v1535
    %v1984 = vpack.c.b16 %v1552, %v1544
    %v1985 = vpack.c.b16 %v1553, %v1545
    %v1986 = vpack.c.b16 %v1554, %v1546
    %v1987 = vpack.c.b16 %v1555, %v1547
    %v1988 = vpack.c.b16 %v1556, %v1548
    %v1989 = vpack.c.b16 %v1557, %v1549
    %v1990 = vpack.c.b16 %v1558, %v1550
    %v1991 = vpack.c.b16 %v1559, %v1551
    %v1992 = vpack.c.b16 %v1568, %v1560
    %v1993 = vpack.c.b16 %v1569, %v1561
    %v1994 = vpack.c.b16 %v1570, %v1562
    %v1995 = vpack.c.b16 %v1571, %v1563
    %v1996 = vpack.c.b16 %v1572, %v1564
    %v1997 = vpack.c.b16 %v1573, %v1565
    %v1998 = vpack.c.b16 %v1574, %v1566
    %v1999 = vpack.c.b16 %v1575, %v1567
    %v2000 = vpack.c.b16 %v1584, %v1576
    %v2001 = vpack.c.b16 %v1585, %v1577
    %v2002 = vpack.c.b16 %v1586, %v1578
    %v2003 = vpack.c.b16 %v1587, %v1579
    %v2004 = vpack.c.b16 %v1588, %v1580
    %v2005 = vpack.c.b16 %v1589, %v1581
    %v2006 = vpack.c.b16 %v1590, %v1582
    %v2007 = vpack.c.b16 %v1591, %v1583
    %v2008 = vpack.c.b16 %v1600, %v1592
    %v2009 = vpack.c.b16 %v1601, %v1593
    %v2010 = vpack.c.b16 %v1602, %v1594
    %v2011 = vpack.c.b16 %v1603, %v1595
    %v2012 = vpack.c.b16 %v1604, %v1596
    %v2013 = vpack.c.b16 %v1605, %v1597
    %v2014 = vpack.c.b16 %v1606, %v1598
    %v2015 = vpack.c.b16 %v1607, %v1599
    %v2016 = vpack.c.b16 %v1616, %v1608
    %v2017 = vpack.c.b16 %v1617, %v1609
    %v2018 = vpack.c.b16 %v1618, %v1610
    %v2019 = vpack.c.b16 %v1619, %v1611
    %v2020 = vpack.c.b16 %v1620, %v1612
    %v2021 = vpack.c.b16 %v1621, %v1613
    %v2022 = vpack.c.b16 %v1622, %v1614
    %v2023 = vpack.c.b16 %v1623, %v1615
    %v2024 = vpack.c.b16 %v1632, %v1624
    %v2025 = vpack.c.b16 %v1633, %v1625
    %v2026 = vpack.c.b16 %v1634, %v1626
    %v2027 = vpack.c.b16 %v1635, %v1627
    %v2028 = vpack.c.b16 %v1636, %v1628
    %v2029 = vpack.c.b16 %v1637, %v1629
    %v2030 = vpack.c.b16 %v1638, %v1630
    %v2031 = vpack.c.b16 %v1639, %v1631
    %v2032 = vpack.c.b16 %v1648, %v1640
    %v2033 = vpack.c.b16 %v1649, %v1641
    %v2034 = vpack.c.b16 %v1650, %v1642
    %v2035 = vpack.c.b16 %v1651, %v1643
    %v2036 = vpack.c.b16 %v1652, %v1644
    %v2037 = vpack.c.b16 %v1653, %v1645
    %v2038 = vpack.c.b16 %v1654, %v1646
    %v2039 = vpack.c.b16 %v1655, %v1647
    %2424 = vmatpush.bf16.msra.mxu0 %v1712
    %2425 = vmatpush.bf16.msra.mxu0 %v1704
    %2426 = vmatpush.bf16.msra.mxu0 %v1696
    %2427 = vmatpush.bf16.msra.mxu0 %v1688
    %2428 = vmatpush.bf16.msra.mxu0 %v1680
    %2429 = vmatpush.bf16.msra.mxu0 %v1672
    %2430 = vmatpush.bf16.msra.mxu0 %v1664
    %2431 = vmatpush.bf16.msra.mxu0 %v1656
    %2432 = vmatmul.bf16.gmra.mxu0 %v114
    %v2433 = vpop.f32.mrf.mxu0
    %v2434 = vadd.f32 0.0, %v2433
    %v2435 = vpop.f32.mrf.mxu0
    %2436 = vdwg.mxu0
    %2437 = vmatpush.bf16.msra.mxu0 %v1776
    %2438 = vmatpush.bf16.msra.mxu0 %v1768
    %2439 = vmatpush.bf16.msra.mxu0 %v1760
    %2440 = vmatpush.bf16.msra.mxu0 %v1752
    %2441 = vmatpush.bf16.msra.mxu0 %v1744
    %2442 = vmatpush.bf16.msra.mxu0 %v1736
    %2443 = vmatpush.bf16.msra.mxu0 %v1728
    %2444 = vmatpush.bf16.msra.mxu0 %v1720
    %2445 = vmatmul.bf16.gmra.mxu0 %v115
    %v2446 = vpop.f32.mrf.mxu0
    %v2447 = vadd.f32 %v2434, %v2446
    %v2448 = vpop.f32.mrf.mxu0
    %2449 = vdwg.mxu0
    %2450 = vmatpush.bf16.msra.mxu0 %v1840
    %2451 = vmatpush.bf16.msra.mxu0 %v1832
    %2452 = vmatpush.bf16.msra.mxu0 %v1824
    %2453 = vmatpush.bf16.msra.mxu0 %v1816
    %2454 = vmatpush.bf16.msra.mxu0 %v1808
    %2455 = vmatpush.bf16.msra.mxu0 %v1800
    %2456 = vmatpush.bf16.msra.mxu0 %v1792
    %2457 = vmatpush.bf16.msra.mxu0 %v1784
    %2458 = vmatmul.bf16.gmra.mxu0 %v116
    %v2459 = vpop.f32.mrf.mxu0
    %v2460 = vadd.f32 %v2447, %v2459
    %v2461 = vpop.f32.mrf.mxu0
    %2462 = vdwg.mxu0
    %2463 = vmatpush.bf16.msra.mxu0 %v1904
    %2464 = vmatpush.bf16.msra.mxu0 %v1896
    %2465 = vmatpush.bf16.msra.mxu0 %v1888
    %2466 = vmatpush.bf16.msra.mxu0 %v1880
    %2467 = vmatpush.bf16.msra.mxu0 %v1872
    %2468 = vmatpush.bf16.msra.mxu0 %v1864
    %2469 = vmatpush.bf16.msra.mxu0 %v1856
    %2470 = vmatpush.bf16.msra.mxu0 %v1848
    %2471 = vmatmul.bf16.gmra.mxu0 %v117
    %v2472 = vpop.f32.mrf.mxu0
    %v2473 = vadd.f32 %v2460, %v2472
    %v2474 = vpop.f32.mrf.mxu0
    %2475 = vdwg.mxu0
    %2476 = vmatpush.bf16.msra.mxu0 %v1968
    %2477 = vmatpush.bf16.msra.mxu0 %v1960
    %2478 = vmatpush.bf16.msra.mxu0 %v1952
    %2479 = vmatpush.bf16.msra.mxu0 %v1944
    %2480 = vmatpush.bf16.msra.mxu0 %v1936
    %2481 = vmatpush.bf16.msra.mxu0 %v1928
    %2482 = vmatpush.bf16.msra.mxu0 %v1920
    %2483 = vmatpush.bf16.msra.mxu0 %v1912
    %2484 = vmatmul.bf16.gmra.mxu0 %v118
    %v2485 = vpop.f32.mrf.mxu0
    %v2486 = vadd.f32 %v2473, %v2485
    %v2487 = vpop.f32.mrf.mxu0
    %2488 = vdwg.mxu0
    %2489 = vmatpush.bf16.msra.mxu0 %v2032
    %2490 = vmatpush.bf16.msra.mxu0 %v2024
    %2491 = vmatpush.bf16.msra.mxu0 %v2016
    %2492 = vmatpush.bf16.msra.mxu0 %v2008
    %2493 = vmatpush.bf16.msra.mxu0 %v2000
    %2494 = vmatpush.bf16.msra.mxu0 %v1992
    %2495 = vmatpush.bf16.msra.mxu0 %v1984
    %2496 = vmatpush.bf16.msra.mxu0 %v1976
    %2497 = vmatmul.bf16.gmra.mxu0 %v119
    %v2498 = vpop.f32.mrf.mxu0
    %v2499 = vadd.f32 %v2486, %v2498
    %v2500 = vpop.f32.mrf.mxu0
    %2501 = vdwg.mxu0
    %2502 = vmatpush.bf16.msra.mxu0 %v1713
    %2503 = vmatpush.bf16.msra.mxu0 %v1705
    %2504 = vmatpush.bf16.msra.mxu0 %v1697
    %2505 = vmatpush.bf16.msra.mxu0 %v1689
    %2506 = vmatpush.bf16.msra.mxu0 %v1681
    %2507 = vmatpush.bf16.msra.mxu0 %v1673
    %2508 = vmatpush.bf16.msra.mxu0 %v1665
    %2509 = vmatpush.bf16.msra.mxu0 %v1657
    %2510 = vmatmul.bf16.gmra.mxu0 %v114
    %v2511 = vpop.f32.mrf.mxu0
    %v2512 = vadd.f32 0.0, %v2511
    %v2513 = vpop.f32.mrf.mxu0
    %2514 = vdwg.mxu0
    %2515 = vmatpush.bf16.msra.mxu0 %v1777
    %2516 = vmatpush.bf16.msra.mxu0 %v1769
    %2517 = vmatpush.bf16.msra.mxu0 %v1761
    %2518 = vmatpush.bf16.msra.mxu0 %v1753
    %2519 = vmatpush.bf16.msra.mxu0 %v1745
    %2520 = vmatpush.bf16.msra.mxu0 %v1737
    %2521 = vmatpush.bf16.msra.mxu0 %v1729
    %2522 = vmatpush.bf16.msra.mxu0 %v1721
    %2523 = vmatmul.bf16.gmra.mxu0 %v115
    %v2524 = vpop.f32.mrf.mxu0
    %v2525 = vadd.f32 %v2512, %v2524
    %v2526 = vpop.f32.mrf.mxu0
    %2527 = vdwg.mxu0
    %2528 = vmatpush.bf16.msra.mxu0 %v1841
    %2529 = vmatpush.bf16.msra.mxu0 %v1833
    %2530 = vmatpush.bf16.msra.mxu0 %v1825
    %2531 = vmatpush.bf16.msra.mxu0 %v1817
    %2532 = vmatpush.bf16.msra.mxu0 %v1809
    %2533 = vmatpush.bf16.msra.mxu0 %v1801
    %2534 = vmatpush.bf16.msra.mxu0 %v1793
    %2535 = vmatpush.bf16.msra.mxu0 %v1785
    %2536 = vmatmul.bf16.gmra.mxu0 %v116
    %v2537 = vpop.f32.mrf.mxu0
    %v2538 = vadd.f32 %v2525, %v2537
    %v2539 = vpop.f32.mrf.mxu0
    %2540 = vdwg.mxu0
    %2541 = vmatpush.bf16.msra.mxu0 %v1905
    %2542 = vmatpush.bf16.msra.mxu0 %v1897
    %2543 = vmatpush.bf16.msra.mxu0 %v1889
    %2544 = vmatpush.bf16.msra.mxu0 %v1881
    %2545 = vmatpush.bf16.msra.mxu0 %v1873
    %2546 = vmatpush.bf16.msra.mxu0 %v1865
    %2547 = vmatpush.bf16.msra.mxu0 %v1857
    %2548 = vmatpush.bf16.msra.mxu0 %v1849
    %2549 = vmatmul.bf16.gmra.mxu0 %v117
    %v2550 = vpop.f32.mrf.mxu0
    %v2551 = vadd.f32 %v2538, %v2550
    %v2552 = vpop.f32.mrf.mxu0
    %2553 = vdwg.mxu0
    %2554 = vmatpush.bf16.msra.mxu0 %v1969
    %2555 = vmatpush.bf16.msra.mxu0 %v1961
    %2556 = vmatpush.bf16.msra.mxu0 %v1953
    %2557 = vmatpush.bf16.msra.mxu0 %v1945
    %2558 = vmatpush.bf16.msra.mxu0 %v1937
    %2559 = vmatpush.bf16.msra.mxu0 %v1929
    %2560 = vmatpush.bf16.msra.mxu0 %v1921
    %2561 = vmatpush.bf16.msra.mxu0 %v1913
    %2562 = vmatmul.bf16.gmra.mxu0 %v118
    %v2563 = vpop.f32.mrf.mxu0
    %v2564 = vadd.f32 %v2551, %v2563
    %v2565 = vpop.f32.mrf.mxu0
    %2566 = vdwg.mxu0
    %2567 = vmatpush.bf16.msra.mxu0 %v2033
    %2568 = vmatpush.bf16.msra.mxu0 %v2025
    %2569 = vmatpush.bf16.msra.mxu0 %v2017
    %2570 = vmatpush.bf16.msra.mxu0 %v2009
    %2571 = vmatpush.bf16.msra.mxu0 %v2001
    %2572 = vmatpush.bf16.msra.mxu0 %v1993
    %2573 = vmatpush.bf16.msra.mxu0 %v1985
    %2574 = vmatpush.bf16.msra.mxu0 %v1977
    %2575 = vmatmul.bf16.gmra.mxu0 %v119
    %v2576 = vpop.f32.mrf.mxu0
    %v2577 = vadd.f32 %v2564, %v2576
    %v2578 = vpop.f32.mrf.mxu0
    %2579 = vdwg.mxu0
    %2580 = vmatpush.bf16.msra.mxu0 %v1714
    %2581 = vmatpush.bf16.msra.mxu0 %v1706
    %2582 = vmatpush.bf16.msra.mxu0 %v1698
    %2583 = vmatpush.bf16.msra.mxu0 %v1690
    %2584 = vmatpush.bf16.msra.mxu0 %v1682
    %2585 = vmatpush.bf16.msra.mxu0 %v1674
    %2586 = vmatpush.bf16.msra.mxu0 %v1666
    %2587 = vmatpush.bf16.msra.mxu0 %v1658
    %2588 = vmatmul.bf16.gmra.mxu0 %v114
    %v2589 = vpop.f32.mrf.mxu0
    %v2590 = vadd.f32 0.0, %v2589
    %v2591 = vpop.f32.mrf.mxu0
    %2592 = vdwg.mxu0
    %2593 = vmatpush.bf16.msra.mxu0 %v1778
    %2594 = vmatpush.bf16.msra.mxu0 %v1770
    %2595 = vmatpush.bf16.msra.mxu0 %v1762
    %2596 = vmatpush.bf16.msra.mxu0 %v1754
    %2597 = vmatpush.bf16.msra.mxu0 %v1746
    %2598 = vmatpush.bf16.msra.mxu0 %v1738
    %2599 = vmatpush.bf16.msra.mxu0 %v1730
    %2600 = vmatpush.bf16.msra.mxu0 %v1722
    %2601 = vmatmul.bf16.gmra.mxu0 %v115
    %v2602 = vpop.f32.mrf.mxu0
    %v2603 = vadd.f32 %v2590, %v2602
    %v2604 = vpop.f32.mrf.mxu0
    %2605 = vdwg.mxu0
    %2606 = vmatpush.bf16.msra.mxu0 %v1842
    %2607 = vmatpush.bf16.msra.mxu0 %v1834
    %2608 = vmatpush.bf16.msra.mxu0 %v1826
    %2609 = vmatpush.bf16.msra.mxu0 %v1818
    %2610 = vmatpush.bf16.msra.mxu0 %v1810
    %2611 = vmatpush.bf16.msra.mxu0 %v1802
    %2612 = vmatpush.bf16.msra.mxu0 %v1794
    %2613 = vmatpush.bf16.msra.mxu0 %v1786
    %2614 = vmatmul.bf16.gmra.mxu0 %v116
    %v2615 = vpop.f32.mrf.mxu0
    %v2616 = vadd.f32 %v2603, %v2615
    %v2617 = vpop.f32.mrf.mxu0
    %2618 = vdwg.mxu0
    %2619 = vmatpush.bf16.msra.mxu0 %v1906
    %2620 = vmatpush.bf16.msra.mxu0 %v1898
    %2621 = vmatpush.bf16.msra.mxu0 %v1890
    %2622 = vmatpush.bf16.msra.mxu0 %v1882
    %2623 = vmatpush.bf16.msra.mxu0 %v1874
    %2624 = vmatpush.bf16.msra.mxu0 %v1866
    %2625 = vmatpush.bf16.msra.mxu0 %v1858
    %2626 = vmatpush.bf16.msra.mxu0 %v1850
    %2627 = vmatmul.bf16.gmra.mxu0 %v117
    %v2628 = vpop.f32.mrf.mxu0
    %v2629 = vadd.f32 %v2616, %v2628
    %v2630 = vpop.f32.mrf.mxu0
    %2631 = vdwg.mxu0
    %2632 = vmatpush.bf16.msra.mxu0 %v1970
    %2633 = vmatpush.bf16.msra.mxu0 %v1962
    %2634 = vmatpush.bf16.msra.mxu0 %v1954
    %2635 = vmatpush.bf16.msra.mxu0 %v1946
    %2636 = vmatpush.bf16.msra.mxu0 %v1938
    %2637 = vmatpush.bf16.msra.mxu0 %v1930
    %2638 = vmatpush.bf16.msra.mxu0 %v1922
    %2639 = vmatpush.bf16.msra.mxu0 %v1914
    %2640 = vmatmul.bf16.gmra.mxu0 %v118
    %v2641 = vpop.f32.mrf.mxu0
    %v2642 = vadd.f32 %v2629, %v2641
    %v2643 = vpop.f32.mrf.mxu0
    %2644 = vdwg.mxu0
    %2645 = vmatpush.bf16.msra.mxu0 %v2034
    %2646 = vmatpush.bf16.msra.mxu0 %v2026
    %2647 = vmatpush.bf16.msra.mxu0 %v2018
    %2648 = vmatpush.bf16.msra.mxu0 %v2010
    %2649 = vmatpush.bf16.msra.mxu0 %v2002
    %2650 = vmatpush.bf16.msra.mxu0 %v1994
    %2651 = vmatpush.bf16.msra.mxu0 %v1986
    %2652 = vmatpush.bf16.msra.mxu0 %v1978
    %2653 = vmatmul.bf16.gmra.mxu0 %v119
    %v2654 = vpop.f32.mrf.mxu0
    %v2655 = vadd.f32 %v2642, %v2654
    %v2656 = vpop.f32.mrf.mxu0
    %2657 = vdwg.mxu0
    %2658 = vmatpush.bf16.msra.mxu0 %v1715
    %2659 = vmatpush.bf16.msra.mxu0 %v1707
    %2660 = vmatpush.bf16.msra.mxu0 %v1699
    %2661 = vmatpush.bf16.msra.mxu0 %v1691
    %2662 = vmatpush.bf16.msra.mxu0 %v1683
    %2663 = vmatpush.bf16.msra.mxu0 %v1675
    %2664 = vmatpush.bf16.msra.mxu0 %v1667
    %2665 = vmatpush.bf16.msra.mxu0 %v1659
    %2666 = vmatmul.bf16.gmra.mxu0 %v114
    %v2667 = vpop.f32.mrf.mxu0
    %v2668 = vadd.f32 0.0, %v2667
    %v2669 = vpop.f32.mrf.mxu0
    %2670 = vdwg.mxu0
    %2671 = vmatpush.bf16.msra.mxu0 %v1779
    %2672 = vmatpush.bf16.msra.mxu0 %v1771
    %2673 = vmatpush.bf16.msra.mxu0 %v1763
    %2674 = vmatpush.bf16.msra.mxu0 %v1755
    %2675 = vmatpush.bf16.msra.mxu0 %v1747
    %2676 = vmatpush.bf16.msra.mxu0 %v1739
    %2677 = vmatpush.bf16.msra.mxu0 %v1731
    %2678 = vmatpush.bf16.msra.mxu0 %v1723
    %2679 = vmatmul.bf16.gmra.mxu0 %v115
    %v2680 = vpop.f32.mrf.mxu0
    %v2681 = vadd.f32 %v2668, %v2680
    %v2682 = vpop.f32.mrf.mxu0
    %2683 = vdwg.mxu0
    %2684 = vmatpush.bf16.msra.mxu0 %v1843
    %2685 = vmatpush.bf16.msra.mxu0 %v1835
    %2686 = vmatpush.bf16.msra.mxu0 %v1827
    %2687 = vmatpush.bf16.msra.mxu0 %v1819
    %2688 = vmatpush.bf16.msra.mxu0 %v1811
    %2689 = vmatpush.bf16.msra.mxu0 %v1803
    %2690 = vmatpush.bf16.msra.mxu0 %v1795
    %2691 = vmatpush.bf16.msra.mxu0 %v1787
    %2692 = vmatmul.bf16.gmra.mxu0 %v116
    %v2693 = vpop.f32.mrf.mxu0
    %v2694 = vadd.f32 %v2681, %v2693
    %v2695 = vpop.f32.mrf.mxu0
    %2696 = vdwg.mxu0
    %2697 = vmatpush.bf16.msra.mxu0 %v1907
    %2698 = vmatpush.bf16.msra.mxu0 %v1899
    %2699 = vmatpush.bf16.msra.mxu0 %v1891
    %2700 = vmatpush.bf16.msra.mxu0 %v1883
    %2701 = vmatpush.bf16.msra.mxu0 %v1875
    %2702 = vmatpush.bf16.msra.mxu0 %v1867
    %2703 = vmatpush.bf16.msra.mxu0 %v1859
    %2704 = vmatpush.bf16.msra.mxu0 %v1851
    %2705 = vmatmul.bf16.gmra.mxu0 %v117
    %v2706 = vpop.f32.mrf.mxu0
    %v2707 = vadd.f32 %v2694, %v2706
    %v2708 = vpop.f32.mrf.mxu0
    %2709 = vdwg.mxu0
    %2710 = vmatpush.bf16.msra.mxu0 %v1971
    %2711 = vmatpush.bf16.msra.mxu0 %v1963
    %2712 = vmatpush.bf16.msra.mxu0 %v1955
    %2713 = vmatpush.bf16.msra.mxu0 %v1947
    %2714 = vmatpush.bf16.msra.mxu0 %v1939
    %2715 = vmatpush.bf16.msra.mxu0 %v1931
    %2716 = vmatpush.bf16.msra.mxu0 %v1923
    %2717 = vmatpush.bf16.msra.mxu0 %v1915
    %2718 = vmatmul.bf16.gmra.mxu0 %v118
    %v2719 = vpop.f32.mrf.mxu0
    %v2720 = vadd.f32 %v2707, %v2719
    %v2721 = vpop.f32.mrf.mxu0
    %2722 = vdwg.mxu0
    %2723 = vmatpush.bf16.msra.mxu0 %v2035
    %2724 = vmatpush.bf16.msra.mxu0 %v2027
    %2725 = vmatpush.bf16.msra.mxu0 %v2019
    %2726 = vmatpush.bf16.msra.mxu0 %v2011
    %2727 = vmatpush.bf16.msra.mxu0 %v2003
    %2728 = vmatpush.bf16.msra.mxu0 %v1995
    %2729 = vmatpush.bf16.msra.mxu0 %v1987
    %2730 = vmatpush.bf16.msra.mxu0 %v1979
    %2731 = vmatmul.bf16.gmra.mxu0 %v119
    %v2732 = vpop.f32.mrf.mxu0
    %v2733 = vadd.f32 %v2720, %v2732
    %v2734 = vpop.f32.mrf.mxu0
    %2735 = vdwg.mxu0
    %2736 = vmatpush.bf16.msra.mxu0 %v1716
    %2737 = vmatpush.bf16.msra.mxu0 %v1708
    %2738 = vmatpush.bf16.msra.mxu0 %v1700
    %2739 = vmatpush.bf16.msra.mxu0 %v1692
    %2740 = vmatpush.bf16.msra.mxu0 %v1684
    %2741 = vmatpush.bf16.msra.mxu0 %v1676
    %2742 = vmatpush.bf16.msra.mxu0 %v1668
    %2743 = vmatpush.bf16.msra.mxu0 %v1660
    %2744 = vmatmul.bf16.gmra.mxu0 %v114
    %v2745 = vpop.f32.mrf.mxu0
    %v2746 = vadd.f32 0.0, %v2745
    %v2747 = vpop.f32.mrf.mxu0
    %2748 = vdwg.mxu0
    %2749 = vmatpush.bf16.msra.mxu0 %v1780
    %2750 = vmatpush.bf16.msra.mxu0 %v1772
    %2751 = vmatpush.bf16.msra.mxu0 %v1764
    %2752 = vmatpush.bf16.msra.mxu0 %v1756
    %2753 = vmatpush.bf16.msra.mxu0 %v1748
    %2754 = vmatpush.bf16.msra.mxu0 %v1740
    %2755 = vmatpush.bf16.msra.mxu0 %v1732
    %2756 = vmatpush.bf16.msra.mxu0 %v1724
    %2757 = vmatmul.bf16.gmra.mxu0 %v115
    %v2758 = vpop.f32.mrf.mxu0
    %v2759 = vadd.f32 %v2746, %v2758
    %v2760 = vpop.f32.mrf.mxu0
    %2761 = vdwg.mxu0
    %2762 = vmatpush.bf16.msra.mxu0 %v1844
    %2763 = vmatpush.bf16.msra.mxu0 %v1836
    %2764 = vmatpush.bf16.msra.mxu0 %v1828
    %2765 = vmatpush.bf16.msra.mxu0 %v1820
    %2766 = vmatpush.bf16.msra.mxu0 %v1812
    %2767 = vmatpush.bf16.msra.mxu0 %v1804
    %2768 = vmatpush.bf16.msra.mxu0 %v1796
    %2769 = vmatpush.bf16.msra.mxu0 %v1788
    %2770 = vmatmul.bf16.gmra.mxu0 %v116
    %v2771 = vpop.f32.mrf.mxu0
    %v2772 = vadd.f32 %v2759, %v2771
    %v2773 = vpop.f32.mrf.mxu0
    %2774 = vdwg.mxu0
    %2775 = vmatpush.bf16.msra.mxu0 %v1908
    %2776 = vmatpush.bf16.msra.mxu0 %v1900
    %2777 = vmatpush.bf16.msra.mxu0 %v1892
    %2778 = vmatpush.bf16.msra.mxu0 %v1884
    %2779 = vmatpush.bf16.msra.mxu0 %v1876
    %2780 = vmatpush.bf16.msra.mxu0 %v1868
    %2781 = vmatpush.bf16.msra.mxu0 %v1860
    %2782 = vmatpush.bf16.msra.mxu0 %v1852
    %2783 = vmatmul.bf16.gmra.mxu0 %v117
    %v2784 = vpop.f32.mrf.mxu0
    %v2785 = vadd.f32 %v2772, %v2784
    %v2786 = vpop.f32.mrf.mxu0
    %2787 = vdwg.mxu0
    %2788 = vmatpush.bf16.msra.mxu0 %v1972
    %2789 = vmatpush.bf16.msra.mxu0 %v1964
    %2790 = vmatpush.bf16.msra.mxu0 %v1956
    %2791 = vmatpush.bf16.msra.mxu0 %v1948
    %2792 = vmatpush.bf16.msra.mxu0 %v1940
    %2793 = vmatpush.bf16.msra.mxu0 %v1932
    %2794 = vmatpush.bf16.msra.mxu0 %v1924
    %2795 = vmatpush.bf16.msra.mxu0 %v1916
    %2796 = vmatmul.bf16.gmra.mxu0 %v118
    %v2797 = vpop.f32.mrf.mxu0
    %v2798 = vadd.f32 %v2785, %v2797
    %v2799 = vpop.f32.mrf.mxu0
    %2800 = vdwg.mxu0
    %2801 = vmatpush.bf16.msra.mxu0 %v2036
    %2802 = vmatpush.bf16.msra.mxu0 %v2028
    %2803 = vmatpush.bf16.msra.mxu0 %v2020
    %2804 = vmatpush.bf16.msra.mxu0 %v2012
    %2805 = vmatpush.bf16.msra.mxu0 %v2004
    %2806 = vmatpush.bf16.msra.mxu0 %v1996
    %2807 = vmatpush.bf16.msra.mxu0 %v1988
    %2808 = vmatpush.bf16.msra.mxu0 %v1980
    %2809 = vmatmul.bf16.gmra.mxu0 %v119
    %v2810 = vpop.f32.mrf.mxu0
    %v2811 = vadd.f32 %v2798, %v2810
    %v2812 = vpop.f32.mrf.mxu0
    %2813 = vdwg.mxu0
    %2814 = vmatpush.bf16.msra.mxu0 %v1717
    %2815 = vmatpush.bf16.msra.mxu0 %v1709
    %2816 = vmatpush.bf16.msra.mxu0 %v1701
    %2817 = vmatpush.bf16.msra.mxu0 %v1693
    %2818 = vmatpush.bf16.msra.mxu0 %v1685
    %2819 = vmatpush.bf16.msra.mxu0 %v1677
    %2820 = vmatpush.bf16.msra.mxu0 %v1669
    %2821 = vmatpush.bf16.msra.mxu0 %v1661
    %2822 = vmatmul.bf16.gmra.mxu0 %v114
    %v2823 = vpop.f32.mrf.mxu0
    %v2824 = vadd.f32 0.0, %v2823
    %v2825 = vpop.f32.mrf.mxu0
    %2826 = vdwg.mxu0
    %2827 = vmatpush.bf16.msra.mxu0 %v1781
    %2828 = vmatpush.bf16.msra.mxu0 %v1773
    %2829 = vmatpush.bf16.msra.mxu0 %v1765
    %2830 = vmatpush.bf16.msra.mxu0 %v1757
    %2831 = vmatpush.bf16.msra.mxu0 %v1749
    %2832 = vmatpush.bf16.msra.mxu0 %v1741
    %2833 = vmatpush.bf16.msra.mxu0 %v1733
    %2834 = vmatpush.bf16.msra.mxu0 %v1725
    %2835 = vmatmul.bf16.gmra.mxu0 %v115
    %v2836 = vpop.f32.mrf.mxu0
    %v2837 = vadd.f32 %v2824, %v2836
    %v2838 = vpop.f32.mrf.mxu0
    %2839 = vdwg.mxu0
    %2840 = vmatpush.bf16.msra.mxu0 %v1845
    %2841 = vmatpush.bf16.msra.mxu0 %v1837
    %2842 = vmatpush.bf16.msra.mxu0 %v1829
    %2843 = vmatpush.bf16.msra.mxu0 %v1821
    %2844 = vmatpush.bf16.msra.mxu0 %v1813
    %2845 = vmatpush.bf16.msra.mxu0 %v1805
    %2846 = vmatpush.bf16.msra.mxu0 %v1797
    %2847 = vmatpush.bf16.msra.mxu0 %v1789
    %2848 = vmatmul.bf16.gmra.mxu0 %v116
    %v2849 = vpop.f32.mrf.mxu0
    %v2850 = vadd.f32 %v2837, %v2849
    %v2851 = vpop.f32.mrf.mxu0
    %2852 = vdwg.mxu0
    %2853 = vmatpush.bf16.msra.mxu0 %v1909
    %2854 = vmatpush.bf16.msra.mxu0 %v1901
    %2855 = vmatpush.bf16.msra.mxu0 %v1893
    %2856 = vmatpush.bf16.msra.mxu0 %v1885
    %2857 = vmatpush.bf16.msra.mxu0 %v1877
    %2858 = vmatpush.bf16.msra.mxu0 %v1869
    %2859 = vmatpush.bf16.msra.mxu0 %v1861
    %2860 = vmatpush.bf16.msra.mxu0 %v1853
    %2861 = vmatmul.bf16.gmra.mxu0 %v117
    %v2862 = vpop.f32.mrf.mxu0
    %v2863 = vadd.f32 %v2850, %v2862
    %v2864 = vpop.f32.mrf.mxu0
    %2865 = vdwg.mxu0
    %2866 = vmatpush.bf16.msra.mxu0 %v1973
    %2867 = vmatpush.bf16.msra.mxu0 %v1965
    %2868 = vmatpush.bf16.msra.mxu0 %v1957
    %2869 = vmatpush.bf16.msra.mxu0 %v1949
    %2870 = vmatpush.bf16.msra.mxu0 %v1941
    %2871 = vmatpush.bf16.msra.mxu0 %v1933
    %2872 = vmatpush.bf16.msra.mxu0 %v1925
    %2873 = vmatpush.bf16.msra.mxu0 %v1917
    %2874 = vmatmul.bf16.gmra.mxu0 %v118
    %v2875 = vpop.f32.mrf.mxu0
    %v2876 = vadd.f32 %v2863, %v2875
    %v2877 = vpop.f32.mrf.mxu0
    %2878 = vdwg.mxu0
    %2879 = vmatpush.bf16.msra.mxu0 %v2037
    %2880 = vmatpush.bf16.msra.mxu0 %v2029
    %2881 = vmatpush.bf16.msra.mxu0 %v2021
    %2882 = vmatpush.bf16.msra.mxu0 %v2013
    %2883 = vmatpush.bf16.msra.mxu0 %v2005
    %2884 = vmatpush.bf16.msra.mxu0 %v1997
    %2885 = vmatpush.bf16.msra.mxu0 %v1989
    %2886 = vmatpush.bf16.msra.mxu0 %v1981
    %2887 = vmatmul.bf16.gmra.mxu0 %v119
    %v2888 = vpop.f32.mrf.mxu0
    %v2889 = vadd.f32 %v2876, %v2888
    %v2890 = vpop.f32.mrf.mxu0
    %2891 = vdwg.mxu0
    %2892 = vmatpush.bf16.msra.mxu0 %v1718
    %2893 = vmatpush.bf16.msra.mxu0 %v1710
    %2894 = vmatpush.bf16.msra.mxu0 %v1702
    %2895 = vmatpush.bf16.msra.mxu0 %v1694
    %2896 = vmatpush.bf16.msra.mxu0 %v1686
    %2897 = vmatpush.bf16.msra.mxu0 %v1678
    %2898 = vmatpush.bf16.msra.mxu0 %v1670
    %2899 = vmatpush.bf16.msra.mxu0 %v1662
    %2900 = vmatmul.bf16.gmra.mxu0 %v114
    %v2901 = vpop.f32.mrf.mxu0
    %v2902 = vadd.f32 0.0, %v2901
    %v2903 = vpop.f32.mrf.mxu0
    %2904 = vdwg.mxu0
    %2905 = vmatpush.bf16.msra.mxu0 %v1782
    %2906 = vmatpush.bf16.msra.mxu0 %v1774
    %2907 = vmatpush.bf16.msra.mxu0 %v1766
    %2908 = vmatpush.bf16.msra.mxu0 %v1758
    %2909 = vmatpush.bf16.msra.mxu0 %v1750
    %2910 = vmatpush.bf16.msra.mxu0 %v1742
    %2911 = vmatpush.bf16.msra.mxu0 %v1734
    %2912 = vmatpush.bf16.msra.mxu0 %v1726
    %2913 = vmatmul.bf16.gmra.mxu0 %v115
    %v2914 = vpop.f32.mrf.mxu0
    %v2915 = vadd.f32 %v2902, %v2914
    %v2916 = vpop.f32.mrf.mxu0
    %2917 = vdwg.mxu0
    %2918 = vmatpush.bf16.msra.mxu0 %v1846
    %2919 = vmatpush.bf16.msra.mxu0 %v1838
    %2920 = vmatpush.bf16.msra.mxu0 %v1830
    %2921 = vmatpush.bf16.msra.mxu0 %v1822
    %2922 = vmatpush.bf16.msra.mxu0 %v1814
    %2923 = vmatpush.bf16.msra.mxu0 %v1806
    %2924 = vmatpush.bf16.msra.mxu0 %v1798
    %2925 = vmatpush.bf16.msra.mxu0 %v1790
    %2926 = vmatmul.bf16.gmra.mxu0 %v116
    %v2927 = vpop.f32.mrf.mxu0
    %v2928 = vadd.f32 %v2915, %v2927
    %v2929 = vpop.f32.mrf.mxu0
    %2930 = vdwg.mxu0
    %2931 = vmatpush.bf16.msra.mxu0 %v1910
    %2932 = vmatpush.bf16.msra.mxu0 %v1902
    %2933 = vmatpush.bf16.msra.mxu0 %v1894
    %2934 = vmatpush.bf16.msra.mxu0 %v1886
    %2935 = vmatpush.bf16.msra.mxu0 %v1878
    %2936 = vmatpush.bf16.msra.mxu0 %v1870
    %2937 = vmatpush.bf16.msra.mxu0 %v1862
    %2938 = vmatpush.bf16.msra.mxu0 %v1854
    %2939 = vmatmul.bf16.gmra.mxu0 %v117
    %v2940 = vpop.f32.mrf.mxu0
    %v2941 = vadd.f32 %v2928, %v2940
    %v2942 = vpop.f32.mrf.mxu0
    %2943 = vdwg.mxu0
    %2944 = vmatpush.bf16.msra.mxu0 %v1974
    %2945 = vmatpush.bf16.msra.mxu0 %v1966
    %2946 = vmatpush.bf16.msra.mxu0 %v1958
    %2947 = vmatpush.bf16.msra.mxu0 %v1950
    %2948 = vmatpush.bf16.msra.mxu0 %v1942
    %2949 = vmatpush.bf16.msra.mxu0 %v1934
    %2950 = vmatpush.bf16.msra.mxu0 %v1926
    %2951 = vmatpush.bf16.msra.mxu0 %v1918
    %2952 = vmatmul.bf16.gmra.mxu0 %v118
    %v2953 = vpop.f32.mrf.mxu0
    %v2954 = vadd.f32 %v2941, %v2953
    %v2955 = vpop.f32.mrf.mxu0
    %2956 = vdwg.mxu0
    %2957 = vmatpush.bf16.msra.mxu0 %v2038
    %2958 = vmatpush.bf16.msra.mxu0 %v2030
    %2959 = vmatpush.bf16.msra.mxu0 %v2022
    %2960 = vmatpush.bf16.msra.mxu0 %v2014
    %2961 = vmatpush.bf16.msra.mxu0 %v2006
    %2962 = vmatpush.bf16.msra.mxu0 %v1998
    %2963 = vmatpush.bf16.msra.mxu0 %v1990
    %2964 = vmatpush.bf16.msra.mxu0 %v1982
    %2965 = vmatmul.bf16.gmra.mxu0 %v119
    %v2966 = vpop.f32.mrf.mxu0
    %v2967 = vadd.f32 %v2954, %v2966
    %v2968 = vpop.f32.mrf.mxu0
    %2969 = vdwg.mxu0
    %2970 = vmatpush.bf16.msra.mxu0 %v1719
    %2971 = vmatpush.bf16.msra.mxu0 %v1711
    %2972 = vmatpush.bf16.msra.mxu0 %v1703
    %2973 = vmatpush.bf16.msra.mxu0 %v1695
    %2974 = vmatpush.bf16.msra.mxu0 %v1687
    %2975 = vmatpush.bf16.msra.mxu0 %v1679
    %2976 = vmatpush.bf16.msra.mxu0 %v1671
    %2977 = vmatpush.bf16.msra.mxu0 %v1663
    %2978 = vmatmul.bf16.gmra.mxu0 %v114
    %v2979 = vpop.f32.mrf.mxu0
    %v2980 = vadd.f32 0.0, %v2979
    %v2981 = vpop.f32.mrf.mxu0
    %2982 = vdwg.mxu0
    %2983 = vmatpush.bf16.msra.mxu0 %v1783
    %2984 = vmatpush.bf16.msra.mxu0 %v1775
    %2985 = vmatpush.bf16.msra.mxu0 %v1767
    %2986 = vmatpush.bf16.msra.mxu0 %v1759
    %2987 = vmatpush.bf16.msra.mxu0 %v1751
    %2988 = vmatpush.bf16.msra.mxu0 %v1743
    %2989 = vmatpush.bf16.msra.mxu0 %v1735
    %2990 = vmatpush.bf16.msra.mxu0 %v1727
    %2991 = vmatmul.bf16.gmra.mxu0 %v115
    %v2992 = vpop.f32.mrf.mxu0
    %v2993 = vadd.f32 %v2980, %v2992
    %v2994 = vpop.f32.mrf.mxu0
    %2995 = vdwg.mxu0
    %2996 = vmatpush.bf16.msra.mxu0 %v1847
    %2997 = vmatpush.bf16.msra.mxu0 %v1839
    %2998 = vmatpush.bf16.msra.mxu0 %v1831
    %2999 = vmatpush.bf16.msra.mxu0 %v1823
    %3000 = vmatpush.bf16.msra.mxu0 %v1815
    %3001 = vmatpush.bf16.msra.mxu0 %v1807
    %3002 = vmatpush.bf16.msra.mxu0 %v1799
    %3003 = vmatpush.bf16.msra.mxu0 %v1791
    %3004 = vmatmul.bf16.gmra.mxu0 %v116
    %v3005 = vpop.f32.mrf.mxu0
    %v3006 = vadd.f32 %v2993, %v3005
    %v3007 = vpop.f32.mrf.mxu0
    %3008 = vdwg.mxu0
    %3009 = vmatpush.bf16.msra.mxu0 %v1911
    %3010 = vmatpush.bf16.msra.mxu0 %v1903
    %3011 = vmatpush.bf16.msra.mxu0 %v1895
    %3012 = vmatpush.bf16.msra.mxu0 %v1887
    %3013 = vmatpush.bf16.msra.mxu0 %v1879
    %3014 = vmatpush.bf16.msra.mxu0 %v1871
    %3015 = vmatpush.bf16.msra.mxu0 %v1863
    %3016 = vmatpush.bf16.msra.mxu0 %v1855
    %3017 = vmatmul.bf16.gmra.mxu0 %v117
    %v3018 = vpop.f32.mrf.mxu0
    %v3019 = vadd.f32 %v3006, %v3018
    %v3020 = vpop.f32.mrf.mxu0
    %3021 = vdwg.mxu0
    %3022 = vmatpush.bf16.msra.mxu0 %v1975
    %3023 = vmatpush.bf16.msra.mxu0 %v1967
    %3024 = vmatpush.bf16.msra.mxu0 %v1959
    %3025 = vmatpush.bf16.msra.mxu0 %v1951
    %3026 = vmatpush.bf16.msra.mxu0 %v1943
    %3027 = vmatpush.bf16.msra.mxu0 %v1935
    %3028 = vmatpush.bf16.msra.mxu0 %v1927
    %3029 = vmatpush.bf16.msra.mxu0 %v1919
    %3030 = vmatmul.bf16.gmra.mxu0 %v118
    %v3031 = vpop.f32.mrf.mxu0
    %v3032 = vadd.f32 %v3019, %v3031
    %v3033 = vpop.f32.mrf.mxu0
    %3034 = vdwg.mxu0
    %3035 = vmatpush.bf16.msra.mxu0 %v2039
    %3036 = vmatpush.bf16.msra.mxu0 %v2031
    %3037 = vmatpush.bf16.msra.mxu0 %v2023
    %3038 = vmatpush.bf16.msra.mxu0 %v2015
    %3039 = vmatpush.bf16.msra.mxu0 %v2007
    %3040 = vmatpush.bf16.msra.mxu0 %v1999
    %3041 = vmatpush.bf16.msra.mxu0 %v1991
    %3042 = vmatpush.bf16.msra.mxu0 %v1983
    %3043 = vmatmul.bf16.gmra.mxu0 %v119
    %v3044 = vpop.f32.mrf.mxu0
    %v3045 = vadd.f32 %v3032, %v3044
    %v3046 = vpop.f32.mrf.mxu0
    %3047 = vdwg.mxu0
    %v3048 = vld [vmem:[#allocation9] sm:$0x1f]
    %v3049 = vld [vmem:[#allocation9 + $0x8] sm:$0x1f]
    %v3050 = vld [vmem:[#allocation9 + $0x10] sm:$0x1f]
    %v3051 = vld [vmem:[#allocation9 + $0x18] sm:$0x1f]
    %v3052 = vld [vmem:[#allocation9 + $0x20] sm:$0x1f]
    %v3053 = vld [vmem:[#allocation9 + $0x28] sm:$0x1f]
    %v3054 = vld [vmem:[#allocation9 + $0x30] sm:$0x1f]
    %v3055 = vld [vmem:[#allocation9 + $0x38] sm:$0x1f]
    %v3056 = vld [vmem:[#allocation8] sm:$0xff]
    %v3065 = vrot.slane %v3049, 7
    %v3066 = vrot.slane %v3050, 6
    %v3067 = vrot.slane %v3051, 5
    %v3068 = vrot.slane %v3052, 4
    %v3069 = vrot.slane %v3053, 3
    %v3070 = vrot.slane %v3054, 2
    %v3071 = vrot.slane %v3055, 1
    %vm3072 = vcmask 1040384
    %v3073 = vsel %vm3072, %v3048, %v3065
    %vm3074 = vcmask 1042434
    %v3075 = vsel %vm3074, %v3066, %v3067
    %vm3076 = vcmask 1041408
    %v3077 = vsel %vm3076, %v3073, %v3075
    %vm3078 = vcmask 1044484
    %v3079 = vsel %vm3078, %v3068, %v3069
    %vm3080 = vcmask 1046534
    %v3081 = vsel %vm3080, %v3070, %v3071
    %vm3082 = vcmask 1045508
    %v3083 = vsel %vm3082, %v3079, %v3081
    %vm3084 = vcmask 1043456
    %v3085 = vsel %vm3084, %v3077, %v3083
    %v3087 = vadd.f32 %v3056, %v3085
    %3088 = vst [vmem:[#allocation2] sm:$0xff] 0.0
    %3089 = vst [vmem:[#allocation2 + $0x8] sm:$0xff] 0.0
    %3090 = vst [vmem:[#allocation2 + $0x10] sm:$0xff] 0.0
    %3091 = vst [vmem:[#allocation2 + $0x18] sm:$0xff] 0.0
    %3092 = vst [vmem:[#allocation2 + $0x20] sm:$0xff] 0.0
    %3093 = vst [vmem:[#allocation2 + $0x28] sm:$0xff] 0.0
    %3094 = vst [vmem:[#allocation2 + $0x30] sm:$0xff] 0.0
    %3095 = vst [vmem:[#allocation2 + $0x38] sm:$0xff] 0.0
    %3096 = vst [vmem:[#allocation2 + $0x40] sm:$0xff] 0.0
    %3097 = vst [vmem:[#allocation2 + $0x48] sm:$0xff] 0.0
    %3098 = vst [vmem:[#allocation2 + $0x50] sm:$0xff] 0.0
    %3099 = vst [vmem:[#allocation2 + $0x58] sm:$0xff] 0.0
    %3100 = vst [vmem:[#allocation2 + $0x60] sm:$0xff] 0.0
    %3101 = vst [vmem:[#allocation2 + $0x68] sm:$0xff] 0.0
    %3102 = vst [vmem:[#allocation2 + $0x70] sm:$0xff] 0.0
    %3103 = vst [vmem:[#allocation2 + $0x78] sm:$0xff] 0.0
    %3104 = vst [vmem:[#allocation2] ss:$8 sm:$0xf] %v3087
    %3105 = vst [vmem:[#allocation2] ss:$8 sm:$0xf0] %v3087
    %v3106 = vrot.slane %v3048, 1
    %v3107 = vrot.slane %v3049, 1
    %v3108 = vrot.slane %v3050, 1
    %v3109 = vrot.slane %v3051, 1
    %v3110 = vrot.slane %v3052, 1
    %v3111 = vrot.slane %v3053, 1
    %v3112 = vrot.slane %v3054, 1
    %v3121 = vadd.f32 %v2499, %v3106
    %v3122 = vadd.f32 %v2577, %v3107
    %v3123 = vadd.f32 %v2655, %v3108
    %v3124 = vadd.f32 %v2733, %v3109
    %v3125 = vadd.f32 %v2811, %v3110
    %v3126 = vadd.f32 %v2889, %v3111
    %v3127 = vadd.f32 %v2967, %v3112
    %v3128 = vadd.f32 %v3045, %v3071
    %v3137 = vrot.slane %v3121, 7
    %v3138 = vrot.slane %v3122, 7
    %v3139 = vrot.slane %v3123, 7
    %v3140 = vrot.slane %v3124, 7
    %v3141 = vrot.slane %v3125, 7
    %v3142 = vrot.slane %v3126, 7
    %v3143 = vrot.slane %v3127, 7
    %v3144 = vrot.slane %v3128, 7
    %3153 = vst [vmem:[#allocation2] sm:$0x1e] %v3137
    %3154 = vst [vmem:[#allocation2 + $0x8] sm:$0x1e] %v3138
    %3155 = vst [vmem:[#allocation2 + $0x10] sm:$0x1e] %v3139
    %3156 = vst [vmem:[#allocation2 + $0x18] sm:$0x1e] %v3140
    %3157 = vst [vmem:[#allocation2 + $0x20] sm:$0x1e] %v3141
    %3158 = vst [vmem:[#allocation2 + $0x28] sm:$0x1e] %v3142
    %3159 = vst [vmem:[#allocation2 + $0x30] sm:$0x1e] %v3143
    %3160 = vst [vmem:[#allocation2 + $0x38] sm:$0x1e] %v3144
    %s3161 = scalar_lea.vmem [#allocation2], 64
    %3162 = vst [vmem:[%s3161] ss:$8 sm:$0xf] %v3087
    %3163 = vst [vmem:[%s3161] ss:$8 sm:$0xf0] %v3087
    %v3164 = vrot.slane %v3048, 5
    %v3165 = vrot.slane %v3049, 5
    %v3166 = vrot.slane %v3050, 5
    %v3167 = vrot.slane %v3052, 5
    %v3168 = vrot.slane %v3053, 5
    %v3169 = vrot.slane %v3054, 5
    %v3170 = vrot.slane %v3055, 5
    %v3179 = vadd.f32 %v2499, %v3164
    %v3180 = vadd.f32 %v2577, %v3165
    %v3181 = vadd.f32 %v2655, %v3166
    %v3182 = vadd.f32 %v2733, %v3067
    %v3183 = vadd.f32 %v2811, %v3167
    %v3184 = vadd.f32 %v2889, %v3168
    %v3185 = vadd.f32 %v2967, %v3169
    %v3186 = vadd.f32 %v3045, %v3170
    %v3195 = vrot.slane %v3179, 3
    %v3196 = vrot.slane %v3180, 3
    %v3197 = vrot.slane %v3181, 3
    %v3198 = vrot.slane %v3182, 3
    %v3199 = vrot.slane %v3183, 3
    %v3200 = vrot.slane %v3184, 3
    %v3201 = vrot.slane %v3185, 3
    %v3202 = vrot.slane %v3186, 3
    %3211 = vst [vmem:[#allocation2 + $0x40] sm:$0x1e] %v3195
    %3212 = vst [vmem:[#allocation2 + $0x48] sm:$0x1e] %v3196
    %3213 = vst [vmem:[#allocation2 + $0x50] sm:$0x1e] %v3197
    %3214 = vst [vmem:[#allocation2 + $0x58] sm:$0x1e] %v3198
    %3215 = vst [vmem:[#allocation2 + $0x60] sm:$0x1e] %v3199
    %3216 = vst [vmem:[#allocation2 + $0x68] sm:$0x1e] %v3200
    %3217 = vst [vmem:[#allocation2 + $0x70] sm:$0x1e] %v3201
    %3218 = vst [vmem:[#allocation2 + $0x78] sm:$0x1e] %v3202
    %v3219 = vld [vmem:[#allocation2] sm:$0xff]
    %v3220 = vld [vmem:[#allocation2 + $0x8] sm:$0xff]
    %v3221 = vld [vmem:[#allocation2 + $0x10] sm:$0xff]
    %v3222 = vld [vmem:[#allocation2 + $0x18] sm:$0xff]
    %v3223 = vld [vmem:[#allocation2 + $0x20] sm:$0xff]
    %v3224 = vld [vmem:[#allocation2 + $0x28] sm:$0xff]
    %v3225 = vld [vmem:[#allocation2 + $0x30] sm:$0xff]
    %v3226 = vld [vmem:[#allocation2 + $0x38] sm:$0xff]
    %v3227 = vld [vmem:[#allocation2 + $0x40] sm:$0xff]
    %v3228 = vld [vmem:[#allocation2 + $0x48] sm:$0xff]
    %v3229 = vld [vmem:[#allocation2 + $0x50] sm:$0xff]
    %v3230 = vld [vmem:[#allocation2 + $0x58] sm:$0xff]
    %v3231 = vld [vmem:[#allocation2 + $0x60] sm:$0xff]
    %v3232 = vld [vmem:[#allocation2 + $0x68] sm:$0xff]
    %v3233 = vld [vmem:[#allocation2 + $0x70] sm:$0xff]
    %v3234 = vld [vmem:[#allocation2 + $0x78] sm:$0xff]
    %v3235 = vld [vmem:[#allocation11] sm:$0xff]
    %v3236 = vld [vmem:[#allocation12] sm:$0xff]
    %v3237 = vadd.f32 %v3219, %v3220
    %v3238 = vadd.f32 %v3237, %v3221
    %v3239 = vadd.f32 %v3238, %v3222
    %v3240 = vadd.f32 %v3239, %v3223
    %v3241 = vadd.f32 %v3240, %v3224
    %v3242 = vadd.f32 %v3241, %v3225
    %v3243 = vadd.f32 %v3242, %v3226
    %3244 = vadd.xlane.f32.xlu0 %v3243
    %v3245 = vpop.xlane.xlu0 %3244
    %v3246 = vadd.f32 %v3227, %v3228
    %v3247 = vadd.f32 %v3246, %v3229
    %v3248 = vadd.f32 %v3247, %v3230
    %v3249 = vadd.f32 %v3248, %v3231
    %v3250 = vadd.f32 %v3249, %v3232
    %v3251 = vadd.f32 %v3250, %v3233
    %v3252 = vadd.f32 %v3251, %v3234
    %3253 = vadd.xlane.f32.xlu0 %v3252
    %v3254 = vpop.xlane.xlu0 %3253
    %v3255 = vrcp.pop 1024.0
    %v3256 = vmul.f32 1024.0, %v3255
    %v3257 = vsub.f32 1.0, %v3256
    %v3258 = vmul.f32 %v3255, %v3257
    %v3259 = vadd.f32 %v3255, %v3258
    %vm3260 = vweird.f32 %v3255
    %v3261 = vsel %vm3260, %v3255, %v3259
    %v3262 = vmul.f32 %v3245, %v3261
    %v3263 = vmul.f32 %v3254, %v3261
    %v3264 = vsub.f32 %v3219, %v3262
    %v3265 = vsub.f32 %v3220, %v3262
    %v3266 = vsub.f32 %v3221, %v3262
    %v3267 = vsub.f32 %v3222, %v3262
    %v3268 = vsub.f32 %v3223, %v3262
    %v3269 = vsub.f32 %v3224, %v3262
    %v3270 = vsub.f32 %v3225, %v3262
    %v3271 = vsub.f32 %v3226, %v3262
    %v3272 = vsub.f32 %v3227, %v3263
    %v3273 = vsub.f32 %v3228, %v3263
    %v3274 = vsub.f32 %v3229, %v3263
    %v3275 = vsub.f32 %v3230, %v3263
    %v3276 = vsub.f32 %v3231, %v3263
    %v3277 = vsub.f32 %v3232, %v3263
    %v3278 = vsub.f32 %v3233, %v3263
    %v3279 = vsub.f32 %v3234, %v3263
    %v3280 = vmul.f32 %v3264, %v3264
    %v3281 = vmul.f32 %v3265, %v3265
    %v3282 = vmul.f32 %v3266, %v3266
    %v3283 = vmul.f32 %v3267, %v3267
    %v3284 = vmul.f32 %v3268, %v3268
    %v3285 = vmul.f32 %v3269, %v3269
    %v3286 = vmul.f32 %v3270, %v3270
    %v3287 = vmul.f32 %v3271, %v3271
    %v3288 = vmul.f32 %v3272, %v3272
    %v3289 = vmul.f32 %v3273, %v3273
    %v3290 = vmul.f32 %v3274, %v3274
    %v3291 = vmul.f32 %v3275, %v3275
    %v3292 = vmul.f32 %v3276, %v3276
    %v3293 = vmul.f32 %v3277, %v3277
    %v3294 = vmul.f32 %v3278, %v3278
    %v3295 = vmul.f32 %v3279, %v3279
    %v3296 = vadd.f32 %v3280, %v3281
    %v3297 = vadd.f32 %v3296, %v3282
    %v3298 = vadd.f32 %v3297, %v3283
    %v3299 = vadd.f32 %v3298, %v3284
    %v3300 = vadd.f32 %v3299, %v3285
    %v3301 = vadd.f32 %v3300, %v3286
    %v3302 = vadd.f32 %v3301, %v3287
    %3303 = vadd.xlane.f32.xlu0 %v3302
    %v3304 = vpop.xlane.xlu0 %3303
    %v3305 = vadd.f32 %v3288, %v3289
    %v3306 = vadd.f32 %v3305, %v3290
    %v3307 = vadd.f32 %v3306, %v3291
    %v3308 = vadd.f32 %v3307, %v3292
    %v3309 = vadd.f32 %v3308, %v3293
    %v3310 = vadd.f32 %v3309, %v3294
    %v3311 = vadd.f32 %v3310, %v3295
    %3312 = vadd.xlane.f32.xlu0 %v3311
    %v3313 = vpop.xlane.xlu0 %3312
    %v3314 = vmul.f32 %v3304, %v3261
    %v3315 = vmul.f32 %v3313, %v3261
    %v3316 = vadd.f32 %v3314, 1e-05
    %v3317 = vadd.f32 %v3315, 1e-05
    %v3318 = vrsqrt.pop %v3316
    %v3319 = vmul.f32 %v3318, %v3316
    %v3320 = vmul.f32 %v3319, %v3318
    %v3321 = vmul.f32 0.5, %v3320
    %v3322 = vsub.f32 1.5, %v3321
    %v3323 = vmul.f32 %v3318, %v3322
    %vm3324 = vweird.f32 %v3316
    %vm3325 = vweird.f32 %v3318
    %vm3326 = vmor %vm3324, %vm3325
    %v3327 = vsel %vm3326, %v3318, %v3323
    %v3328 = vrsqrt.pop %v3317
    %v3329 = vmul.f32 %v3328, %v3317
    %v3330 = vmul.f32 %v3329, %v3328
    %v3331 = vmul.f32 0.5, %v3330
    %v3332 = vsub.f32 1.5, %v3331
    %v3333 = vmul.f32 %v3328, %v3332
    %vm3334 = vweird.f32 %v3317
    %vm3335 = vweird.f32 %v3328
    %vm3336 = vmor %vm3334, %vm3335
    %v3337 = vsel %vm3336, %v3328, %v3333
    %v3338 = vmul.f32 %v3264, %v3327
    %v3339 = vmul.f32 %v3265, %v3327
    %v3340 = vmul.f32 %v3266, %v3327
    %v3341 = vmul.f32 %v3267, %v3327
    %v3342 = vmul.f32 %v3268, %v3327
    %v3343 = vmul.f32 %v3269, %v3327
    %v3344 = vmul.f32 %v3270, %v3327
    %v3345 = vmul.f32 %v3271, %v3327
    %v3346 = vmul.f32 %v3272, %v3337
    %v3347 = vmul.f32 %v3273, %v3337
    %v3348 = vmul.f32 %v3274, %v3337
    %v3349 = vmul.f32 %v3275, %v3337
    %v3350 = vmul.f32 %v3276, %v3337
    %v3351 = vmul.f32 %v3277, %v3337
    %v3352 = vmul.f32 %v3278, %v3337
    %v3353 = vmul.f32 %v3279, %v3337
    %v3355 = vperm.slane %v3235, 0
    %v3356 = vperm.slane %v3235, 1
    %v3357 = vperm.slane %v3235, 2
    %v3358 = vperm.slane %v3235, 3
    %v3359 = vperm.slane %v3235, 4
    %v3360 = vperm.slane %v3235, 5
    %v3361 = vperm.slane %v3235, 6
    %v3362 = vperm.slane %v3235, 7
    %v3371 = vmul.f32 %v3338, %v3355
    %v3372 = vmul.f32 %v3339, %v3356
    %v3373 = vmul.f32 %v3340, %v3357
    %v3374 = vmul.f32 %v3341, %v3358
    %v3375 = vmul.f32 %v3342, %v3359
    %v3376 = vmul.f32 %v3343, %v3360
    %v3377 = vmul.f32 %v3344, %v3361
    %v3378 = vmul.f32 %v3345, %v3362
    %v3379 = vmul.f32 %v3346, %v3355
    %v3380 = vmul.f32 %v3347, %v3356
    %v3381 = vmul.f32 %v3348, %v3357
    %v3382 = vmul.f32 %v3349, %v3358
    %v3383 = vmul.f32 %v3350, %v3359
    %v3384 = vmul.f32 %v3351, %v3360
    %v3385 = vmul.f32 %v3352, %v3361
    %v3386 = vmul.f32 %v3353, %v3362
    %v3388 = vperm.slane %v3236, 0
    %v3389 = vperm.slane %v3236, 1
    %v3390 = vperm.slane %v3236, 2
    %v3391 = vperm.slane %v3236, 3
    %v3392 = vperm.slane %v3236, 4
    %v3393 = vperm.slane %v3236, 5
    %v3394 = vperm.slane %v3236, 6
    %v3395 = vperm.slane %v3236, 7
    %v3404 = vadd.f32 %v3371, %v3388
    %v3405 = vadd.f32 %v3372, %v3389
    %v3406 = vadd.f32 %v3373, %v3390
    %v3407 = vadd.f32 %v3374, %v3391
    %v3408 = vadd.f32 %v3375, %v3392
    %v3409 = vadd.f32 %v3376, %v3393
    %v3410 = vadd.f32 %v3377, %v3394
    %v3411 = vadd.f32 %v3378, %v3395
    %v3412 = vadd.f32 %v3379, %v3388
    %v3413 = vadd.f32 %v3380, %v3389
    %v3414 = vadd.f32 %v3381, %v3390
    %v3415 = vadd.f32 %v3382, %v3391
    %v3416 = vadd.f32 %v3383, %v3392
    %v3417 = vadd.f32 %v3384, %v3393
    %v3418 = vadd.f32 %v3385, %v3394
    %v3419 = vadd.f32 %v3386, %v3395
    %3420 = vst [vmem:[#allocation14] sm:$0xff] %v3404
    %3421 = vst [vmem:[#allocation14 + $0x8] sm:$0xff] %v3405
    %3422 = vst [vmem:[#allocation14 + $0x10] sm:$0xff] %v3406
    %3423 = vst [vmem:[#allocation14 + $0x18] sm:$0xff] %v3407
    %3424 = vst [vmem:[#allocation14 + $0x20] sm:$0xff] %v3408
    %3425 = vst [vmem:[#allocation14 + $0x28] sm:$0xff] %v3409
    %3426 = vst [vmem:[#allocation14 + $0x30] sm:$0xff] %v3410
    %3427 = vst [vmem:[#allocation14 + $0x38] sm:$0xff] %v3411
    %3428 = vst [vmem:[#allocation14 + $0x40] sm:$0xff] %v3412
    %3429 = vst [vmem:[#allocation14 + $0x48] sm:$0xff] %v3413
    %3430 = vst [vmem:[#allocation14 + $0x50] sm:$0xff] %v3414
    %3431 = vst [vmem:[#allocation14 + $0x58] sm:$0xff] %v3415
    %3432 = vst [vmem:[#allocation14 + $0x60] sm:$0xff] %v3416
    %3433 = vst [vmem:[#allocation14 + $0x68] sm:$0xff] %v3417
    %3434 = vst [vmem:[#allocation14 + $0x70] sm:$0xff] %v3418
    %3435 = vst [vmem:[#allocation14 + $0x78] sm:$0xff] %v3419
    // Predicated region
    $region50: #{tpu_custom_call.1} parent=1 // pred_check
      _
    $region51: #{tpu_custom_call.1} parent=1 // pred_check_branch
      %3437 = sbr.rel (0) target = $region53
    $region52: #{tpu_custom_call.1} parent=1 // pred_region
      %3439 = vsyncadd [#allocation5], 0
      %s3440 = sshll.u32 [#allocation14], 4
      %s3441 = int_to_ptr.vmem [resolvable:$true] %s3440
      %s3442 = sshll.u32 %s6, 4
      %s3443 = int_to_ptr.hbm [resolvable:$true] %s3442
      %3448 = dma.vmem_to_hbm [thread:$0]  %s3441, 2048, %s3443, [#allocation5], 1024, 1024, 64
    $region53: #{tpu_custom_call.1} parent=1 // pred_fallthru
      _
    // Predicated region
    $region54: #{tpu_custom_call.1} parent=1 // pred_check
      _
    $region55: #{tpu_custom_call.1} parent=1 // pred_check_branch
      %3450 = sbr.rel (0) target = $region57
    $region56: #{tpu_custom_call.1} parent=1 // pred_region
      %3452 = dma.done [#allocation5], 2048
    $region57: #{tpu_custom_call.1} parent=1 // pred_fallthru
      _
    %3453 = vsyncpa [#allocation4], 1
    %3454 = vsyncpa [#allocation7], 1
    %3455 = vsyncpa [#allocation10], 1
    %3456 = vsyncpa [#allocation13], 1
    %3457 = vsyncpa [#allocation5], 1

</llo_original>
